<compile_context>
chip_gen: v7x
topology: tpu7x:2x2x1
jax: 0.10.0
libtpu: 0.0.40
codegen_flags: <defaults>
</compile_context>

<pallas_src>
import math
import functools

import jax
import jax.numpy as jnp
from jax import lax
from jax.experimental import pallas as pl
from jax.experimental.pallas import tpu as pltpu

EPS = 1e-5  # PyTorch nn.LayerNorm default


# --------------------------------------------------------------------------
# Generation-aware knobs (device_kind is a plain-Python, trace-time query).
# --------------------------------------------------------------------------
def _device_kind():
    try:
        return jax.devices()[0].device_kind.lower()
    except Exception:
        return ""


def _is_v5e(kind):
    return ("v5e" in kind) or ("v5 lite" in kind) or ("v5lite" in kind)


def _vmem_limit_bytes():
    kind = _device_kind()
    if ("v2" in kind) or ("v3" in kind):
        return None                      # old chips: keep the default scoped limit
    if _is_v5e(kind):
        return 96 * 1024 * 1024          # 128 MiB physical
    if "v5" in kind:                     # v5p
        return 64 * 1024 * 1024
    if "v6" in kind:
        return 100 * 1024 * 1024         # 128 MiB physical (review: ~96-100 MiB)
    if ("v7" in kind) or ("tpu7" in kind) or ("7x" in kind):
        return 40 * 1024 * 1024          # v7x: only 64 MiB / TC -> leave headroom
    return 64 * 1024 * 1024


def _compiler_params(dimension_semantics):
    kwargs = dict(dimension_semantics=dimension_semantics)
    limit = _vmem_limit_bytes()
    if limit is not None:
        kwargs["vmem_limit_bytes"] = limit
    return pltpu.CompilerParams(**kwargs)


def _attn_tile_prefs():
    # v5e: 4x128^2 MXU + no bf16 VALU/EUP -> keep the (tq, tkv) score tile lean.
    if _is_v5e(_device_kind()):
        return 256, 256
    return 512, 512


def _use_bf16_exp():
    kind = _device_kind()
    return ("v6" in kind) or ("v7" in kind) or ("tpu7" in kind) or ("7x" in kind)


def _pick_tile(n, pref):
    """Largest multiple-of-8 tile <= pref that divides n, else the full n."""
    for t in sorted({pref, 1024, 512, 256, 128, 64, 32, 16, 8}, reverse=True):
        if t <= n and n % t == 0 and t % 8 == 0:
            return t
    return n


# --------------------------------------------------------------------------
# Small in-kernel helpers
# --------------------------------------------------------------------------
def _layer_norm(x, w, b=None, eps=EPS):
    mu = jnp.mean(x, axis=-1, keepdims=True)
    var = jnp.mean((x - mu) ** 2, axis=-1, keepdims=True)
    y = (x - mu) * lax.rsqrt(var + eps) * w
    if b is not None:
        y = y + b
    return y


def _swap_halves(x):
    """[x1, x2] -> [x2, x1] along the last (head) dim.  Sign lives in the sin table."""
    d = x.shape[-1]
    half = d // 2
    if d % 128 == 0:
        # Lane-aligned head dim: XLU rotate; shift by d/2 is direction-symmetric.
        return pltpu.roll(x, half, x.ndim - 1)
    # Small / unaligned head dim (e.g. the tiny test shape): slice+concat on the
    # per-head (tile, d) block only.
    return jnp.concatenate([x[..., half:], x[..., :half]], axis=-1)


# --------------------------------------------------------------------------
# Kernel A: LayerNorm -> QKV projection -> q/k LayerNorm.  Grid (B, S tiles).
# --------------------------------------------------------------------------
def qkv_proj_kernel(x_ref, ln1w_ref, ln1b_ref, qlnw_ref, klnw_ref,
                    wq_ref, wk_ref, wv_ref, q_ref, k_ref, v_ref):
    xn = _layer_norm(x_ref[...], ln1w_ref[...], ln1b_ref[...]).astype(jnp.bfloat16)
    q = jnp.dot(xn, wq_ref[...], preferred_element_type=jnp.float32)
    k = jnp.dot(xn, wk_ref[...], preferred_element_type=jnp.float32)
    v = jnp.dot(xn, wv_ref[...], preferred_element_type=jnp.float32)
    q_ref[...] = _layer_norm(q, qlnw_ref[...]).astype(q_ref.dtype)
    k_ref[...] = _layer_norm(k, klnw_ref[...]).astype(k_ref.dtype)
    v_ref[...] = v.astype(v_ref.dtype)


def _qkv_project(x, ln1w, ln1b, qlnw, klnw, wq, wk, wv, tile_s):
    B, S, H = x.shape
    row = pl.BlockSpec((None, tile_s, H), lambda b, si: (b, si, 0))
    vec = pl.BlockSpec((1, H), lambda b, si: (0, 0))
    wsp = pl.BlockSpec((H, H), lambda b, si: (0, 0))
    out_sds = jax.ShapeDtypeStruct((B, S, H), jnp.bfloat16)
    return pl.pallas_call(
        qkv_proj_kernel,
        out_shape=(out_sds, out_sds, out_sds),
        grid_spec=pltpu.PrefetchScalarGridSpec(
            num_scalar_prefetch=0,
            grid=(B, S // tile_s),
            in_specs=[row, vec, vec, vec, vec, wsp, wsp, wsp],
            out_specs=(row, row, row),
        ),
        compiler_params=_compiler_params(("parallel", "parallel")),
    )(x, ln1w, ln1b, qlnw, klnw, wq, wk, wv)


# --------------------------------------------------------------------------
# Kernel B: RoPE pre-pass on (B, NH, S, d).  Rotates q (scale folded) and k
# exactly once; the flash kernel below never touches the cos/sin tables.
# --------------------------------------------------------------------------
def rope_kernel(q_ref, k_ref, cq_ref, sq_ref, ck_ref, sk_ref, qo_ref, ko_ref):
    q = q_ref[...].astype(jnp.float32)
    k = k_ref[...].astype(jnp.float32)
    qo_ref[...] = (q * cq_ref[...] + _swap_halves(q) * sq_ref[...]).astype(qo_ref.dtype)
    ko_ref[...] = (k * ck_ref[...] + _swap_halves(k) * sk_ref[...]).astype(ko_ref.dtype)


def _apply_rope(q, k, cos_q, sin_q, cos_k, sin_k, tile_s):
    B, NH, S, d = q.shape
    blk = pl.BlockSpec((None, None, tile_s, d), lambda si, b, h: (b, h, si, 0))
    tab = pl.BlockSpec((tile_s, d), lambda si, b, h: (si, 0))
    sds = jax.ShapeDtypeStruct((B, NH, S, d), jnp.bfloat16)
    return pl.pallas_call(
        rope_kernel,
        out_shape=(sds, sds),
        grid_spec=pltpu.PrefetchScalarGridSpec(
            num_scalar_prefetch=0,
            # seq-tile axis outermost -> the table block index is constant across
            # all (b, h) inner steps, so each table tile is DMA'd only once.
            grid=(S // tile_s, B, NH),
            in_specs=[blk, blk, tab, tab, tab, tab],
            out_specs=(blk, blk),
        ),
        compiler_params=_compiler_params(("parallel", "parallel", "parallel")),
    )(q, k, cos_q, sin_q, cos_k, sin_k)


# --------------------------------------------------------------------------
# Kernel C: flash attention.  Grid (B, n_heads, q tiles, kv tiles).
# q is pre-rotated and pre-scaled; k is pre-rotated -> the kv inner loop is
# just MXU matmuls + online softmax.
# --------------------------------------------------------------------------
def flash_attn_kernel(q_ref, k_ref, v_ref, o_ref, m_sc, l_sc, acc_sc, *, exp_dtype):
    kv = pl.program_id(3)

    @pl.when(kv == 0)
    def _init():
        m_sc[...] = jnp.full(m_sc.shape, -jnp.inf, dtype=m_sc.dtype)
        l_sc[...] = jnp.zeros(l_sc.shape, dtype=l_sc.dtype)
        acc_sc[...] = jnp.zeros(acc_sc.shape, dtype=acc_sc.dtype)

    s = lax.dot_general(q_ref[...], k_ref[...], (((1,), (1,)), ((), ())),
                        preferred_element_type=jnp.float32)           # (tq, tkv)

    m_prev = m_sc[...]
    m_new = jnp.maximum(m_prev, jnp.max(s, axis=-1, keepdims=True))
    alpha = jnp.exp(m_prev - m_new)
    # exp in bf16 on v6e/v7x (native bf16 EUP); f32 on v5e/unknown chips.
    p = jnp.exp((s - m_new).astype(exp_dtype))
    l_sc[...] = alpha * l_sc[...] + jnp.sum(p.astype(jnp.float32),
                                            axis=-1, keepdims=True)
    acc_sc[...] = alpha * acc_sc[...] + jnp.dot(
        p.astype(jnp.bfloat16), v_ref[...], preferred_element_type=jnp.float32)
    m_sc[...] = m_new

    @pl.when(kv == pl.num_programs(3) - 1)
    def _finalize():
        # approx reciprocal (~2^-12 rel err) is within the test tolerance.
        o_ref[...] = (acc_sc[...] *
                      pl.reciprocal(l_sc[...], approx=True)).astype(o_ref.dtype)


def _flash_attention(q, k, v, tq, tkv):
    B, NH, S, d = q.shape
    qspec = pl.BlockSpec((None, None, tq, d), lambda b, h, qi, ki: (b, h, qi, 0))
    kvspec = pl.BlockSpec((None, None, tkv, d), lambda b, h, qi, ki: (b, h, ki, 0))
    kernel = functools.partial(
        flash_attn_kernel,
        exp_dtype=jnp.bfloat16 if _use_bf16_exp() else jnp.float32)
    return pl.pallas_call(
        kernel,
        out_shape=jax.ShapeDtypeStruct((B, NH, S, d), jnp.bfloat16),
        grid_spec=pltpu.PrefetchScalarGridSpec(
            num_scalar_prefetch=0,
            grid=(B, NH, S // tq, S // tkv),
            in_specs=[qspec, kvspec, kvspec],
            out_specs=qspec,
            scratch_shapes=[
                pltpu.VMEM((tq, 1), jnp.float32),    # running max
                pltpu.VMEM((tq, 1), jnp.float32),    # running denom
                pltpu.VMEM((tq, d), jnp.float32),    # output accumulator
            ],
        ),
        compiler_params=_compiler_params(
            ("parallel", "parallel", "parallel", "arbitrary")),
    )(q, k, v)


# --------------------------------------------------------------------------
# Kernel D: output projection.  Grid (B, S tiles).
# --------------------------------------------------------------------------
def out_proj_kernel(a_ref, w_ref, o_ref):
    o_ref[...] = jnp.dot(a_ref[...], w_ref[...],
                         preferred_element_type=jnp.float32).astype(o_ref.dtype)


def _out_project(a, w_out, out_dtype, tile_s):
    B, S, H = a.shape
    row = pl.BlockSpec((None, tile_s, H), lambda b, si: (b, si, 0))
    return pl.pallas_call(
        out_proj_kernel,
        out_shape=jax.ShapeDtypeStruct((B, S, H), out_dtype),
        grid_spec=pltpu.PrefetchScalarGridSpec(
            num_scalar_prefetch=0,
            grid=(B, S // tile_s),
            in_specs=[row, pl.BlockSpec((H, H), lambda b, si: (0, 0))],
            out_specs=row,
        ),
        compiler_params=_compiler_params(("parallel", "parallel")),
    )(a, w_out)


# --------------------------------------------------------------------------
# Wrapper (forward pass of the PyTorch MultiHeadAttention module)
# --------------------------------------------------------------------------
def multi_head_attention(x, params, n_heads):
    """x: (B, S, H) float32.  Mirrors MultiHeadAttention.forward(x, attention_mask=None)."""
    B, S, H = x.shape
    d = H // n_heads
    scale = 1.0 / math.sqrt(d)

    # Rotary tables (S, d), f32 -- read exactly once per position by the RoPE
    # pre-pass (no inner-loop table DMA).  rotate_half's sign is folded into the
    # sin table; the softmax 1/sqrt(d) scale is folded into the q tables so the
    # attention kernel never scales scores.
    inv_freq = 1.0 / (10000.0 ** (jnp.arange(0, d, 2, dtype=jnp.float32) / d))
    freqs = jnp.outer(jnp.arange(S, dtype=jnp.float32), inv_freq)        # (S, d/2)
    cos_d = jnp.concatenate([jnp.cos(freqs), jnp.cos(freqs)], axis=-1)   # (S, d)
    sin_d = jnp.concatenate([-jnp.sin(freqs), jnp.sin(freqs)], axis=-1)
    cos_q, sin_q = cos_d * scale, sin_d * scale

    # bf16 weights for the MXU; split the fused QKV weight so the projection
    # kernel never lane-slices a (S, 3H) output.
    wqkv = params["w_qkv"].astype(jnp.bfloat16)
    wq, wk, wv = wqkv[:, :H], wqkv[:, H:2 * H], wqkv[:, 2 * H:]
    wout = params["w_out"].astype(jnp.bfloat16)

    tile_s = _pick_tile(S, 512)
    q, k, v = _qkv_project(x, params["ln1_w"], params["ln1_b"],
                           params["qln_w"], params["kln_w"], wq, wk, wv, tile_s)

    # Head split (B, S, H) -> (B, NH, S, d): kept as a cheap XLA bf16
    # reshape+transpose -- per-head blocks on a (B, S, NH, d) layout would need
    # a size-1 second-minor block, unsafe against the (8,128) BlockSpec rule.
    def heads(t):
        return t.reshape(B, S, n_heads, d).transpose(0, 2, 1, 3)

    qh, kh, vh = heads(q), heads(k), heads(v)

    # RoPE pre-pass (hoisted out of the flash inner loop).
    qh, kh = _apply_rope(qh, kh, cos_q, sin_q, cos_d, sin_d, _pick_tile(S, 512))

    tq_pref, tkv_pref = _attn_tile_prefs()
    tq, tkv = _pick_tile(S, tq_pref), _pick_tile(S, tkv_pref)
    o = _flash_attention(qh, kh, vh, tq, tkv)

    a = o.transpose(0, 2, 1, 3).reshape(B, S, H)      # back to (B, S, H), bf16
    return _out_project(a, wout, x.dtype, tile_s)


# --------------------------------------------------------------------------
# Pure-JAX f32 reference mirroring the PyTorch forward semantics.
# --------------------------------------------------------------------------
def reference_mha(x, params, n_heads):
    B, S, H = x.shape
    d = H // n_heads
    half = d // 2

    def ln(t, w, b=None, eps=EPS):
        mu = jnp.mean(t, -1, keepdims=True)
        var = jnp.mean((t - mu) ** 2, -1, keepdims=True)
        y = (t - mu) / jnp.sqrt(var + eps) * w
        return y + b if b is not None else y

    xn = ln(x, params["ln1_w"][0], params["ln1_b"][0])
    qkv = xn @ params["w_qkv"]
    q, k, v = qkv[..., :H], qkv[..., H:2 * H], qkv[..., 2 * H:]
    q = ln(q, params["qln_w"][0])
    k = ln(k, params["kln_w"][0])

    inv_freq = 1.0 / (10000.0 ** (jnp.arange(0, d, 2, dtype=jnp.float32) / d))
    freqs = jnp.outer(jnp.arange(S, dtype=jnp.float32), inv_freq)
    cos = jnp.tile(jnp.cos(freqs), (1, 2))[None, :, None, :]
    sin = jnp.tile(jnp.sin(freqs), (1, 2))[None, :, None, :]

    def rope(t_):
        t_ = t_.reshape(B, S, n_heads, d)
        t1, t2 = t_[..., :half], t_[..., half:]
        rot = jnp.concatenate([-t2, t1], -1)
        return ((t_ * cos) + (rot * sin)).reshape(B, S, H)

    q, k = rope(q), rope(k)
    qh = q.reshape(B, S, n_heads, d).transpose(0, 2, 1, 3)
    kh = k.reshape(B, S, n_heads, d).transpose(0, 2, 1, 3)
    vh = v.reshape(B, S, n_heads, d).transpose(0, 2, 1, 3)
    s = jnp.einsum("bhqd,bhkd->bhqk", qh, kh) / math.sqrt(d)
    p = jax.nn.softmax(s, axis=-1)
    a = jnp.einsum("bhqk,bhkd->bhqd", p, vh)
    a = a.transpose(0, 2, 1, 3).reshape(B, S, H)
    return a @ params["w_out"]


if __name__ == "__main__":
    B, S, H, NH = 2, 8, 32, 4

    key = jax.random.PRNGKey(0)
    kx, k1, k2, k3, k4, k5, k6 = jax.random.split(key, 7)

    x = jax.random.normal(kx, (B, S, H), dtype=jnp.float32)
    params = {
        # layernorm_qkv: LayerNorm(H) weight/bias, then Linear(H, 3H, bias=False)
        "ln1_w": 1.0 + 0.1 * jax.random.normal(k1, (1, H), dtype=jnp.float32),
        "ln1_b": 0.05 * jax.random.normal(k2, (1, H), dtype=jnp.float32),
        "w_qkv": jax.random.normal(k3, (H, 3 * H), dtype=jnp.float32) / math.sqrt(H),
        # q_ln / k_ln: LayerNorm(H, bias=False) -> weight only
        "qln_w": 1.0 + 0.1 * jax.random.normal(k4, (1, H), dtype=jnp.float32),
        "kln_w": 1.0 + 0.1 * jax.random.normal(k5, (1, H), dtype=jnp.float32),
        # out_proj: Linear(H, H, bias=False)
        "w_out": jax.random.normal(k6, (H, H), dtype=jnp.float32) / math.sqrt(H),
    }

    mha = jax.jit(multi_head_attention, static_argnums=2)
    out = jax.block_until_ready(mha(x, params, NH))

    ref = reference_mha(x, params, NH)
    assert out.shape == (B, S, H)
    err = float(jnp.max(jnp.abs(out - ref)))
    # bf16 MXU operands (f32 accumulation) + bf16 softmax exp vs pure-f32 reference.
    assert jnp.allclose(out, ref, atol=4e-2, rtol=4e-2), f"max abs diff {err}"

    print("KERNEL_OK")
</pallas_src>

<mosaic_0001>
module attributes {stable_mosaic.version = 11 : i64} {
  func.func @qkv_proj_kernel(%arg0: i32, %arg1: i32, %arg2: memref<1x8x32xf32, #tpu.memory_space<vmem>>, %arg3: memref<1x32xf32, #tpu.memory_space<vmem>>, %arg4: memref<1x32xf32, #tpu.memory_space<vmem>>, %arg5: memref<1x32xf32, #tpu.memory_space<vmem>>, %arg6: memref<1x32xf32, #tpu.memory_space<vmem>>, %arg7: memref<32x32xbf16, #tpu.memory_space<vmem>>, %arg8: memref<32x32xbf16, #tpu.memory_space<vmem>>, %arg9: memref<32x32xbf16, #tpu.memory_space<vmem>>, %arg10: memref<1x8x32xbf16, #tpu.memory_space<vmem>>, %arg11: memref<1x8x32xbf16, #tpu.memory_space<vmem>>, %arg12: memref<1x8x32xbf16, #tpu.memory_space<vmem>>) attributes {dimension_semantics = [#tpu.dimension_semantics<parallel>, #tpu.dimension_semantics<parallel>], iteration_bounds = array<i64: 2, 1>, scalar_prefetch = 0 : i64, scratch_operands = 0 : i64, tpu.core_type = #tpu.core_type<tc>, window_params = [{transform_indices = @transform_0, window_bounds = array<i64: 1, 8, 32>}, {pipeline_mode = #tpu.pipeline_mode<synchronous>, transform_indices = @transform_1, window_bounds = array<i64: 1, 32>}, {pipeline_mode = #tpu.pipeline_mode<synchronous>, transform_indices = @transform_2, window_bounds = array<i64: 1, 32>}, {pipeline_mode = #tpu.pipeline_mode<synchronous>, transform_indices = @transform_3, window_bounds = array<i64: 1, 32>}, {pipeline_mode = #tpu.pipeline_mode<synchronous>, transform_indices = @transform_4, window_bounds = array<i64: 1, 32>}, {pipeline_mode = #tpu.pipeline_mode<synchronous>, transform_indices = @transform_5, window_bounds = array<i64: 32, 32>}, {pipeline_mode = #tpu.pipeline_mode<synchronous>, transform_indices = @transform_6, window_bounds = array<i64: 32, 32>}, {pipeline_mode = #tpu.pipeline_mode<synchronous>, transform_indices = @transform_7, window_bounds = array<i64: 32, 32>}, {transform_indices = @transform_8, window_bounds = array<i64: 1, 8, 32>}, {transform_indices = @transform_9, window_bounds = array<i64: 1, 8, 32>}, {transform_indices = @transform_10, window_bounds = array<i64: 1, 8, 32>}]} {
    %c0 = arith.constant 0 : index
    %c0_0 = arith.constant 0 : index
    %c0_1 = arith.constant 0 : index
    %0 = vector.load %arg2[%c0, %c0_0, %c0_1] : memref<1x8x32xf32, #tpu.memory_space<vmem>>, vector<1x8x32xf32>
    %1 = vector.shape_cast %0 : vector<1x8x32xf32> to vector<8x32xf32>
    %c0_2 = arith.constant 0 : index
    %c0_3 = arith.constant 0 : index
    %2 = vector.load %arg3[%c0_2, %c0_3] : memref<1x32xf32, #tpu.memory_space<vmem>>, vector<1x32xf32>
    %c0_4 = arith.constant 0 : index
    %c0_5 = arith.constant 0 : index
    %3 = vector.load %arg4[%c0_4, %c0_5] : memref<1x32xf32, #tpu.memory_space<vmem>>, vector<1x32xf32>
    %cst = arith.constant dense<0.000000e+00> : vector<8xf32>
    %4 = vector.multi_reduction <add>, %1, %cst [1] : vector<8x32xf32> to vector<8xf32>
    %5 = vector.shape_cast %4 : vector<8xf32> to vector<8x1xf32>
    %cst_6 = arith.constant 3.200000e+01 : f32
    %6 = vector.broadcast %cst_6 : f32 to vector<8x1xf32>
    %7 = arith.divf %5, %6 : vector<8x1xf32>
    %8 = vector.broadcast %7 : vector<8x1xf32> to vector<8x32xf32>
    %9 = arith.subf %1, %8 : vector<8x32xf32>
    %10 = arith.mulf %9, %9 : vector<8x32xf32>
    %cst_7 = arith.constant dense<0.000000e+00> : vector<8xf32>
    %11 = vector.multi_reduction <add>, %10, %cst_7 [1] : vector<8x32xf32> to vector<8xf32>
    %12 = vector.shape_cast %11 : vector<8xf32> to vector<8x1xf32>
    %cst_8 = arith.constant 3.200000e+01 : f32
    %13 = vector.broadcast %cst_8 : f32 to vector<8x1xf32>
    %14 = arith.divf %12, %13 : vector<8x1xf32>
    %15 = vector.broadcast %7 : vector<8x1xf32> to vector<8x32xf32>
    %16 = arith.subf %1, %15 : vector<8x32xf32>
    %cst_9 = arith.constant 9.99999974E-6 : f32
    %17 = vector.broadcast %cst_9 : f32 to vector<8x1xf32>
    %18 = arith.addf %14, %17 : vector<8x1xf32>
    %19 = math.rsqrt %18 : vector<8x1xf32>
    %20 = vector.broadcast %19 : vector<8x1xf32> to vector<8x32xf32>
    %21 = arith.mulf %16, %20 : vector<8x32xf32>
    %22 = vector.broadcast %2 : vector<1x32xf32> to vector<8x32xf32>
    %23 = arith.mulf %21, %22 : vector<8x32xf32>
    %24 = vector.broadcast %3 : vector<1x32xf32> to vector<8x32xf32>
    %25 = arith.addf %23, %24 : vector<8x32xf32>
    %26 = arith.truncf %25 : vector<8x32xf32> to vector<8x32xbf16>
    %c0_10 = arith.constant 0 : index
    %c0_11 = arith.constant 0 : index
    %27 = vector.load %arg7[%c0_10, %c0_11] : memref<32x32xbf16, #tpu.memory_space<vmem>>, vector<32x32xbf16>
    %cst_12 = arith.constant dense<0.000000e+00> : vector<8x32xf32>
    %28 = tpu.matmul %26, %27, %cst_12 {dimension_numbers = #tpu.dot_dimension_numbers<[1], [0], [0], [1], [0, 0, 1, 1], [], []>} : vector<8x32xbf16>, vector<32x32xbf16>, vector<8x32xf32> -> vector<8x32xf32>
    %c0_13 = arith.constant 0 : index
    %c0_14 = arith.constant 0 : index
    %29 = vector.load %arg8[%c0_13, %c0_14] : memref<32x32xbf16, #tpu.memory_space<vmem>>, vector<32x32xbf16>
    %cst_15 = arith.constant dense<0.000000e+00> : vector<8x32xf32>
    %30 = tpu.matmul %26, %29, %cst_15 {dimension_numbers = #tpu.dot_dimension_numbers<[1], [0], [0], [1], [0, 0, 1, 1], [], []>} : vector<8x32xbf16>, vector<32x32xbf16>, vector<8x32xf32> -> vector<8x32xf32>
    %c0_16 = arith.constant 0 : index
    %c0_17 = arith.constant 0 : index
    %31 = vector.load %arg9[%c0_16, %c0_17] : memref<32x32xbf16, #tpu.memory_space<vmem>>, vector<32x32xbf16>
    %cst_18 = arith.constant dense<0.000000e+00> : vector<8x32xf32>
    %32 = tpu.matmul %26, %31, %cst_18 {dimension_numbers = #tpu.dot_dimension_numbers<[1], [0], [0], [1], [0, 0, 1, 1], [], []>} : vector<8x32xbf16>, vector<32x32xbf16>, vector<8x32xf32> -> vector<8x32xf32>
    %c0_19 = arith.constant 0 : index
    %c0_20 = arith.constant 0 : index
    %33 = vector.load %arg5[%c0_19, %c0_20] : memref<1x32xf32, #tpu.memory_space<vmem>>, vector<1x32xf32>
    %cst_21 = arith.constant dense<0.000000e+00> : vector<8xf32>
    %34 = vector.multi_reduction <add>, %28, %cst_21 [1] : vector<8x32xf32> to vector<8xf32>
    %35 = vector.shape_cast %34 : vector<8xf32> to vector<8x1xf32>
    %cst_22 = arith.constant 3.200000e+01 : f32
    %36 = vector.broadcast %cst_22 : f32 to vector<8x1xf32>
    %37 = arith.divf %35, %36 : vector<8x1xf32>
    %38 = vector.broadcast %37 : vector<8x1xf32> to vector<8x32xf32>
    %39 = arith.subf %28, %38 : vector<8x32xf32>
    %40 = arith.mulf %39, %39 : vector<8x32xf32>
    %cst_23 = arith.constant dense<0.000000e+00> : vector<8xf32>
    %41 = vector.multi_reduction <add>, %40, %cst_23 [1] : vector<8x32xf32> to vector<8xf32>
    %42 = vector.shape_cast %41 : vector<8xf32> to vector<8x1xf32>
    %cst_24 = arith.constant 3.200000e+01 : f32
    %43 = vector.broadcast %cst_24 : f32 to vector<8x1xf32>
    %44 = arith.divf %42, %43 : vector<8x1xf32>
    %45 = vector.broadcast %37 : vector<8x1xf32> to vector<8x32xf32>
    %46 = arith.subf %28, %45 : vector<8x32xf32>
    %cst_25 = arith.constant 9.99999974E-6 : f32
    %47 = vector.broadcast %cst_25 : f32 to vector<8x1xf32>
    %48 = arith.addf %44, %47 : vector<8x1xf32>
    %49 = math.rsqrt %48 : vector<8x1xf32>
    %50 = vector.broadcast %49 : vector<8x1xf32> to vector<8x32xf32>
    %51 = arith.mulf %46, %50 : vector<8x32xf32>
    %52 = vector.broadcast %33 : vector<1x32xf32> to vector<8x32xf32>
    %53 = arith.mulf %51, %52 : vector<8x32xf32>
    %54 = arith.truncf %53 : vector<8x32xf32> to vector<8x32xbf16>
    %c0_26 = arith.constant 0 : index
    %c0_27 = arith.constant 0 : index
    %c0_28 = arith.constant 0 : index
    %55 = vector.load %arg10[%c0_26, %c0_27, %c0_28] : memref<1x8x32xbf16, #tpu.memory_space<vmem>>, vector<1x8x32xbf16>
    %56 = vector.shape_cast %55 : vector<1x8x32xbf16> to vector<8x32xbf16>
    %57 = vector.shape_cast %54 : vector<8x32xbf16> to vector<1x8x32xbf16>
    tpu.vector_store %arg10[%c0_26, %c0_27, %c0_28], %57 {strides = array<i32>} : memref<1x8x32xbf16, #tpu.memory_space<vmem>>, vector<1x8x32xbf16>,
    %c0_29 = arith.constant 0 : index
    %c0_30 = arith.constant 0 : index
    %58 = vector.load %arg6[%c0_29, %c0_30] : memref<1x32xf32, #tpu.memory_space<vmem>>, vector<1x32xf32>
    %cst_31 = arith.constant dense<0.000000e+00> : vector<8xf32>
    %59 = vector.multi_reduction <add>, %30, %cst_31 [1] : vector<8x32xf32> to vector<8xf32>
    %60 = vector.shape_cast %59 : vector<8xf32> to vector<8x1xf32>
    %cst_32 = arith.constant 3.200000e+01 : f32
    %61 = vector.broadcast %cst_32 : f32 to vector<8x1xf32>
    %62 = arith.divf %60, %61 : vector<8x1xf32>
    %63 = vector.broadcast %62 : vector<8x1xf32> to vector<8x32xf32>
    %64 = arith.subf %30, %63 : vector<8x32xf32>
    %65 = arith.mulf %64, %64 : vector<8x32xf32>
    %cst_33 = arith.constant dense<0.000000e+00> : vector<8xf32>
    %66 = vector.multi_reduction <add>, %65, %cst_33 [1] : vector<8x32xf32> to vector<8xf32>
    %67 = vector.shape_cast %66 : vector<8xf32> to vector<8x1xf32>
    %cst_34 = arith.constant 3.200000e+01 : f32
    %68 = vector.broadcast %cst_34 : f32 to vector<8x1xf32>
    %69 = arith.divf %67, %68 : vector<8x1xf32>
    %70 = vector.broadcast %62 : vector<8x1xf32> to vector<8x32xf32>
    %71 = arith.subf %30, %70 : vector<8x32xf32>
    %cst_35 = arith.constant 9.99999974E-6 : f32
    %72 = vector.broadcast %cst_35 : f32 to vector<8x1xf32>
    %73 = arith.addf %69, %72 : vector<8x1xf32>
    %74 = math.rsqrt %73 : vector<8x1xf32>
    %75 = vector.broadcast %74 : vector<8x1xf32> to vector<8x32xf32>
    %76 = arith.mulf %71, %75 : vector<8x32xf32>
    %77 = vector.broadcast %58 : vector<1x32xf32> to vector<8x32xf32>
    %78 = arith.mulf %76, %77 : vector<8x32xf32>
    %79 = arith.truncf %78 : vector<8x32xf32> to vector<8x32xbf16>
    %c0_36 = arith.constant 0 : index
    %c0_37 = arith.constant 0 : index
    %c0_38 = arith.constant 0 : index
    %80 = vector.load %arg11[%c0_36, %c0_37, %c0_38] : memref<1x8x32xbf16, #tpu.memory_space<vmem>>, vector<1x8x32xbf16>
    %81 = vector.shape_cast %80 : vector<1x8x32xbf16> to vector<8x32xbf16>
    %82 = vector.shape_cast %79 : vector<8x32xbf16> to vector<1x8x32xbf16>
    tpu.vector_store %arg11[%c0_36, %c0_37, %c0_38], %82 {strides = array<i32>} : memref<1x8x32xbf16, #tpu.memory_space<vmem>>, vector<1x8x32xbf16>,
    %83 = arith.truncf %32 : vector<8x32xf32> to vector<8x32xbf16>
    %c0_39 = arith.constant 0 : index
    %c0_40 = arith.constant 0 : index
    %c0_41 = arith.constant 0 : index
    %84 = vector.load %arg12[%c0_39, %c0_40, %c0_41] : memref<1x8x32xbf16, #tpu.memory_space<vmem>>, vector<1x8x32xbf16>
    %85 = vector.shape_cast %84 : vector<1x8x32xbf16> to vector<8x32xbf16>
    %86 = vector.shape_cast %83 : vector<8x32xbf16> to vector<1x8x32xbf16>
    tpu.vector_store %arg12[%c0_39, %c0_40, %c0_41], %86 {strides = array<i32>} : memref<1x8x32xbf16, #tpu.memory_space<vmem>>, vector<1x8x32xbf16>,
    return
  }
  func.func @transform_0(%arg0: i32, %arg1: i32) -> (i32, i32, i32) {
    %c0_i32 = arith.constant 0 : i32
    %c0_i32_0 = arith.constant 0 : i32
    return %arg0, %arg1, %c0_i32 : i32, i32, i32
  }
  func.func @transform_1(%arg0: i32, %arg1: i32) -> (i32, i32) {
    %c0_i32 = arith.constant 0 : i32
    %c0_i32_0 = arith.constant 0 : i32
    %c0_i32_1 = arith.constant 0 : i32
    return %c0_i32, %c0_i32_0 : i32, i32
  }
  func.func @transform_2(%arg0: i32, %arg1: i32) -> (i32, i32) {
    %c0_i32 = arith.constant 0 : i32
    %c0_i32_0 = arith.constant 0 : i32
    %c0_i32_1 = arith.constant 0 : i32
    return %c0_i32, %c0_i32_0 : i32, i32
  }
  func.func @transform_3(%arg0: i32, %arg1: i32) -> (i32, i32) {
    %c0_i32 = arith.constant 0 : i32
    %c0_i32_0 = arith.constant 0 : i32
    %c0_i32_1 = arith.constant 0 : i32
    return %c0_i32, %c0_i32_0 : i32, i32
  }
  func.func @transform_4(%arg0: i32, %arg1: i32) -> (i32, i32) {
    %c0_i32 = arith.constant 0 : i32
    %c0_i32_0 = arith.constant 0 : i32
    %c0_i32_1 = arith.constant 0 : i32
    return %c0_i32, %c0_i32_0 : i32, i32
  }
  func.func @transform_5(%arg0: i32, %arg1: i32) -> (i32, i32) {
    %c0_i32 = arith.constant 0 : i32
    %c0_i32_0 = arith.constant 0 : i32
    %c0_i32_1 = arith.constant 0 : i32
    return %c0_i32, %c0_i32_0 : i32, i32
  }
  func.func @transform_6(%arg0: i32, %arg1: i32) -> (i32, i32) {
    %c0_i32 = arith.constant 0 : i32
    %c0_i32_0 = arith.constant 0 : i32
    %c0_i32_1 = arith.constant 0 : i32
    return %c0_i32, %c0_i32_0 : i32, i32
  }
  func.func @transform_7(%arg0: i32, %arg1: i32) -> (i32, i32) {
    %c0_i32 = arith.constant 0 : i32
    %c0_i32_0 = arith.constant 0 : i32
    %c0_i32_1 = arith.constant 0 : i32
    return %c0_i32, %c0_i32_0 : i32, i32
  }
  func.func @transform_8(%arg0: i32, %arg1: i32) -> (i32, i32, i32) {
    %c0_i32 = arith.constant 0 : i32
    %c0_i32_0 = arith.constant 0 : i32
    return %arg0, %arg1, %c0_i32 : i32, i32, i32
  }
  func.func @transform_9(%arg0: i32, %arg1: i32) -> (i32, i32, i32) {
    %c0_i32 = arith.constant 0 : i32
    %c0_i32_0 = arith.constant 0 : i32
    return %arg0, %arg1, %c0_i32 : i32, i32, i32
  }
  func.func @transform_10(%arg0: i32, %arg1: i32) -> (i32, i32, i32) {
    %c0_i32 = arith.constant 0 : i32
    %c0_i32_0 = arith.constant 0 : i32
    return %arg0, %arg1, %c0_i32 : i32, i32, i32
  }
}

module attributes {stable_mosaic.version = 11 : i64} {
  func.func @rope_kernel(%arg0: i32, %arg1: i32, %arg2: i32, %arg3: memref<1x1x8x8xbf16, #tpu.memory_space<vmem>>, %arg4: memref<1x1x8x8xbf16, #tpu.memory_space<vmem>>, %arg5: memref<8x8xf32, #tpu.memory_space<vmem>>, %arg6: memref<8x8xf32, #tpu.memory_space<vmem>>, %arg7: memref<8x8xf32, #tpu.memory_space<vmem>>, %arg8: memref<8x8xf32, #tpu.memory_space<vmem>>, %arg9: memref<1x1x8x8xbf16, #tpu.memory_space<vmem>>, %arg10: memref<1x1x8x8xbf16, #tpu.memory_space<vmem>>) attributes {dimension_semantics = [#tpu.dimension_semantics<parallel>, #tpu.dimension_semantics<parallel>, #tpu.dimension_semantics<parallel>], iteration_bounds = array<i64: 1, 2, 4>, scalar_prefetch = 0 : i64, scratch_operands = 0 : i64, tpu.core_type = #tpu.core_type<tc>, window_params = [{transform_indices = @transform_0, window_bounds = array<i64: 1, 1, 8, 8>}, {transform_indices = @transform_1, window_bounds = array<i64: 1, 1, 8, 8>}, {transform_indices = @transform_2, window_bounds = array<i64: 8, 8>}, {transform_indices = @transform_3, window_bounds = array<i64: 8, 8>}, {transform_indices = @transform_4, window_bounds = array<i64: 8, 8>}, {transform_indices = @transform_5, window_bounds = array<i64: 8, 8>}, {transform_indices = @transform_6, window_bounds = array<i64: 1, 1, 8, 8>}, {transform_indices = @transform_7, window_bounds = array<i64: 1, 1, 8, 8>}]} {
    %c0 = arith.constant 0 : index
    %c0_0 = arith.constant 0 : index
    %c0_1 = arith.constant 0 : index
    %c0_2 = arith.constant 0 : index
    %0 = vector.load %arg3[%c0, %c0_0, %c0_1, %c0_2] : memref<1x1x8x8xbf16, #tpu.memory_space<vmem>>, vector<1x1x8x8xbf16>
    %1 = vector.shape_cast %0 : vector<1x1x8x8xbf16> to vector<8x8xbf16>
    %2 = arith.extf %1 : vector<8x8xbf16> to vector<8x8xf32>
    %c0_3 = arith.constant 0 : index
    %c0_4 = arith.constant 0 : index
    %c0_5 = arith.constant 0 : index
    %c0_6 = arith.constant 0 : index
    %3 = vector.load %arg4[%c0_3, %c0_4, %c0_5, %c0_6] : memref<1x1x8x8xbf16, #tpu.memory_space<vmem>>, vector<1x1x8x8xbf16>
    %4 = vector.shape_cast %3 : vector<1x1x8x8xbf16> to vector<8x8xbf16>
    %5 = arith.extf %4 : vector<8x8xbf16> to vector<8x8xf32>
    %c0_7 = arith.constant 0 : index
    %c0_8 = arith.constant 0 : index
    %6 = vector.load %arg5[%c0_7, %c0_8] : memref<8x8xf32, #tpu.memory_space<vmem>>, vector<8x8xf32>
    %7 = arith.mulf %2, %6 : vector<8x8xf32>
    %8 = vector.extract_strided_slice %2 {offsets = [0, 4], sizes = [8, 4], strides = [1, 1]} : vector<8x8xf32> to vector<8x4xf32>
    %9 = vector.extract_strided_slice %2 {offsets = [0, 0], sizes = [8, 4], strides = [1, 1]} : vector<8x8xf32> to vector<8x4xf32>
    %10 = tpu.concatenate %8, %9 in 1 : vector<8x4xf32>, vector<8x4xf32> -> vector<8x8xf32>
    %c0_9 = arith.constant 0 : index
    %c0_10 = arith.constant 0 : index
    %11 = vector.load %arg6[%c0_9, %c0_10] : memref<8x8xf32, #tpu.memory_space<vmem>>, vector<8x8xf32>
    %12 = arith.mulf %10, %11 : vector<8x8xf32>
    %13 = arith.addf %7, %12 : vector<8x8xf32>
    %14 = arith.truncf %13 : vector<8x8xf32> to vector<8x8xbf16>
    %c0_11 = arith.constant 0 : index
    %c0_12 = arith.constant 0 : index
    %c0_13 = arith.constant 0 : index
    %c0_14 = arith.constant 0 : index
    %15 = vector.load %arg9[%c0_11, %c0_12, %c0_13, %c0_14] : memref<1x1x8x8xbf16, #tpu.memory_space<vmem>>, vector<1x1x8x8xbf16>
    %16 = vector.shape_cast %15 : vector<1x1x8x8xbf16> to vector<8x8xbf16>
    %17 = vector.shape_cast %14 : vector<8x8xbf16> to vector<1x1x8x8xbf16>
    tpu.vector_store %arg9[%c0_11, %c0_12, %c0_13, %c0_14], %17 {strides = array<i32>} : memref<1x1x8x8xbf16, #tpu.memory_space<vmem>>, vector<1x1x8x8xbf16>,
    %c0_15 = arith.constant 0 : index
    %c0_16 = arith.constant 0 : index
    %18 = vector.load %arg7[%c0_15, %c0_16] : memref<8x8xf32, #tpu.memory_space<vmem>>, vector<8x8xf32>
    %19 = arith.mulf %5, %18 : vector<8x8xf32>
    %20 = vector.extract_strided_slice %5 {offsets = [0, 4], sizes = [8, 4], strides = [1, 1]} : vector<8x8xf32> to vector<8x4xf32>
    %21 = vector.extract_strided_slice %5 {offsets = [0, 0], sizes = [8, 4], strides = [1, 1]} : vector<8x8xf32> to vector<8x4xf32>
    %22 = tpu.concatenate %20, %21 in 1 : vector<8x4xf32>, vector<8x4xf32> -> vector<8x8xf32>
    %c0_17 = arith.constant 0 : index
    %c0_18 = arith.constant 0 : index
    %23 = vector.load %arg8[%c0_17, %c0_18] : memref<8x8xf32, #tpu.memory_space<vmem>>, vector<8x8xf32>
    %24 = arith.mulf %22, %23 : vector<8x8xf32>
    %25 = arith.addf %19, %24 : vector<8x8xf32>
    %26 = arith.truncf %25 : vector<8x8xf32> to vector<8x8xbf16>
    %c0_19 = arith.constant 0 : index
    %c0_20 = arith.constant 0 : index
    %c0_21 = arith.constant 0 : index
    %c0_22 = arith.constant 0 : index
    %27 = vector.load %arg10[%c0_19, %c0_20, %c0_21, %c0_22] : memref<1x1x8x8xbf16, #tpu.memory_space<vmem>>, vector<1x1x8x8xbf16>
    %28 = vector.shape_cast %27 : vector<1x1x8x8xbf16> to vector<8x8xbf16>
    %29 = vector.shape_cast %26 : vector<8x8xbf16> to vector<1x1x8x8xbf16>
    tpu.vector_store %arg10[%c0_19, %c0_20, %c0_21, %c0_22], %29 {strides = array<i32>} : memref<1x1x8x8xbf16, #tpu.memory_space<vmem>>, vector<1x1x8x8xbf16>,
    return
  }
  func.func @transform_0(%arg0: i32, %arg1: i32, %arg2: i32) -> (i32, i32, i32, i32) {
    %c0_i32 = arith.constant 0 : i32
    %c0_i32_0 = arith.constant 0 : i32
    return %arg1, %arg2, %arg0, %c0_i32 : i32, i32, i32, i32
  }
  func.func @transform_1(%arg0: i32, %arg1: i32, %arg2: i32) -> (i32, i32, i32, i32) {
    %c0_i32 = arith.constant 0 : i32
    %c0_i32_0 = arith.constant 0 : i32
    return %arg1, %arg2, %arg0, %c0_i32 : i32, i32, i32, i32
  }
  func.func @transform_2(%arg0: i32, %arg1: i32, %arg2: i32) -> (i32, i32) {
    %c0_i32 = arith.constant 0 : i32
    %c0_i32_0 = arith.constant 0 : i32
    return %arg0, %c0_i32 : i32, i32
  }
  func.func @transform_3(%arg0: i32, %arg1: i32, %arg2: i32) -> (i32, i32) {
    %c0_i32 = arith.constant 0 : i32
    %c0_i32_0 = arith.constant 0 : i32
    return %arg0, %c0_i32 : i32, i32
  }
  func.func @transform_4(%arg0: i32, %arg1: i32, %arg2: i32) -> (i32, i32) {
    %c0_i32 = arith.constant 0 : i32
    %c0_i32_0 = arith.constant 0 : i32
    return %arg0, %c0_i32 : i32, i32
  }
  func.func @transform_5(%arg0: i32, %arg1: i32, %arg2: i32) -> (i32, i32) {
    %c0_i32 = arith.constant 0 : i32
    %c0_i32_0 = arith.constant 0 : i32
    return %arg0, %c0_i32 : i32, i32
  }
  func.func @transform_6(%arg0: i32, %arg1: i32, %arg2: i32) -> (i32, i32, i32, i32) {
    %c0_i32 = arith.constant 0 : i32
    %c0_i32_0 = arith.constant 0 : i32
    return %arg1, %arg2, %arg0, %c0_i32 : i32, i32, i32, i32
  }
  func.func @transform_7(%arg0: i32, %arg1: i32, %arg2: i32) -> (i32, i32, i32, i32) {
    %c0_i32 = arith.constant 0 : i32
    %c0_i32_0 = arith.constant 0 : i32
    return %arg1, %arg2, %arg0, %c0_i32 : i32, i32, i32, i32
  }
}

module attributes {stable_mosaic.version = 11 : i64} {
  func.func @flash_attn_kernel(%arg0: i32, %arg1: i32, %arg2: i32, %arg3: i32, %arg4: memref<1x1x8x8xbf16, #tpu.memory_space<vmem>>, %arg5: memref<1x1x8x8xbf16, #tpu.memory_space<vmem>>, %arg6: memref<1x1x8x8xbf16, #tpu.memory_space<vmem>>, %arg7: memref<1x1x8x8xbf16, #tpu.memory_space<vmem>>, %arg8: memref<8x1xf32, #tpu.memory_space<vmem>>, %arg9: memref<8x1xf32, #tpu.memory_space<vmem>>, %arg10: memref<8x8xf32, #tpu.memory_space<vmem>>) attributes {dimension_semantics = [#tpu.dimension_semantics<parallel>, #tpu.dimension_semantics<parallel>, #tpu.dimension_semantics<parallel>, #tpu.dimension_semantics<arbitrary>], iteration_bounds = array<i64: 2, 4, 1, 1>, scalar_prefetch = 0 : i64, scratch_operands = 3 : i64, tpu.core_type = #tpu.core_type<tc>, window_params = [{transform_indices = @transform_0, window_bounds = array<i64: 1, 1, 8, 8>}, {transform_indices = @transform_1, window_bounds = array<i64: 1, 1, 8, 8>}, {transform_indices = @transform_2, window_bounds = array<i64: 1, 1, 8, 8>}, {transform_indices = @transform_3, window_bounds = array<i64: 1, 1, 8, 8>}]} {
    %c0_i32 = arith.constant 0 : i32
    %0 = arith.cmpi eq, %arg3, %c0_i32 : i32
    %1 = arith.extui %0 : i1 to i32
    %c0_i32_0 = arith.constant 0 : i32
    %2 = arith.cmpi ne, %1, %c0_i32_0 : i32
    scf.if %2 {
      %cst_29 = arith.constant 0xFF800000 : f32
      %36 = vector.broadcast %cst_29 : f32 to vector<8x1xf32>
      %c0_30 = arith.constant 0 : index
      %c0_31 = arith.constant 0 : index
      %37 = vector.load %arg8[%c0_30, %c0_31] : memref<8x1xf32, #tpu.memory_space<vmem>>, vector<8x1xf32>
      tpu.vector_store %arg8[%c0_30, %c0_31], %36 {strides = array<i32>} : memref<8x1xf32, #tpu.memory_space<vmem>>, vector<8x1xf32>,
      %cst_32 = arith.constant 0.000000e+00 : f32
      %38 = vector.broadcast %cst_32 : f32 to vector<8x1xf32>
      %c0_33 = arith.constant 0 : index
      %c0_34 = arith.constant 0 : index
      %39 = vector.load %arg9[%c0_33, %c0_34] : memref<8x1xf32, #tpu.memory_space<vmem>>, vector<8x1xf32>
      tpu.vector_store %arg9[%c0_33, %c0_34], %38 {strides = array<i32>} : memref<8x1xf32, #tpu.memory_space<vmem>>, vector<8x1xf32>,
      %cst_35 = arith.constant 0.000000e+00 : f32
      %40 = vector.broadcast %cst_35 : f32 to vector<8x8xf32>
      %c0_36 = arith.constant 0 : index
      %c0_37 = arith.constant 0 : index
      %41 = vector.load %arg10[%c0_36, %c0_37] : memref<8x8xf32, #tpu.memory_space<vmem>>, vector<8x8xf32>
      tpu.vector_store %arg10[%c0_36, %c0_37], %40 {strides = array<i32>} : memref<8x8xf32, #tpu.memory_space<vmem>>, vector<8x8xf32>,
    } else {
    }
    %c0 = arith.constant 0 : index
    %c0_1 = arith.constant 0 : index
    %c0_2 = arith.constant 0 : index
    %c0_3 = arith.constant 0 : index
    %3 = vector.load %arg4[%c0, %c0_1, %c0_2, %c0_3] : memref<1x1x8x8xbf16, #tpu.memory_space<vmem>>, vector<1x1x8x8xbf16>
    %4 = vector.shape_cast %3 : vector<1x1x8x8xbf16> to vector<8x8xbf16>
    %c0_4 = arith.constant 0 : index
    %c0_5 = arith.constant 0 : index
    %c0_6 = arith.constant 0 : index
    %c0_7 = arith.constant 0 : index
    %5 = vector.load %arg5[%c0_4, %c0_5, %c0_6, %c0_7] : memref<1x1x8x8xbf16, #tpu.memory_space<vmem>>, vector<1x1x8x8xbf16>
    %6 = vector.shape_cast %5 : vector<1x1x8x8xbf16> to vector<8x8xbf16>
    %cst = arith.constant dense<0.000000e+00> : vector<8x8xf32>
    %7 = tpu.matmul %4, %6, %cst {dimension_numbers = #tpu.dot_dimension_numbers<[1], [1], [0], [0], [0, 0, 1, 0], [], []>} : vector<8x8xbf16>, vector<8x8xbf16>, vector<8x8xf32> -> vector<8x8xf32>
    %c0_8 = arith.constant 0 : index
    %c0_9 = arith.constant 0 : index
    %8 = vector.load %arg8[%c0_8, %c0_9] : memref<8x1xf32, #tpu.memory_space<vmem>>, vector<8x1xf32>
    %cst_10 = arith.constant dense<0xFF800000> : vector<8xf32>
    %9 = vector.multi_reduction <maximumf>, %7, %cst_10 [1] : vector<8x8xf32> to vector<8xf32>
    %10 = vector.shape_cast %9 : vector<8xf32> to vector<8x1xf32>
    %11 = arith.maximumf %8, %10 : vector<8x1xf32>
    %12 = arith.subf %8, %11 : vector<8x1xf32>
    %13 = math.exp %12 : vector<8x1xf32>
    %14 = vector.broadcast %11 : vector<8x1xf32> to vector<8x8xf32>
    %15 = arith.subf %7, %14 : vector<8x8xf32>
    %16 = math.exp %15 : vector<8x8xf32>
    %c0_11 = arith.constant 0 : index
    %c0_12 = arith.constant 0 : index
    %17 = vector.load %arg9[%c0_11, %c0_12] : memref<8x1xf32, #tpu.memory_space<vmem>>, vector<8x1xf32>
    %18 = arith.mulf %13, %17 : vector<8x1xf32>
    %cst_13 = arith.constant dense<0.000000e+00> : vector<8xf32>
    %19 = vector.multi_reduction <add>, %16, %cst_13 [1] : vector<8x8xf32> to vector<8xf32>
    %20 = vector.shape_cast %19 : vector<8xf32> to vector<8x1xf32>
    %21 = arith.addf %18, %20 : vector<8x1xf32>
    %c0_14 = arith.constant 0 : index
    %c0_15 = arith.constant 0 : index
    %22 = vector.load %arg9[%c0_14, %c0_15] : memref<8x1xf32, #tpu.memory_space<vmem>>, vector<8x1xf32>
    tpu.vector_store %arg9[%c0_14, %c0_15], %21 {strides = array<i32>} : memref<8x1xf32, #tpu.memory_space<vmem>>, vector<8x1xf32>,
    %c0_16 = arith.constant 0 : index
    %c0_17 = arith.constant 0 : index
    %23 = vector.load %arg10[%c0_16, %c0_17] : memref<8x8xf32, #tpu.memory_space<vmem>>, vector<8x8xf32>
    %24 = vector.broadcast %13 : vector<8x1xf32> to vector<8x8xf32>
    %25 = arith.mulf %24, %23 : vector<8x8xf32>
    %26 = arith.truncf %16 : vector<8x8xf32> to vector<8x8xbf16>
    %c0_18 = arith.constant 0 : index
    %c0_19 = arith.constant 0 : index
    %c0_20 = arith.constant 0 : index
    %c0_21 = arith.constant 0 : index
    %27 = vector.load %arg6[%c0_18, %c0_19, %c0_20, %c0_21] : memref<1x1x8x8xbf16, #tpu.memory_space<vmem>>, vector<1x1x8x8xbf16>
    %28 = vector.shape_cast %27 : vector<1x1x8x8xbf16> to vector<8x8xbf16>
    %cst_22 = arith.constant dense<0.000000e+00> : vector<8x8xf32>
    %29 = tpu.matmul %26, %28, %cst_22 {dimension_numbers = #tpu.dot_dimension_numbers<[1], [0], [0], [1], [0, 0, 1, 1], [], []>} : vector<8x8xbf16>, vector<8x8xbf16>, vector<8x8xf32> -> vector<8x8xf32>
    %30 = arith.addf %25, %29 : vector<8x8xf32>
    %c0_23 = arith.constant 0 : index
    %c0_24 = arith.constant 0 : index
    %31 = vector.load %arg10[%c0_23, %c0_24] : memref<8x8xf32, #tpu.memory_space<vmem>>, vector<8x8xf32>
    tpu.vector_store %arg10[%c0_23, %c0_24], %30 {strides = array<i32>} : memref<8x8xf32, #tpu.memory_space<vmem>>, vector<8x8xf32>,
    %c0_25 = arith.constant 0 : index
    %c0_26 = arith.constant 0 : index
    %32 = vector.load %arg8[%c0_25, %c0_26] : memref<8x1xf32, #tpu.memory_space<vmem>>, vector<8x1xf32>
    tpu.vector_store %arg8[%c0_25, %c0_26], %11 {strides = array<i32>} : memref<8x1xf32, #tpu.memory_space<vmem>>, vector<8x1xf32>,
    %c0_i32_27 = arith.constant 0 : i32
    %33 = arith.cmpi eq, %arg3, %c0_i32_27 : i32
    %34 = arith.extui %33 : i1 to i32
    %c0_i32_28 = arith.constant 0 : i32
    %35 = arith.cmpi ne, %34, %c0_i32_28 : i32
    scf.if %35 {
      %c0_29 = arith.constant 0 : index
      %c0_30 = arith.constant 0 : index
      %36 = vector.load %arg10[%c0_29, %c0_30] : memref<8x8xf32, #tpu.memory_space<vmem>>, vector<8x8xf32>
      %c0_31 = arith.constant 0 : index
      %c0_32 = arith.constant 0 : index
      %37 = vector.load %arg9[%c0_31, %c0_32] : memref<8x1xf32, #tpu.memory_space<vmem>>, vector<8x1xf32>
      %38 = tpu.reciprocal %37 {approx = true} : vector<8x1xf32> -> vector<8x1xf32>
      %39 = vector.broadcast %38 : vector<8x1xf32> to vector<8x8xf32>
      %40 = arith.mulf %36, %39 : vector<8x8xf32>
      %41 = arith.truncf %40 : vector<8x8xf32> to vector<8x8xbf16>
      %c0_33 = arith.constant 0 : index
      %c0_34 = arith.constant 0 : index
      %c0_35 = arith.constant 0 : index
      %c0_36 = arith.constant 0 : index
      %42 = vector.load %arg7[%c0_33, %c0_34, %c0_35, %c0_36] : memref<1x1x8x8xbf16, #tpu.memory_space<vmem>>, vector<1x1x8x8xbf16>
      %43 = vector.shape_cast %42 : vector<1x1x8x8xbf16> to vector<8x8xbf16>
      %44 = vector.shape_cast %41 : vector<8x8xbf16> to vector<1x1x8x8xbf16>
      tpu.vector_store %arg7[%c0_33, %c0_34, %c0_35, %c0_36], %44 {strides = array<i32>} : memref<1x1x8x8xbf16, #tpu.memory_space<vmem>>, vector<1x1x8x8xbf16>,
    } else {
    }
    return
  }
  func.func @transform_0(%arg0: i32, %arg1: i32, %arg2: i32, %arg3: i32) -> (i32, i32, i32, i32) {
    %c0_i32 = arith.constant 0 : i32
    %c0_i32_0 = arith.constant 0 : i32
    return %arg0, %arg1, %arg2, %c0_i32 : i32, i32, i32, i32
  }
  func.func @transform_1(%arg0: i32, %arg1: i32, %arg2: i32, %arg3: i32) -> (i32, i32, i32, i32) {
    %c0_i32 = arith.constant 0 : i32
    %c0_i32_0 = arith.constant 0 : i32
    return %arg0, %arg1, %arg3, %c0_i32 : i32, i32, i32, i32
  }
  func.func @transform_2(%arg0: i32, %arg1: i32, %arg2: i32, %arg3: i32) -> (i32, i32, i32, i32) {
    %c0_i32 = arith.constant 0 : i32
    %c0_i32_0 = arith.constant 0 : i32
    return %arg0, %arg1, %arg3, %c0_i32 : i32, i32, i32, i32
  }
  func.func @transform_3(%arg0: i32, %arg1: i32, %arg2: i32, %arg3: i32) -> (i32, i32, i32, i32) {
    %c0_i32 = arith.constant 0 : i32
    %c0_i32_0 = arith.constant 0 : i32
    return %arg0, %arg1, %arg2, %c0_i32 : i32, i32, i32, i32
  }
}

module attributes {stable_mosaic.version = 11 : i64} {
  func.func @out_proj_kernel(%arg0: i32, %arg1: i32, %arg2: memref<1x8x32xbf16, #tpu.memory_space<vmem>>, %arg3: memref<32x32xbf16, #tpu.memory_space<vmem>>, %arg4: memref<1x8x32xf32, #tpu.memory_space<vmem>>) attributes {dimension_semantics = [#tpu.dimension_semantics<parallel>, #tpu.dimension_semantics<parallel>], iteration_bounds = array<i64: 2, 1>, scalar_prefetch = 0 : i64, scratch_operands = 0 : i64, tpu.core_type = #tpu.core_type<tc>, window_params = [{transform_indices = @transform_0, window_bounds = array<i64: 1, 8, 32>}, {pipeline_mode = #tpu.pipeline_mode<synchronous>, transform_indices = @transform_1, window_bounds = array<i64: 32, 32>}, {transform_indices = @transform_2, window_bounds = array<i64: 1, 8, 32>}]} {
    %c0 = arith.constant 0 : index
    %c0_0 = arith.constant 0 : index
    %c0_1 = arith.constant 0 : index
    %0 = vector.load %arg2[%c0, %c0_0, %c0_1] : memref<1x8x32xbf16, #tpu.memory_space<vmem>>, vector<1x8x32xbf16>
    %1 = vector.shape_cast %0 : vector<1x8x32xbf16> to vector<8x32xbf16>
    %c0_2 = arith.constant 0 : index
    %c0_3 = arith.constant 0 : index
    %2 = vector.load %arg3[%c0_2, %c0_3] : memref<32x32xbf16, #tpu.memory_space<vmem>>, vector<32x32xbf16>
    %cst = arith.constant dense<0.000000e+00> : vector<8x32xf32>
    %3 = tpu.matmul %1, %2, %cst {dimension_numbers = #tpu.dot_dimension_numbers<[1], [0], [0], [1], [0, 0, 1, 1], [], []>} : vector<8x32xbf16>, vector<32x32xbf16>, vector<8x32xf32> -> vector<8x32xf32>
    %c0_4 = arith.constant 0 : index
    %c0_5 = arith.constant 0 : index
    %c0_6 = arith.constant 0 : index
    %4 = vector.load %arg4[%c0_4, %c0_5, %c0_6] : memref<1x8x32xf32, #tpu.memory_space<vmem>>, vector<1x8x32xf32>
    %5 = vector.shape_cast %4 : vector<1x8x32xf32> to vector<8x32xf32>
    %6 = vector.shape_cast %3 : vector<8x32xf32> to vector<1x8x32xf32>
    tpu.vector_store %arg4[%c0_4, %c0_5, %c0_6], %6 {strides = array<i32>} : memref<1x8x32xf32, #tpu.memory_space<vmem>>, vector<1x8x32xf32>,
    return
  }
  func.func @transform_0(%arg0: i32, %arg1: i32) -> (i32, i32, i32) {
    %c0_i32 = arith.constant 0 : i32
    %c0_i32_0 = arith.constant 0 : i32
    return %arg0, %arg1, %c0_i32 : i32, i32, i32
  }
  func.func @transform_1(%arg0: i32, %arg1: i32) -> (i32, i32) {
    %c0_i32 = arith.constant 0 : i32
    %c0_i32_0 = arith.constant 0 : i32
    %c0_i32_1 = arith.constant 0 : i32
    return %c0_i32, %c0_i32_0 : i32, i32
  }
  func.func @transform_2(%arg0: i32, %arg1: i32) -> (i32, i32, i32) {
    %c0_i32 = arith.constant 0 : i32
    %c0_i32_0 = arith.constant 0 : i32
    return %arg0, %arg1, %c0_i32 : i32, i32, i32
  }
}

</mosaic_0001>

<llo_original>
// kernel: multi_head_attention.4
$region0: #{multi_head_attention.4}
  #allocation0 [shape = 'u32[]', space=smem, size = 0x4, offset = 0x4, fixed_abs, tag = 'smem constant byte address 0x4 - core index']
  #allocation1 [shape = 'u32[144,128]{1,0:T(1,128)}', space=vmem, size = 0x12000, scoped, tag = 'internal scratch']
  %s0 = inlined_call_operand.hbm [shape: f32[2,8,32], index: 0, kind: input, shape index: {}]
  %s1 = inlined_call_operand.hbm [shape: f32[1,32], index: 1, kind: input, shape index: {}]
  %s2 = inlined_call_operand.hbm [shape: f32[1,32], index: 2, kind: input, shape index: {}]
  %s3 = inlined_call_operand.hbm [shape: f32[1,32], index: 3, kind: input, shape index: {}]
  %s4 = inlined_call_operand.hbm [shape: f32[1,32], index: 4, kind: input, shape index: {}]
  %s5 = inlined_call_operand.hbm [shape: bf16[32,32], index: 5, kind: input, shape index: {}]
  %s6 = inlined_call_operand.hbm [shape: bf16[32,32], index: 6, kind: input, shape index: {}]
  %s7 = inlined_call_operand.hbm [shape: bf16[32,32], index: 7, kind: input, shape index: {}]
  %s8 = inlined_call_operand.hbm [shape: bf16[2,8,32], index: 8, kind: output, shape index: {0}]
  %s9 = inlined_call_operand.hbm [shape: bf16[2,8,32], index: 9, kind: output, shape index: {1}]
  %s10 = inlined_call_operand.hbm [shape: bf16[2,8,32], index: 10, kind: output, shape index: {2}]
  %11 = xla_tuple %s8, %s9, %s10
  %s12 = sld [smem:[#allocation0]]
  $region113: #{multi_head_attention.4} parent=0
    _
  %s14 = ssub.s32 1, %s12
  %s15 = scalar_select 0, %s14, %s12
  $region1: #{multi_head_attention.4} parent=0
    #allocation2 [shape = 'u8[8192]{0}', space=vmem, size = 0x2000, scoped, tag = 'input window, operand 0']
    #allocation3 [shape = 's32[2]{0}', space=sflag, size = 0x8, scoped, tag = 'scoped memory for multi_head_attention.4']
    #allocation4 [shape = 's32[2]{0}', space=sflag, size = 0x8, scoped, tag = 'scoped memory for multi_head_attention.4']
    #allocation5 [shape = 'u8[512]{0}', space=vmem, size = 0x400, scoped, tag = 'input window, operand 1, single buffered']
    #allocation6 [shape = 's32[1]{0}', space=sflag, size = 0x4, scoped, tag = 'scoped memory for multi_head_attention.4']
    #allocation7 [shape = 'u8[512]{0}', space=vmem, size = 0x400, scoped, tag = 'input window, operand 2, single buffered']
    #allocation8 [shape = 'u8[512]{0}', space=vmem, size = 0x400, scoped, tag = 'input window, operand 3, single buffered']
    #allocation9 [shape = 's32[1]{0}', space=sflag, size = 0x4, scoped, tag = 'scoped memory for multi_head_attention.4']
    #allocation10 [shape = 'u8[512]{0}', space=vmem, size = 0x400, scoped, tag = 'input window, operand 4, single buffered']
    #allocation11 [shape = 'u8[8192]{0}', space=vmem, size = 0x2000, scoped, tag = 'input window, operand 5, single buffered']
    #allocation12 [shape = 's32[1]{0}', space=sflag, size = 0x4, scoped, tag = 'scoped memory for multi_head_attention.4']
    #allocation13 [shape = 'u8[8192]{0}', space=vmem, size = 0x2000, scoped, tag = 'input window, operand 6, single buffered']
    #allocation14 [shape = 'u8[8192]{0}', space=vmem, size = 0x2000, scoped, tag = 'input window, operand 7, single buffered']
    #allocation15 [shape = 's32[1]{0}', space=sflag, size = 0x4, scoped, tag = 'scoped memory for multi_head_attention.4']
    #allocation16 [shape = 'u8[4096]{0}', space=vmem, size = 0x1000, scoped, tag = 'output window, operand 0']
    #allocation17 [shape = 'u8[4096]{0}', space=vmem, size = 0x1000, scoped, tag = 'output window, operand 1']
    #allocation18 [shape = 's32[2]{0}', space=sflag, size = 0x8, scoped, tag = 'scoped memory for multi_head_attention.4']
    #allocation19 [shape = 'u8[4096]{0}', space=vmem, size = 0x1000, scoped, tag = 'output window, operand 2']
    %16 = vsyncpa [#allocation3], 0
    %s17 = scalar_lea.sflag [#allocation3], 1
    %18 = vsyncpa %s17, 0
    %19 = vsyncpa [#allocation6], 0
    %20 = vsyncpa [#allocation9], 0
    %21 = vsyncpa [#allocation12], 0
    %22 = vsyncpa [#allocation15], 0
    %23 = vsyncpa [#allocation4], 0
    %s24 = scalar_lea.sflag [#allocation4], 1
    %25 = vsyncpa %s24, 0
    %26 = vsyncpa [#allocation18], 0
    %s27 = scalar_lea.sflag [#allocation18], 1
    %28 = vsyncpa %s27, 0
    loop: start=0, step=1, limit=4
    $region2: #{multi_head_attention.4} parent=1 // loop_pre_header
      _
    $region3: #{multi_head_attention.4} parent=1 // loop_header
      %s30 = sphi 0, %s34
      %p31 = scmp.ge.s32.totalorder %s30, 4
      %s37 = sphi 0, %s49
      %s38 = sphi 0, %s45
      %s39 = sphi 0, %s37
      %s40 = sphi 0, %s38
      %s41 = sphi 0, %s39
      %s42 = sphi 0, %s40
      %s54 = sphi 0, %s56
      %s57 = sphi 0, %s54
      %s58 = sphi 0, %s57
      %s74 = sphi 0, %s58
      %s78 = sphi 0, %s78
      %s80 = sphi 0, %s78
      %s81 = sphi 0, %s80
      %s95 = sphi 0, %s81
      %s99 = sphi 0, %s99
      %s101 = sphi 0, %s99
      %s102 = sphi 0, %s101
      %s116 = sphi 0, %s102
      %s120 = sphi 0, %s120
      %s122 = sphi 0, %s120
      %s123 = sphi 0, %s122
      %s137 = sphi 0, %s123
      %s141 = sphi 0, %s141
      %s143 = sphi 0, %s141
      %s144 = sphi 0, %s143
      %s158 = sphi 0, %s144
      %s162 = sphi 0, %s162
      %s164 = sphi 0, %s162
      %s165 = sphi 0, %s164
      %s179 = sphi 0, %s165
      %s183 = sphi 0, %s183
      %s185 = sphi 0, %s183
      %s186 = sphi 0, %s185
      %s200 = sphi 0, %s186
      %s204 = sphi 0, %s204
      %s206 = sphi 0, %s204
      %s207 = sphi 0, %s206
      %s221 = sphi 0, %s207
      %s229 = sphi 0, %s231
      %s232 = sphi 0, %s229
      %s233 = sphi 0, %s232
      %s249 = sphi 0, %s233
      %s257 = sphi 0, %s259
      %s260 = sphi 0, %s257
      %s261 = sphi 0, %s260
      %s277 = sphi 0, %s261
      %s285 = sphi 0, %s287
      %s288 = sphi 0, %s285
      %s289 = sphi 0, %s288
      %s305 = sphi 0, %s289
    $region4: #{multi_head_attention.4} parent=1 // loop_header_branch
      %33 = sbr.rel (%p31) target = $region8
    $region5: #{multi_head_attention.4} parent=1 // loop_body
      %s35 = ssub.s32 %s30, 1
      %s36 = ssub.s32 %s30, 2
      %s43 = sadd.s32 1, %s38
      %p44 = scmp.ge.s32.totalorder %s43, 1
      %s45 = scalar_select %p44, 0, %s43
      %s46 = sadd.s32 1, %s37
      %s47 = scalar_select %p44, %s46, %s37
      %p48 = scmp.ge.s32.totalorder %s47, 2
      %s49 = scalar_select %p48, 0, %s47
      %s50 = ssub.s32 %s37, %s49
      %s51 = ssub.s32 %s38, %s45
      %s52 = sor.u32 %s50, %s51
      %p53 = scmp.eq.s32.totalorder %s52, 0
      %s55 = sadd.s32 %s54, 1
      %s56 = scalar_select %p53, %s54, %s55
      %p59 = pneg %p53
      %p60 = scmp.eq.s32.totalorder %s30, 1
      %p61 = por %p59, %p60
      %p62 = scmp.ne.s32.totalorder %s54, %s57
      %p63 = scmp.eq.s32.totalorder %s30, 0
      %p64 = por %p62, %p63
      %p65 = scmp.ne.s32.totalorder %s54, %s57
      %p66 = scmp.eq.s32.totalorder %s35, 1
      %p67 = por %p65, %p66
      %p68 = scmp.ne.s32.totalorder %s57, %s58
      %p69 = scmp.eq.s32.totalorder %s35, 0
      %p70 = por %p68, %p69
      %p71 = scmp.ne.s32.totalorder %s57, %s58
      %p72 = scmp.eq.s32.totalorder %s36, 1
      %p73 = por %p71, %p72
      %p75 = scmp.ne.s32.totalorder %s58, %s74
      %p76 = scmp.eq.s32.totalorder %s36, 0
      %p77 = por %p75, %p76
      %s79 = sadd.s32 %s78, 1
      %p82 = scmp.eq.s32.totalorder %s30, 1
      %p83 = scmp.ne.s32.totalorder %s78, %s80
      %p84 = scmp.eq.s32.totalorder %s30, 0
      %p85 = por %p83, %p84
      %p86 = scmp.ne.s32.totalorder %s78, %s80
      %p87 = scmp.eq.s32.totalorder %s35, 1
      %p88 = por %p86, %p87
      %p89 = scmp.ne.s32.totalorder %s80, %s81
      %p90 = scmp.eq.s32.totalorder %s35, 0
      %p91 = por %p89, %p90
      %p92 = scmp.ne.s32.totalorder %s80, %s81
      %p93 = scmp.eq.s32.totalorder %s36, 1
      %p94 = por %p92, %p93
      %p96 = scmp.ne.s32.totalorder %s81, %s95
      %p97 = scmp.eq.s32.totalorder %s36, 0
      %p98 = por %p96, %p97
      %s100 = sadd.s32 %s99, 1
      %p103 = scmp.eq.s32.totalorder %s30, 1
      %p104 = scmp.ne.s32.totalorder %s99, %s101
      %p105 = scmp.eq.s32.totalorder %s30, 0
      %p106 = por %p104, %p105
      %p107 = scmp.ne.s32.totalorder %s99, %s101
      %p108 = scmp.eq.s32.totalorder %s35, 1
      %p109 = por %p107, %p108
      %p110 = scmp.ne.s32.totalorder %s101, %s102
      %p111 = scmp.eq.s32.totalorder %s35, 0
      %p112 = por %p110, %p111
      %p113 = scmp.ne.s32.totalorder %s101, %s102
      %p114 = scmp.eq.s32.totalorder %s36, 1
      %p115 = por %p113, %p114
      %p117 = scmp.ne.s32.totalorder %s102, %s116
      %p118 = scmp.eq.s32.totalorder %s36, 0
      %p119 = por %p117, %p118
      %s121 = sadd.s32 %s120, 1
      %p124 = scmp.eq.s32.totalorder %s30, 1
      %p125 = scmp.ne.s32.totalorder %s120, %s122
      %p126 = scmp.eq.s32.totalorder %s30, 0
      %p127 = por %p125, %p126
      %p128 = scmp.ne.s32.totalorder %s120, %s122
      %p129 = scmp.eq.s32.totalorder %s35, 1
      %p130 = por %p128, %p129
      %p131 = scmp.ne.s32.totalorder %s122, %s123
      %p132 = scmp.eq.s32.totalorder %s35, 0
      %p133 = por %p131, %p132
      %p134 = scmp.ne.s32.totalorder %s122, %s123
      %p135 = scmp.eq.s32.totalorder %s36, 1
      %p136 = por %p134, %p135
      %p138 = scmp.ne.s32.totalorder %s123, %s137
      %p139 = scmp.eq.s32.totalorder %s36, 0
      %p140 = por %p138, %p139
      %s142 = sadd.s32 %s141, 1
      %p145 = scmp.eq.s32.totalorder %s30, 1
      %p146 = scmp.ne.s32.totalorder %s141, %s143
      %p147 = scmp.eq.s32.totalorder %s30, 0
      %p148 = por %p146, %p147
      %p149 = scmp.ne.s32.totalorder %s141, %s143
      %p150 = scmp.eq.s32.totalorder %s35, 1
      %p151 = por %p149, %p150
      %p152 = scmp.ne.s32.totalorder %s143, %s144
      %p153 = scmp.eq.s32.totalorder %s35, 0
      %p154 = por %p152, %p153
      %p155 = scmp.ne.s32.totalorder %s143, %s144
      %p156 = scmp.eq.s32.totalorder %s36, 1
      %p157 = por %p155, %p156
      %p159 = scmp.ne.s32.totalorder %s144, %s158
      %p160 = scmp.eq.s32.totalorder %s36, 0
      %p161 = por %p159, %p160
      %s163 = sadd.s32 %s162, 1
      %p166 = scmp.eq.s32.totalorder %s30, 1
      %p167 = scmp.ne.s32.totalorder %s162, %s164
      %p168 = scmp.eq.s32.totalorder %s30, 0
      %p169 = por %p167, %p168
      %p170 = scmp.ne.s32.totalorder %s162, %s164
      %p171 = scmp.eq.s32.totalorder %s35, 1
      %p172 = por %p170, %p171
      %p173 = scmp.ne.s32.totalorder %s164, %s165
      %p174 = scmp.eq.s32.totalorder %s35, 0
      %p175 = por %p173, %p174
      %p176 = scmp.ne.s32.totalorder %s164, %s165
      %p177 = scmp.eq.s32.totalorder %s36, 1
      %p178 = por %p176, %p177
      %p180 = scmp.ne.s32.totalorder %s165, %s179
      %p181 = scmp.eq.s32.totalorder %s36, 0
      %p182 = por %p180, %p181
      %s184 = sadd.s32 %s183, 1
      %p187 = scmp.eq.s32.totalorder %s30, 1
      %p188 = scmp.ne.s32.totalorder %s183, %s185
      %p189 = scmp.eq.s32.totalorder %s30, 0
      %p190 = por %p188, %p189
      %p191 = scmp.ne.s32.totalorder %s183, %s185
      %p192 = scmp.eq.s32.totalorder %s35, 1
      %p193 = por %p191, %p192
      %p194 = scmp.ne.s32.totalorder %s185, %s186
      %p195 = scmp.eq.s32.totalorder %s35, 0
      %p196 = por %p194, %p195
      %p197 = scmp.ne.s32.totalorder %s185, %s186
      %p198 = scmp.eq.s32.totalorder %s36, 1
      %p199 = por %p197, %p198
      %p201 = scmp.ne.s32.totalorder %s186, %s200
      %p202 = scmp.eq.s32.totalorder %s36, 0
      %p203 = por %p201, %p202
      %s205 = sadd.s32 %s204, 1
      %p208 = scmp.eq.s32.totalorder %s30, 1
      %p209 = scmp.ne.s32.totalorder %s204, %s206
      %p210 = scmp.eq.s32.totalorder %s30, 0
      %p211 = por %p209, %p210
      %p212 = scmp.ne.s32.totalorder %s204, %s206
      %p213 = scmp.eq.s32.totalorder %s35, 1
      %p214 = por %p212, %p213
      %p215 = scmp.ne.s32.totalorder %s206, %s207
      %p216 = scmp.eq.s32.totalorder %s35, 0
      %p217 = por %p215, %p216
      %p218 = scmp.ne.s32.totalorder %s206, %s207
      %p219 = scmp.eq.s32.totalorder %s36, 1
      %p220 = por %p218, %p219
      %p222 = scmp.ne.s32.totalorder %s207, %s221
      %p223 = scmp.eq.s32.totalorder %s36, 0
      %p224 = por %p222, %p223
      %s225 = ssub.s32 %s37, %s49
      %s226 = ssub.s32 %s38, %s45
      %s227 = sor.u32 %s225, %s226
      %p228 = scmp.eq.s32.totalorder %s227, 0
      %s230 = sadd.s32 %s229, 1
      %s231 = scalar_select %p228, %s229, %s230
      %p234 = pneg %p228
      %p235 = scmp.eq.s32.totalorder %s30, 1
      %p236 = por %p234, %p235
      %p237 = scmp.ne.s32.totalorder %s229, %s232
      %p238 = scmp.eq.s32.totalorder %s30, 0
      %p239 = por %p237, %p238
      %p240 = scmp.ne.s32.totalorder %s229, %s232
      %p241 = scmp.eq.s32.totalorder %s35, 1
      %p242 = por %p240, %p241
      %p243 = scmp.ne.s32.totalorder %s232, %s233
      %p244 = scmp.eq.s32.totalorder %s35, 0
      %p245 = por %p243, %p244
      %p246 = scmp.ne.s32.totalorder %s232, %s233
      %p247 = scmp.eq.s32.totalorder %s36, 1
      %p248 = por %p246, %p247
      %p250 = scmp.ne.s32.totalorder %s233, %s249
      %p251 = scmp.eq.s32.totalorder %s36, 0
      %p252 = por %p250, %p251
      %s253 = ssub.s32 %s37, %s49
      %s254 = ssub.s32 %s38, %s45
      %s255 = sor.u32 %s253, %s254
      %p256 = scmp.eq.s32.totalorder %s255, 0
      %s258 = sadd.s32 %s257, 1
      %s259 = scalar_select %p256, %s257, %s258
      %p262 = pneg %p256
      %p263 = scmp.eq.s32.totalorder %s30, 1
      %p264 = por %p262, %p263
      %p265 = scmp.ne.s32.totalorder %s257, %s260
      %p266 = scmp.eq.s32.totalorder %s30, 0
      %p267 = por %p265, %p266
      %p268 = scmp.ne.s32.totalorder %s257, %s260
      %p269 = scmp.eq.s32.totalorder %s35, 1
      %p270 = por %p268, %p269
      %p271 = scmp.ne.s32.totalorder %s260, %s261
      %p272 = scmp.eq.s32.totalorder %s35, 0
      %p273 = por %p271, %p272
      %p274 = scmp.ne.s32.totalorder %s260, %s261
      %p275 = scmp.eq.s32.totalorder %s36, 1
      %p276 = por %p274, %p275
      %p278 = scmp.ne.s32.totalorder %s261, %s277
      %p279 = scmp.eq.s32.totalorder %s36, 0
      %p280 = por %p278, %p279
      %s281 = ssub.s32 %s37, %s49
      %s282 = ssub.s32 %s38, %s45
      %s283 = sor.u32 %s281, %s282
      %p284 = scmp.eq.s32.totalorder %s283, 0
      %s286 = sadd.s32 %s285, 1
      %s287 = scalar_select %p284, %s285, %s286
      %p290 = pneg %p284
      %p291 = scmp.eq.s32.totalorder %s30, 1
      %p292 = por %p290, %p291
      %p293 = scmp.ne.s32.totalorder %s285, %s288
      %p294 = scmp.eq.s32.totalorder %s30, 0
      %p295 = por %p293, %p294
      %p296 = scmp.ne.s32.totalorder %s285, %s288
      %p297 = scmp.eq.s32.totalorder %s35, 1
      %p298 = por %p296, %p297
      %p299 = scmp.ne.s32.totalorder %s288, %s289
      %p300 = scmp.eq.s32.totalorder %s35, 0
      %p301 = por %p299, %p300
      %p302 = scmp.ne.s32.totalorder %s288, %s289
      %p303 = scmp.eq.s32.totalorder %s36, 1
      %p304 = por %p302, %p303
      %p306 = scmp.ne.s32.totalorder %s289, %s305
      %p307 = scmp.eq.s32.totalorder %s36, 0
      %p308 = por %p306, %p307
      %p309 = scmp.le.s32.totalorder 1, %s30
      %p310 = scmp.lt.s32.totalorder %s30, 3
      %p311 = pnand %p309, %p310
      %p312 = pneg %p311
      // Predicated region
      $region9: #{multi_head_attention.4} parent=5 // pred_check
        _
      $region10: #{multi_head_attention.4} parent=5 // pred_check_branch
        %314 = sbr.rel (%p311) target = $region12
      $region11: #{multi_head_attention.4} parent=5 // pred_region
        %s315 = ssub.s32 %s30, 1
        // Predicated region
        $region13: #{multi_head_attention.4} parent=11 // pred_check
          %p316 = pneg %p91
        $region14: #{multi_head_attention.4} parent=11 // pred_check_branch
          %318 = sbr.rel (%p316) target = $region16
        $region15: #{multi_head_attention.4} parent=11 // pred_region
          %s320 = ssub.s32 16, 16
          %321 = vsyncadd [#allocation6], %s320
          %s323 = sshll.u32 [#allocation5], 4
          %s324 = int_to_ptr.vmem [resolvable:$true] %s323
          %326 = dma.hbm_to_vmem [thread:$0]  %s1, 16, %s324, [#allocation6]
        $region16: #{multi_head_attention.4} parent=11 // pred_fallthru
          _
        // Predicated region
        $region17: #{multi_head_attention.4} parent=11 // pred_check
          %p327 = pneg %p112
        $region18: #{multi_head_attention.4} parent=11 // pred_check_branch
          %329 = sbr.rel (%p327) target = $region20
        $region19: #{multi_head_attention.4} parent=11 // pred_region
          %s331 = ssub.s32 16, 16
          %332 = vsyncadd [#allocation6], %s331
          %s334 = sshll.u32 [#allocation7], 4
          %s335 = int_to_ptr.vmem [resolvable:$true] %s334
          %337 = dma.hbm_to_vmem [thread:$0]  %s2, 16, %s335, [#allocation6]
        $region20: #{multi_head_attention.4} parent=11 // pred_fallthru
          _
        // Predicated region
        $region21: #{multi_head_attention.4} parent=11 // pred_check
          %p338 = pneg %p133
        $region22: #{multi_head_attention.4} parent=11 // pred_check_branch
          %340 = sbr.rel (%p338) target = $region24
        $region23: #{multi_head_attention.4} parent=11 // pred_region
          %s342 = ssub.s32 16, 16
          %343 = vsyncadd [#allocation9], %s342
          %s345 = sshll.u32 [#allocation8], 4
          %s346 = int_to_ptr.vmem [resolvable:$true] %s345
          %348 = dma.hbm_to_vmem [thread:$0]  %s3, 16, %s346, [#allocation9]
        $region24: #{multi_head_attention.4} parent=11 // pred_fallthru
          _
        // Predicated region
        $region25: #{multi_head_attention.4} parent=11 // pred_check
          %p349 = pneg %p154
        $region26: #{multi_head_attention.4} parent=11 // pred_check_branch
          %351 = sbr.rel (%p349) target = $region28
        $region27: #{multi_head_attention.4} parent=11 // pred_region
          %s353 = ssub.s32 16, 16
          %354 = vsyncadd [#allocation9], %s353
          %s356 = sshll.u32 [#allocation10], 4
          %s357 = int_to_ptr.vmem [resolvable:$true] %s356
          %359 = dma.hbm_to_vmem [thread:$0]  %s4, 16, %s357, [#allocation9]
        $region28: #{multi_head_attention.4} parent=11 // pred_fallthru
          _
        // Predicated region
        $region29: #{multi_head_attention.4} parent=11 // pred_check
          %p360 = pneg %p175
        $region30: #{multi_head_attention.4} parent=11 // pred_check_branch
          %362 = sbr.rel (%p360) target = $region32
        $region31: #{multi_head_attention.4} parent=11 // pred_region
          %s364 = ssub.s32 256, 256
          %365 = vsyncadd [#allocation12], %s364
          %s366 = sshll.u32 [#allocation11], 4
          %s367 = int_to_ptr.vmem [resolvable:$true] %s366
          %372 = dma.hbm_to_vmem [thread:$0]  %s5, 256, %s367, [#allocation12], 64, 64, 4
        $region32: #{multi_head_attention.4} parent=11 // pred_fallthru
          _
        // Predicated region
        $region33: #{multi_head_attention.4} parent=11 // pred_check
          %p373 = pneg %p196
        $region34: #{multi_head_attention.4} parent=11 // pred_check_branch
          %375 = sbr.rel (%p373) target = $region36
        $region35: #{multi_head_attention.4} parent=11 // pred_region
          %s377 = ssub.s32 256, 256
          %378 = vsyncadd [#allocation12], %s377
          %s379 = sshll.u32 [#allocation13], 4
          %s380 = int_to_ptr.vmem [resolvable:$true] %s379
          %385 = dma.hbm_to_vmem [thread:$0]  %s6, 256, %s380, [#allocation12], 64, 64, 4
        $region36: #{multi_head_attention.4} parent=11 // pred_fallthru
          _
        // Predicated region
        $region37: #{multi_head_attention.4} parent=11 // pred_check
          %p386 = pneg %p217
        $region38: #{multi_head_attention.4} parent=11 // pred_check_branch
          %388 = sbr.rel (%p386) target = $region40
        $region39: #{multi_head_attention.4} parent=11 // pred_region
          %s390 = ssub.s32 256, 256
          %391 = vsyncadd [#allocation15], %s390
          %s392 = sshll.u32 [#allocation14], 4
          %s393 = int_to_ptr.vmem [resolvable:$true] %s392
          %398 = dma.hbm_to_vmem [thread:$0]  %s7, 256, %s393, [#allocation15], 64, 64, 4
        $region40: #{multi_head_attention.4} parent=11 // pred_fallthru
          _
      $region12: #{multi_head_attention.4} parent=5 // pred_fallthru
        _
      %p399 = scmp.lt.s32.totalorder %s30, 2
      // Predicated region
      $region41: #{multi_head_attention.4} parent=5 // pred_check
        %p400 = pneg %p399
      $region42: #{multi_head_attention.4} parent=5 // pred_check_branch
        %402 = sbr.rel (%p400) target = $region44
      $region43: #{multi_head_attention.4} parent=5 // pred_region
        // Predicated region
        $region45: #{multi_head_attention.4} parent=43 // pred_check
          %p403 = pneg %p64
        $region46: #{multi_head_attention.4} parent=43 // pred_check_branch
          %405 = sbr.rel (%p403) target = $region48
        $region47: #{multi_head_attention.4} parent=43 // pred_region
          %s406 = sand.u32 %s54, 1
          %s407 = scalar_lea.sflag [#allocation3], %s406
          %s408 = sand.u32 %s54, 1
          %s409 = smul.addr %s408, 8
          %s410 = scalar_lea.vmem [#allocation2], %s409
          %s412 = ssub.s32 128, 128
          %413 = vsyncadd %s407, %s412
          %s414 = sadd.s32 %s38, %s37
          %s415 = smul.addr %s414, 128
          %s416 = scalar_lea.hbm %s0, %s415
          %s418 = sshll.u32 %s410, 4
          %s419 = int_to_ptr.vmem [resolvable:$true] %s418
          %421 = dma.hbm_to_vmem [thread:$0]  %s416, 128, %s419, %s407
        $region48: #{multi_head_attention.4} parent=43 // pred_fallthru
          _
      $region44: #{multi_head_attention.4} parent=5 // pred_fallthru
        _
      %p422 = scmp.le.s32.totalorder 1, %s30
      %p423 = scmp.lt.s32.totalorder %s30, 3
      %p424 = pnand %p422, %p423
      %p425 = pneg %p424
      // Predicated region
      $region49: #{multi_head_attention.4} parent=5 // pred_check
        _
      $region50: #{multi_head_attention.4} parent=5 // pred_check_branch
        %427 = sbr.rel (%p424) target = $region52
      $region51: #{multi_head_attention.4} parent=5 // pred_region
        %s428 = ssub.s32 %s30, 1
        %s429 = sand.u32 %s57, 1
        %s430 = scalar_lea.sflag [#allocation3], %s429
        %s431 = sand.u32 %s57, 1
        %s432 = smul.addr %s431, 8
        %s433 = scalar_lea.vmem [#allocation2], %s432
        // Predicated region
        $region53: #{multi_head_attention.4} parent=51 // pred_check
          %p434 = pneg %p70
        $region54: #{multi_head_attention.4} parent=51 // pred_check_branch
          %436 = sbr.rel (%p434) target = $region56
        $region55: #{multi_head_attention.4} parent=51 // pred_region
          %437 = dma.done %s430, 128
        $region56: #{multi_head_attention.4} parent=51 // pred_fallthru
          _
        // Predicated region
        $region57: #{multi_head_attention.4} parent=51 // pred_check
          %p438 = pneg %p91
        $region58: #{multi_head_attention.4} parent=51 // pred_check_branch
          %440 = sbr.rel (%p438) target = $region60
        $region59: #{multi_head_attention.4} parent=51 // pred_region
          %441 = dma.done [#allocation6], 16
        $region60: #{multi_head_attention.4} parent=51 // pred_fallthru
          _
        // Predicated region
        $region61: #{multi_head_attention.4} parent=51 // pred_check
          %p442 = pneg %p112
        $region62: #{multi_head_attention.4} parent=51 // pred_check_branch
          %444 = sbr.rel (%p442) target = $region64
        $region63: #{multi_head_attention.4} parent=51 // pred_region
          %445 = dma.done [#allocation6], 16
        $region64: #{multi_head_attention.4} parent=51 // pred_fallthru
          _
        // Predicated region
        $region65: #{multi_head_attention.4} parent=51 // pred_check
          %p446 = pneg %p133
        $region66: #{multi_head_attention.4} parent=51 // pred_check_branch
          %448 = sbr.rel (%p446) target = $region68
        $region67: #{multi_head_attention.4} parent=51 // pred_region
          %449 = dma.done [#allocation9], 16
        $region68: #{multi_head_attention.4} parent=51 // pred_fallthru
          _
        // Predicated region
        $region69: #{multi_head_attention.4} parent=51 // pred_check
          %p450 = pneg %p154
        $region70: #{multi_head_attention.4} parent=51 // pred_check_branch
          %452 = sbr.rel (%p450) target = $region72
        $region71: #{multi_head_attention.4} parent=51 // pred_region
          %453 = dma.done [#allocation9], 16
        $region72: #{multi_head_attention.4} parent=51 // pred_fallthru
          _
        // Predicated region
        $region73: #{multi_head_attention.4} parent=51 // pred_check
          %p454 = pneg %p175
        $region74: #{multi_head_attention.4} parent=51 // pred_check_branch
          %456 = sbr.rel (%p454) target = $region76
        $region75: #{multi_head_attention.4} parent=51 // pred_region
          %457 = dma.done [#allocation12], 256
        $region76: #{multi_head_attention.4} parent=51 // pred_fallthru
          _
        // Predicated region
        $region77: #{multi_head_attention.4} parent=51 // pred_check
          %p458 = pneg %p196
        $region78: #{multi_head_attention.4} parent=51 // pred_check_branch
          %460 = sbr.rel (%p458) target = $region80
        $region79: #{multi_head_attention.4} parent=51 // pred_region
          %461 = dma.done [#allocation12], 256
        $region80: #{multi_head_attention.4} parent=51 // pred_fallthru
          _
        // Predicated region
        $region81: #{multi_head_attention.4} parent=51 // pred_check
          %p462 = pneg %p217
        $region82: #{multi_head_attention.4} parent=51 // pred_check_branch
          %464 = sbr.rel (%p462) target = $region84
        $region83: #{multi_head_attention.4} parent=51 // pred_region
          %465 = dma.done [#allocation15], 256
        $region84: #{multi_head_attention.4} parent=51 // pred_fallthru
          _
        %s466 = sand.u32 %s57, 1
        %s467 = scalar_lea.sflag [#allocation3], %s466
        %s468 = sand.u32 %s57, 1
        %s469 = smul.addr %s468, 8
        %s470 = scalar_lea.vmem [#allocation2], %s469
        %p471 = pneg %p70
        %p472 = pneg %p67
        %p473 = pneg %p91
        %p474 = pneg %p88
        %p475 = pneg %p112
        %p476 = pneg %p109
        %p477 = pneg %p133
        %p478 = pneg %p130
        %p479 = pneg %p154
        %p480 = pneg %p151
        %p481 = pneg %p175
        %p482 = pneg %p172
        %p483 = pneg %p196
        %p484 = pneg %p193
        %p485 = pneg %p217
        %p486 = pneg %p214
        %p487 = pneg %p245
        %p488 = pneg %p242
        %s489 = sand.u32 %s232, 1
        %s490 = scalar_lea.sflag [#allocation4], %s489
        %s491 = sand.u32 %s232, 1
        %s492 = smul.addr %s491, 4
        %s493 = scalar_lea.vmem [#allocation16], %s492
        %p494 = pneg %p273
        %p495 = pneg %p270
        %s496 = sand.u32 %s35, 1
        %s497 = scalar_lea.sflag [#allocation18], %s496
        %s498 = sand.u32 %s260, 1
        %s499 = smul.addr %s498, 4
        %s500 = scalar_lea.vmem [#allocation17], %s499
        %p501 = pneg %p301
        %p502 = pneg %p298
        %s503 = sand.u32 %s35, 1
        %s504 = scalar_lea.sflag [#allocation18], %s503
        %s505 = sand.u32 %s288, 1
        %s506 = smul.addr %s505, 4
        %s507 = scalar_lea.vmem [#allocation19], %s506
        %v509 = vld [vmem:[%s433] sm:$0xff]
        %v510 = vld [vmem:[#allocation5] sm:$0x1]
        %v511 = vld [vmem:[#allocation7] sm:$0x1]
        %vm512 = vcmask 261120
        %v513 = vsel %vm512, %v509, 0.0
        %514 = vadd.xlane.f32.xlu0 %v513
        %v515 = vpop.xlane.xlu0 %514
        %v516 = vrcp.pop 32.0
        %v517 = vmul.f32 %v515, %v516
        %v518 = vsub.f32 %v509, %v517
        %v519 = vmul.f32 %v518, %v518
        %v520 = vsel %vm512, %v519, 0.0
        %521 = vadd.xlane.f32.xlu0 %v520
        %v522 = vpop.xlane.xlu0 %521
        %v523 = vmul.f32 %v522, %v516
        %v524 = vadd.f32 %v523, 1e-05
        %v525 = vrsqrt.pop %v524
        %v526 = vmul.f32 %v518, %v525
        %v528 = vlaneseq
        %v529 = vshrl.u32 %v528, 7
        %v530 = vsub.s32 0, %v529
        %v531 = vrot.slane %v510, %v530
        %v533 = vmul.f32 %v526, %v531
        %v535 = vlaneseq
        %v536 = vshrl.u32 %v535, 7
        %v537 = vsub.s32 0, %v536
        %v538 = vrot.slane %v511, %v537
        %v540 = vadd.f32 %v533, %v538
        %v541 = vpack.c.bf16 %v540, %v540
        %v542 = vld [vmem:[#allocation11] sm:$0xf]
        %v543 = vld [vmem:[#allocation11 + $0x4] sm:$0xf]
        %v544 = vld [vmem:[#allocation11 + $0x8] sm:$0xf]
        %v545 = vld [vmem:[#allocation11 + $0xc] sm:$0xf]
        %v550 = vunpack.c.l.b16 %v542
        %v551 = vunpack.c.l.b16 %v543
        %v552 = vunpack.c.l.b16 %v544
        %v553 = vunpack.c.l.b16 %v545
        %v554 = vpack.c.b16 %v551, %v550
        %v555 = vpack.c.b16 %v553, %v552
        %v559 = vsel %vm512, %v541, 0
        %561 = vmatprep.subr.bf16.mxu0 0
        %562 = vmatpush1.bf16.msra.mxu0 %v554
        %563 = vmatprep.subr.bf16.mxu0 0
        %564 = vmatpush1.bf16.msra.mxu0 %v555
        %565 = vmatprep.subr.bf16.mxu0 0
        %566 = vmatpush1.bf16.msra.mxu0 0
        %567 = vmatprep.subr.bf16.mxu0 0
        %568 = vmatpush1.bf16.msra.mxu0 0
        %569 = vmatprep.subr.bf16.mxu0 0
        %570 = vmatpush1.bf16.msra.mxu0 0
        %571 = vmatprep.subr.bf16.mxu0 0
        %572 = vmatpush1.bf16.msra.mxu0 0
        %573 = vmatprep.subr.bf16.mxu0 0
        %574 = vmatpush1.bf16.msra.mxu0 0
        %575 = vmatprep.subr.bf16.mxu0 0
        %576 = vmatpush1.bf16.msra.mxu0 0
        %577 = vmatprep.subr.bf16.mxu0 0
        %578 = vmatpush1.bf16.msra.mxu0 0
        %579 = vmatprep.subr.bf16.mxu0 0
        %580 = vmatpush1.bf16.msra.mxu0 0
        %581 = vmatprep.subr.bf16.mxu0 0
        %582 = vmatpush1.bf16.msra.mxu0 0
        %583 = vmatprep.subr.bf16.mxu0 0
        %584 = vmatpush1.bf16.msra.mxu0 0
        %585 = vmatprep.subr.bf16.mxu0 0
        %586 = vmatpush1.bf16.msra.mxu0 0
        %587 = vmatprep.subr.bf16.mxu0 0
        %588 = vmatpush1.bf16.msra.mxu0 0
        %589 = vmatprep.subr.bf16.mxu0 0
        %590 = vmatpush1.bf16.msra.mxu0 0
        %591 = vmatprep.subr.bf16.mxu0 0
        %592 = vmatpush1.bf16.msra.mxu0 0
        %593 = vmatprep.mubr.bf16.mxu0 0
        %594 = vmatmul.mubr.bf16.gmra.mrb[0].mxu0 %v559
        %v595 = vpop.f32.mrb[0].mxu0
        %v596 = vadd.f32 0.0, %v595
        %v597 = vpop.f32.mrb[0].mxu0
        %v598 = vpop.f32.mrb[0].mxu0
        %v599 = vpop.f32.mrb[0].mxu0
        %600 = vdwg.mxu0
        %v601 = vld [vmem:[#allocation13] sm:$0xf]
        %v602 = vld [vmem:[#allocation13 + $0x4] sm:$0xf]
        %v603 = vld [vmem:[#allocation13 + $0x8] sm:$0xf]
        %v604 = vld [vmem:[#allocation13 + $0xc] sm:$0xf]
        %v609 = vunpack.c.l.b16 %v601
        %v610 = vunpack.c.l.b16 %v602
        %v611 = vunpack.c.l.b16 %v603
        %v612 = vunpack.c.l.b16 %v604
        %v613 = vpack.c.b16 %v610, %v609
        %v614 = vpack.c.b16 %v612, %v611
        %617 = vmatprep.subr.bf16.mxu0 0
        %618 = vmatpush1.bf16.msra.mxu0 %v613
        %619 = vmatprep.subr.bf16.mxu0 0
        %620 = vmatpush1.bf16.msra.mxu0 %v614
        %621 = vmatprep.subr.bf16.mxu0 0
        %622 = vmatpush1.bf16.msra.mxu0 0
        %623 = vmatprep.subr.bf16.mxu0 0
        %624 = vmatpush1.bf16.msra.mxu0 0
        %625 = vmatprep.subr.bf16.mxu0 0
        %626 = vmatpush1.bf16.msra.mxu0 0
        %627 = vmatprep.subr.bf16.mxu0 0
        %628 = vmatpush1.bf16.msra.mxu0 0
        %629 = vmatprep.subr.bf16.mxu0 0
        %630 = vmatpush1.bf16.msra.mxu0 0
        %631 = vmatprep.subr.bf16.mxu0 0
        %632 = vmatpush1.bf16.msra.mxu0 0
        %633 = vmatprep.subr.bf16.mxu0 0
        %634 = vmatpush1.bf16.msra.mxu0 0
        %635 = vmatprep.subr.bf16.mxu0 0
        %636 = vmatpush1.bf16.msra.mxu0 0
        %637 = vmatprep.subr.bf16.mxu0 0
        %638 = vmatpush1.bf16.msra.mxu0 0
        %639 = vmatprep.subr.bf16.mxu0 0
        %640 = vmatpush1.bf16.msra.mxu0 0
        %641 = vmatprep.subr.bf16.mxu0 0
        %642 = vmatpush1.bf16.msra.mxu0 0
        %643 = vmatprep.subr.bf16.mxu0 0
        %644 = vmatpush1.bf16.msra.mxu0 0
        %645 = vmatprep.subr.bf16.mxu0 0
        %646 = vmatpush1.bf16.msra.mxu0 0
        %647 = vmatprep.subr.bf16.mxu0 0
        %648 = vmatpush1.bf16.msra.mxu0 0
        %649 = vmatprep.mubr.bf16.mxu0 0
        %650 = vmatmul.mubr.bf16.gmra.mrb[0].mxu0 %v559
        %v651 = vpop.f32.mrb[0].mxu0
        %v652 = vadd.f32 0.0, %v651
        %v653 = vpop.f32.mrb[0].mxu0
        %v654 = vpop.f32.mrb[0].mxu0
        %v655 = vpop.f32.mrb[0].mxu0
        %656 = vdwg.mxu0
        %v657 = vld [vmem:[#allocation14] sm:$0xf]
        %v658 = vld [vmem:[#allocation14 + $0x4] sm:$0xf]
        %v659 = vld [vmem:[#allocation14 + $0x8] sm:$0xf]
        %v660 = vld [vmem:[#allocation14 + $0xc] sm:$0xf]
        %v665 = vunpack.c.l.b16 %v657
        %v666 = vunpack.c.l.b16 %v658
        %v667 = vunpack.c.l.b16 %v659
        %v668 = vunpack.c.l.b16 %v660
        %v669 = vpack.c.b16 %v666, %v665
        %v670 = vpack.c.b16 %v668, %v667
        %673 = vmatprep.subr.bf16.mxu0 0
        %674 = vmatpush1.bf16.msra.mxu0 %v669
        %675 = vmatprep.subr.bf16.mxu0 0
        %676 = vmatpush1.bf16.msra.mxu0 %v670
        %677 = vmatprep.subr.bf16.mxu0 0
        %678 = vmatpush1.bf16.msra.mxu0 0
        %679 = vmatprep.subr.bf16.mxu0 0
        %680 = vmatpush1.bf16.msra.mxu0 0
        %681 = vmatprep.subr.bf16.mxu0 0
        %682 = vmatpush1.bf16.msra.mxu0 0
        %683 = vmatprep.subr.bf16.mxu0 0
        %684 = vmatpush1.bf16.msra.mxu0 0
        %685 = vmatprep.subr.bf16.mxu0 0
        %686 = vmatpush1.bf16.msra.mxu0 0
        %687 = vmatprep.subr.bf16.mxu0 0
        %688 = vmatpush1.bf16.msra.mxu0 0
        %689 = vmatprep.subr.bf16.mxu0 0
        %690 = vmatpush1.bf16.msra.mxu0 0
        %691 = vmatprep.subr.bf16.mxu0 0
        %692 = vmatpush1.bf16.msra.mxu0 0
        %693 = vmatprep.subr.bf16.mxu0 0
        %694 = vmatpush1.bf16.msra.mxu0 0
        %695 = vmatprep.subr.bf16.mxu0 0
        %696 = vmatpush1.bf16.msra.mxu0 0
        %697 = vmatprep.subr.bf16.mxu0 0
        %698 = vmatpush1.bf16.msra.mxu0 0
        %699 = vmatprep.subr.bf16.mxu0 0
        %700 = vmatpush1.bf16.msra.mxu0 0
        %701 = vmatprep.subr.bf16.mxu0 0
        %702 = vmatpush1.bf16.msra.mxu0 0
        %703 = vmatprep.subr.bf16.mxu0 0
        %704 = vmatpush1.bf16.msra.mxu0 0
        %705 = vmatprep.mubr.bf16.mxu0 0
        %706 = vmatmul.mubr.bf16.gmra.mrb[0].mxu0 %v559
        %v707 = vpop.f32.mrb[0].mxu0
        %v708 = vadd.f32 0.0, %v707
        %v709 = vpop.f32.mrb[0].mxu0
        %v710 = vpop.f32.mrb[0].mxu0
        %v711 = vpop.f32.mrb[0].mxu0
        %712 = vdwg.mxu0
        %v713 = vld [vmem:[#allocation8] sm:$0x1]
        %v714 = vsel %vm512, %v596, 0.0
        %715 = vadd.xlane.f32.xlu0 %v714
        %v716 = vpop.xlane.xlu0 %715
        %v717 = vmul.f32 %v716, %v516
        %v718 = vsub.f32 %v596, %v717
        %v719 = vmul.f32 %v718, %v718
        %v720 = vsel %vm512, %v719, 0.0
        %721 = vadd.xlane.f32.xlu0 %v720
        %v722 = vpop.xlane.xlu0 %721
        %v723 = vmul.f32 %v722, %v516
        %v724 = vadd.f32 %v723, 1e-05
        %v725 = vrsqrt.pop %v724
        %v726 = vmul.f32 %v718, %v725
        %v728 = vlaneseq
        %v729 = vshrl.u32 %v728, 7
        %v730 = vsub.s32 0, %v729
        %v731 = vrot.slane %v713, %v730
        %v733 = vmul.f32 %v726, %v731
        %v734 = vpack.c.bf16 %v733, %v733
        %vm735 = vcmask 257024
        %736 = vst.msk [vmem:[%s493] sm:$0xf] %vm735, %v734
        %v737 = vld [vmem:[#allocation10] sm:$0x1]
        %v738 = vsel %vm512, %v652, 0.0
        %739 = vadd.xlane.f32.xlu0 %v738
        %v740 = vpop.xlane.xlu0 %739
        %v741 = vmul.f32 %v740, %v516
        %v742 = vsub.f32 %v652, %v741
        %v743 = vmul.f32 %v742, %v742
        %v744 = vsel %vm512, %v743, 0.0
        %745 = vadd.xlane.f32.xlu0 %v744
        %v746 = vpop.xlane.xlu0 %745
        %v747 = vmul.f32 %v746, %v516
        %v748 = vadd.f32 %v747, 1e-05
        %v749 = vrsqrt.pop %v748
        %v750 = vmul.f32 %v742, %v749
        %v752 = vlaneseq
        %v753 = vshrl.u32 %v752, 7
        %v754 = vsub.s32 0, %v753
        %v755 = vrot.slane %v737, %v754
        %v757 = vmul.f32 %v750, %v755
        %v758 = vpack.c.bf16 %v757, %v757
        %759 = vst.msk [vmem:[%s500] sm:$0xf] %vm735, %v758
        %v760 = vpack.c.bf16 %v708, %v708
        %761 = vst.msk [vmem:[%s507] sm:$0xf] %vm735, %v760
        %s762 = sand.u32 %s232, 1
        %s763 = scalar_lea.sflag [#allocation4], %s762
        %s764 = sand.u32 %s232, 1
        %s765 = smul.addr %s764, 4
        %s766 = scalar_lea.vmem [#allocation16], %s765
        %s767 = sand.u32 %s35, 1
        %s768 = scalar_lea.sflag [#allocation18], %s767
        %s769 = sand.u32 %s260, 1
        %s770 = smul.addr %s769, 4
        %s771 = scalar_lea.vmem [#allocation17], %s770
        %s772 = sand.u32 %s35, 1
        %s773 = scalar_lea.sflag [#allocation18], %s772
        %s774 = sand.u32 %s288, 1
        %s775 = smul.addr %s774, 4
        %s776 = scalar_lea.vmem [#allocation19], %s775
        // Predicated region
        $region85: #{multi_head_attention.4} parent=51 // pred_check
          %p777 = pneg %p242
        $region86: #{multi_head_attention.4} parent=51 // pred_check_branch
          %779 = sbr.rel (%p777) target = $region88
        $region87: #{multi_head_attention.4} parent=51 // pred_region
          %s781 = ssub.s32 64, 64
          %782 = vsyncadd %s763, %s781
          %s783 = sadd.s32 %s40, %s39
          %s784 = smul.addr %s783, 64
          %s785 = scalar_lea.hbm %s8, %s784
          %s787 = sshll.u32 %s766, 4
          %s788 = int_to_ptr.vmem [resolvable:$true] %s787
          %790 = dma.vmem_to_hbm [thread:$0]  %s788, 64, %s785, %s763
        $region88: #{multi_head_attention.4} parent=51 // pred_fallthru
          _
        // Predicated region
        $region89: #{multi_head_attention.4} parent=51 // pred_check
          %p791 = pneg %p270
        $region90: #{multi_head_attention.4} parent=51 // pred_check_branch
          %793 = sbr.rel (%p791) target = $region92
        $region91: #{multi_head_attention.4} parent=51 // pred_region
          %s795 = ssub.s32 64, 64
          %796 = vsyncadd %s768, %s795
          %s797 = sadd.s32 %s40, %s39
          %s798 = smul.addr %s797, 64
          %s799 = scalar_lea.hbm %s9, %s798
          %s801 = sshll.u32 %s771, 4
          %s802 = int_to_ptr.vmem [resolvable:$true] %s801
          %804 = dma.vmem_to_hbm [thread:$0]  %s802, 64, %s799, %s768
        $region92: #{multi_head_attention.4} parent=51 // pred_fallthru
          _
        // Predicated region
        $region93: #{multi_head_attention.4} parent=51 // pred_check
          %p805 = pneg %p298
        $region94: #{multi_head_attention.4} parent=51 // pred_check_branch
          %807 = sbr.rel (%p805) target = $region96
        $region95: #{multi_head_attention.4} parent=51 // pred_region
          %s809 = ssub.s32 64, 64
          %810 = vsyncadd %s773, %s809
          %s811 = sadd.s32 %s40, %s39
          %s812 = smul.addr %s811, 64
          %s813 = scalar_lea.hbm %s10, %s812
          %s815 = sshll.u32 %s776, 4
          %s816 = int_to_ptr.vmem [resolvable:$true] %s815
          %818 = dma.vmem_to_hbm [thread:$0]  %s816, 64, %s813, %s773
        $region96: #{multi_head_attention.4} parent=51 // pred_fallthru
          _
      $region52: #{multi_head_attention.4} parent=5 // pred_fallthru
        _
      %p819 = scmp.le.s32.totalorder 2, %s30
      // Predicated region
      $region97: #{multi_head_attention.4} parent=5 // pred_check
        %p820 = pneg %p819
      $region98: #{multi_head_attention.4} parent=5 // pred_check_branch
        %822 = sbr.rel (%p820) target = $region100
      $region99: #{multi_head_attention.4} parent=5 // pred_region
        %s823 = ssub.s32 %s30, 2
        // Predicated region
        $region101: #{multi_head_attention.4} parent=99 // pred_check
          %p824 = pneg %p248
        $region102: #{multi_head_attention.4} parent=99 // pred_check_branch
          %826 = sbr.rel (%p824) target = $region104
        $region103: #{multi_head_attention.4} parent=99 // pred_region
          %s827 = sand.u32 %s233, 1
          %s828 = scalar_lea.sflag [#allocation4], %s827
          %s829 = sand.u32 %s233, 1
          %s830 = smul.addr %s829, 4
          %s831 = scalar_lea.vmem [#allocation16], %s830
          %832 = dma.done %s828, 64
        $region104: #{multi_head_attention.4} parent=99 // pred_fallthru
          _
        // Predicated region
        $region105: #{multi_head_attention.4} parent=99 // pred_check
          %p833 = pneg %p276
        $region106: #{multi_head_attention.4} parent=99 // pred_check_branch
          %835 = sbr.rel (%p833) target = $region108
        $region107: #{multi_head_attention.4} parent=99 // pred_region
          %s836 = sand.u32 %s36, 1
          %s837 = scalar_lea.sflag [#allocation18], %s836
          %s838 = sand.u32 %s261, 1
          %s839 = smul.addr %s838, 4
          %s840 = scalar_lea.vmem [#allocation17], %s839
          %841 = dma.done %s837, 64
        $region108: #{multi_head_attention.4} parent=99 // pred_fallthru
          _
        // Predicated region
        $region109: #{multi_head_attention.4} parent=99 // pred_check
          %p842 = pneg %p304
        $region110: #{multi_head_attention.4} parent=99 // pred_check_branch
          %844 = sbr.rel (%p842) target = $region112
        $region111: #{multi_head_attention.4} parent=99 // pred_region
          %s845 = sand.u32 %s36, 1
          %s846 = scalar_lea.sflag [#allocation18], %s845
          %s847 = sand.u32 %s289, 1
          %s848 = smul.addr %s847, 4
          %s849 = scalar_lea.vmem [#allocation19], %s848
          %850 = dma.done %s846, 64
        $region112: #{multi_head_attention.4} parent=99 // pred_fallthru
          _
      $region100: #{multi_head_attention.4} parent=5 // pred_fallthru
        _
    $region6: #{multi_head_attention.4} parent=1 // loop_footer
      %s34 = sadd.s32 1, %s30
    $region7: #{multi_head_attention.4} parent=1 // loop_footer_branch
      %29 = sbr.rel target = $region3
    $region8: #{multi_head_attention.4} parent=1 // loop_exit
      _
    %851 = vsyncpa [#allocation3], 1
    %s852 = scalar_lea.sflag [#allocation3], 1
    %853 = vsyncpa %s852, 1
    %854 = vsyncpa [#allocation6], 1
    %855 = vsyncpa [#allocation9], 1
    %856 = vsyncpa [#allocation12], 1
    %857 = vsyncpa [#allocation15], 1
    %858 = vsyncpa [#allocation4], 1
    %s859 = scalar_lea.sflag [#allocation4], 1
    %860 = vsyncpa %s859, 1
    %861 = vsyncpa [#allocation18], 1
    %s862 = scalar_lea.sflag [#allocation18], 1
    %863 = vsyncpa %s862, 1

// kernel: multi_head_attention.5
$region0: #{multi_head_attention.5}
  #allocation0 [shape = 'u32[]', space=smem, size = 0x4, offset = 0x4, fixed_abs, tag = 'smem constant byte address 0x4 - core index']
  #allocation1 [shape = 'u32[144,128]{1,0:T(1,128)}', space=vmem, size = 0x12000, scoped, tag = 'internal scratch']
  %s0 = inlined_call_operand.hbm [shape: bf16[2,4,8,8], index: 0, kind: input, shape index: {}]
  %s1 = inlined_call_operand.hbm [shape: bf16[2,4,8,8], index: 1, kind: input, shape index: {}]
  %s2 = inlined_call_operand.hbm [shape: f32[8,8], index: 2, kind: input, shape index: {}]
  %s3 = inlined_call_operand.hbm [shape: f32[8,8], index: 3, kind: input, shape index: {}]
  %s4 = inlined_call_operand.hbm [shape: f32[8,8], index: 4, kind: input, shape index: {}]
  %s5 = inlined_call_operand.hbm [shape: f32[8,8], index: 5, kind: input, shape index: {}]
  %s6 = inlined_call_operand.hbm [shape: bf16[2,4,8,8], index: 6, kind: output, shape index: {0}]
  %s7 = inlined_call_operand.hbm [shape: bf16[2,4,8,8], index: 7, kind: output, shape index: {1}]
  %8 = xla_tuple %s6, %s7
  %s9 = sld [smem:[#allocation0]]
  $region89: #{multi_head_attention.5} parent=0
    _
  %s11 = ssub.s32 1, %s9
  %s12 = scalar_select 0, %s11, %s9
  $region1: #{multi_head_attention.5} parent=0
    #allocation2 [shape = 'u8[4096]{0}', space=vmem, size = 0x1000, scoped, tag = 'input window, operand 0']
    #allocation3 [shape = 's32[2]{0}', space=sflag, size = 0x8, scoped, tag = 'scoped memory for multi_head_attention.5']
    #allocation4 [shape = 's32[2]{0}', space=sflag, size = 0x8, scoped, tag = 'scoped memory for multi_head_attention.5']
    #allocation5 [shape = 'u8[4096]{0}', space=vmem, size = 0x1000, scoped, tag = 'input window, operand 1']
    #allocation6 [shape = 's32[2]{0}', space=sflag, size = 0x8, scoped, tag = 'scoped memory for multi_head_attention.5']
    #allocation7 [shape = 'u8[4096]{0}', space=vmem, size = 0x1000, scoped, tag = 'input window, operand 2, single buffered']
    #allocation8 [shape = 'u8[4096]{0}', space=vmem, size = 0x1000, scoped, tag = 'input window, operand 3, single buffered']
    #allocation9 [shape = 's32[1]{0}', space=sflag, size = 0x4, scoped, tag = 'scoped memory for multi_head_attention.5']
    #allocation10 [shape = 'u8[4096]{0}', space=vmem, size = 0x1000, scoped, tag = 'input window, operand 4, single buffered']
    #allocation11 [shape = 'u8[4096]{0}', space=vmem, size = 0x1000, scoped, tag = 'input window, operand 5, single buffered']
    #allocation12 [shape = 's32[1]{0}', space=sflag, size = 0x4, scoped, tag = 'scoped memory for multi_head_attention.5']
    #allocation13 [shape = 'u8[4096]{0}', space=vmem, size = 0x1000, scoped, tag = 'output window, operand 0']
    #allocation14 [shape = 'u8[4096]{0}', space=vmem, size = 0x1000, scoped, tag = 'output window, operand 1']
    #allocation15 [shape = 's32[2]{0}', space=sflag, size = 0x8, scoped, tag = 'scoped memory for multi_head_attention.5']
    %13 = vsyncpa [#allocation3], 0
    %s14 = scalar_lea.sflag [#allocation3], 1
    %15 = vsyncpa %s14, 0
    %16 = vsyncpa [#allocation6], 0
    %s17 = scalar_lea.sflag [#allocation6], 1
    %18 = vsyncpa %s17, 0
    %19 = vsyncpa [#allocation9], 0
    %20 = vsyncpa [#allocation12], 0
    %21 = vsyncpa [#allocation4], 0
    %s22 = scalar_lea.sflag [#allocation4], 1
    %23 = vsyncpa %s22, 0
    %24 = vsyncpa [#allocation15], 0
    %s25 = scalar_lea.sflag [#allocation15], 1
    %26 = vsyncpa %s25, 0
    loop: start=0, step=1, limit=10
    $region2: #{multi_head_attention.5} parent=1 // loop_pre_header
      _
    $region3: #{multi_head_attention.5} parent=1 // loop_header
      %s28 = sphi 0, %s32
      %p29 = scmp.ge.s32.totalorder %s28, 10
      %s35 = sphi 0, %s54
      %s36 = sphi 0, %s50
      %s37 = sphi 0, %s46
      %s38 = sphi 0, %s35
      %s39 = sphi 0, %s36
      %s40 = sphi 0, %s37
      %s41 = sphi 0, %s38
      %s42 = sphi 0, %s39
      %s43 = sphi 0, %s40
      %s61 = sphi 0, %s63
      %s64 = sphi 0, %s61
      %s65 = sphi 0, %s64
      %s81 = sphi 0, %s65
      %s91 = sphi 0, %s93
      %s94 = sphi 0, %s91
      %s95 = sphi 0, %s94
      %s111 = sphi 0, %s95
      %s117 = sphi 0, %s119
      %s120 = sphi 0, %s117
      %s121 = sphi 0, %s120
      %s137 = sphi 0, %s121
      %s143 = sphi 0, %s145
      %s146 = sphi 0, %s143
      %s147 = sphi 0, %s146
      %s163 = sphi 0, %s147
      %s169 = sphi 0, %s171
      %s172 = sphi 0, %s169
      %s173 = sphi 0, %s172
      %s189 = sphi 0, %s173
      %s195 = sphi 0, %s197
      %s198 = sphi 0, %s195
      %s199 = sphi 0, %s198
      %s215 = sphi 0, %s199
      %s225 = sphi 0, %s227
      %s228 = sphi 0, %s225
      %s229 = sphi 0, %s228
      %s245 = sphi 0, %s229
      %s255 = sphi 0, %s257
      %s258 = sphi 0, %s255
      %s259 = sphi 0, %s258
      %s275 = sphi 0, %s259
    $region4: #{multi_head_attention.5} parent=1 // loop_header_branch
      %31 = sbr.rel (%p29) target = $region8
    $region5: #{multi_head_attention.5} parent=1 // loop_body
      %s33 = ssub.s32 %s28, 1
      %s34 = ssub.s32 %s28, 2
      %s44 = sadd.s32 1, %s37
      %p45 = scmp.ge.s32.totalorder %s44, 4
      %s46 = scalar_select %p45, 0, %s44
      %s47 = sadd.s32 1, %s36
      %s48 = scalar_select %p45, %s47, %s36
      %p49 = scmp.ge.s32.totalorder %s48, 2
      %s50 = scalar_select %p49, 0, %s48
      %s51 = sadd.s32 1, %s35
      %s52 = scalar_select %p49, %s51, %s35
      %p53 = scmp.ge.s32.totalorder %s52, 1
      %s54 = scalar_select %p53, 0, %s52
      %s55 = ssub.s32 %s36, %s50
      %s56 = ssub.s32 %s37, %s46
      %s57 = sor.u32 %s55, %s56
      %s58 = ssub.s32 %s35, %s54
      %s59 = sor.u32 %s57, %s58
      %p60 = scmp.eq.s32.totalorder %s59, 0
      %s62 = sadd.s32 %s61, 1
      %s63 = scalar_select %p60, %s61, %s62
      %p66 = pneg %p60
      %p67 = scmp.eq.s32.totalorder %s28, 7
      %p68 = por %p66, %p67
      %p69 = scmp.ne.s32.totalorder %s61, %s64
      %p70 = scmp.eq.s32.totalorder %s28, 0
      %p71 = por %p69, %p70
      %p72 = scmp.ne.s32.totalorder %s61, %s64
      %p73 = scmp.eq.s32.totalorder %s33, 7
      %p74 = por %p72, %p73
      %p75 = scmp.ne.s32.totalorder %s64, %s65
      %p76 = scmp.eq.s32.totalorder %s33, 0
      %p77 = por %p75, %p76
      %p78 = scmp.ne.s32.totalorder %s64, %s65
      %p79 = scmp.eq.s32.totalorder %s34, 7
      %p80 = por %p78, %p79
      %p82 = scmp.ne.s32.totalorder %s65, %s81
      %p83 = scmp.eq.s32.totalorder %s34, 0
      %p84 = por %p82, %p83
      %s85 = ssub.s32 %s36, %s50
      %s86 = ssub.s32 %s37, %s46
      %s87 = sor.u32 %s85, %s86
      %s88 = ssub.s32 %s35, %s54
      %s89 = sor.u32 %s87, %s88
      %p90 = scmp.eq.s32.totalorder %s89, 0
      %s92 = sadd.s32 %s91, 1
      %s93 = scalar_select %p90, %s91, %s92
      %p96 = pneg %p90
      %p97 = scmp.eq.s32.totalorder %s28, 7
      %p98 = por %p96, %p97
      %p99 = scmp.ne.s32.totalorder %s91, %s94
      %p100 = scmp.eq.s32.totalorder %s28, 0
      %p101 = por %p99, %p100
      %p102 = scmp.ne.s32.totalorder %s91, %s94
      %p103 = scmp.eq.s32.totalorder %s33, 7
      %p104 = por %p102, %p103
      %p105 = scmp.ne.s32.totalorder %s94, %s95
      %p106 = scmp.eq.s32.totalorder %s33, 0
      %p107 = por %p105, %p106
      %p108 = scmp.ne.s32.totalorder %s94, %s95
      %p109 = scmp.eq.s32.totalorder %s34, 7
      %p110 = por %p108, %p109
      %p112 = scmp.ne.s32.totalorder %s95, %s111
      %p113 = scmp.eq.s32.totalorder %s34, 0
      %p114 = por %p112, %p113
      %s115 = ssub.s32 %s35, %s54
      %p116 = scmp.eq.s32.totalorder %s115, 0
      %s118 = sadd.s32 %s117, 1
      %s119 = scalar_select %p116, %s117, %s118
      %p122 = pneg %p116
      %p123 = scmp.eq.s32.totalorder %s28, 7
      %p124 = por %p122, %p123
      %p125 = scmp.ne.s32.totalorder %s117, %s120
      %p126 = scmp.eq.s32.totalorder %s28, 0
      %p127 = por %p125, %p126
      %p128 = scmp.ne.s32.totalorder %s117, %s120
      %p129 = scmp.eq.s32.totalorder %s33, 7
      %p130 = por %p128, %p129
      %p131 = scmp.ne.s32.totalorder %s120, %s121
      %p132 = scmp.eq.s32.totalorder %s33, 0
      %p133 = por %p131, %p132
      %p134 = scmp.ne.s32.totalorder %s120, %s121
      %p135 = scmp.eq.s32.totalorder %s34, 7
      %p136 = por %p134, %p135
      %p138 = scmp.ne.s32.totalorder %s121, %s137
      %p139 = scmp.eq.s32.totalorder %s34, 0
      %p140 = por %p138, %p139
      %s141 = ssub.s32 %s35, %s54
      %p142 = scmp.eq.s32.totalorder %s141, 0
      %s144 = sadd.s32 %s143, 1
      %s145 = scalar_select %p142, %s143, %s144
      %p148 = pneg %p142
      %p149 = scmp.eq.s32.totalorder %s28, 7
      %p150 = por %p148, %p149
      %p151 = scmp.ne.s32.totalorder %s143, %s146
      %p152 = scmp.eq.s32.totalorder %s28, 0
      %p153 = por %p151, %p152
      %p154 = scmp.ne.s32.totalorder %s143, %s146
      %p155 = scmp.eq.s32.totalorder %s33, 7
      %p156 = por %p154, %p155
      %p157 = scmp.ne.s32.totalorder %s146, %s147
      %p158 = scmp.eq.s32.totalorder %s33, 0
      %p159 = por %p157, %p158
      %p160 = scmp.ne.s32.totalorder %s146, %s147
      %p161 = scmp.eq.s32.totalorder %s34, 7
      %p162 = por %p160, %p161
      %p164 = scmp.ne.s32.totalorder %s147, %s163
      %p165 = scmp.eq.s32.totalorder %s34, 0
      %p166 = por %p164, %p165
      %s167 = ssub.s32 %s35, %s54
      %p168 = scmp.eq.s32.totalorder %s167, 0
      %s170 = sadd.s32 %s169, 1
      %s171 = scalar_select %p168, %s169, %s170
      %p174 = pneg %p168
      %p175 = scmp.eq.s32.totalorder %s28, 7
      %p176 = por %p174, %p175
      %p177 = scmp.ne.s32.totalorder %s169, %s172
      %p178 = scmp.eq.s32.totalorder %s28, 0
      %p179 = por %p177, %p178
      %p180 = scmp.ne.s32.totalorder %s169, %s172
      %p181 = scmp.eq.s32.totalorder %s33, 7
      %p182 = por %p180, %p181
      %p183 = scmp.ne.s32.totalorder %s172, %s173
      %p184 = scmp.eq.s32.totalorder %s33, 0
      %p185 = por %p183, %p184
      %p186 = scmp.ne.s32.totalorder %s172, %s173
      %p187 = scmp.eq.s32.totalorder %s34, 7
      %p188 = por %p186, %p187
      %p190 = scmp.ne.s32.totalorder %s173, %s189
      %p191 = scmp.eq.s32.totalorder %s34, 0
      %p192 = por %p190, %p191
      %s193 = ssub.s32 %s35, %s54
      %p194 = scmp.eq.s32.totalorder %s193, 0
      %s196 = sadd.s32 %s195, 1
      %s197 = scalar_select %p194, %s195, %s196
      %p200 = pneg %p194
      %p201 = scmp.eq.s32.totalorder %s28, 7
      %p202 = por %p200, %p201
      %p203 = scmp.ne.s32.totalorder %s195, %s198
      %p204 = scmp.eq.s32.totalorder %s28, 0
      %p205 = por %p203, %p204
      %p206 = scmp.ne.s32.totalorder %s195, %s198
      %p207 = scmp.eq.s32.totalorder %s33, 7
      %p208 = por %p206, %p207
      %p209 = scmp.ne.s32.totalorder %s198, %s199
      %p210 = scmp.eq.s32.totalorder %s33, 0
      %p211 = por %p209, %p210
      %p212 = scmp.ne.s32.totalorder %s198, %s199
      %p213 = scmp.eq.s32.totalorder %s34, 7
      %p214 = por %p212, %p213
      %p216 = scmp.ne.s32.totalorder %s199, %s215
      %p217 = scmp.eq.s32.totalorder %s34, 0
      %p218 = por %p216, %p217
      %s219 = ssub.s32 %s36, %s50
      %s220 = ssub.s32 %s37, %s46
      %s221 = sor.u32 %s219, %s220
      %s222 = ssub.s32 %s35, %s54
      %s223 = sor.u32 %s221, %s222
      %p224 = scmp.eq.s32.totalorder %s223, 0
      %s226 = sadd.s32 %s225, 1
      %s227 = scalar_select %p224, %s225, %s226
      %p230 = pneg %p224
      %p231 = scmp.eq.s32.totalorder %s28, 7
      %p232 = por %p230, %p231
      %p233 = scmp.ne.s32.totalorder %s225, %s228
      %p234 = scmp.eq.s32.totalorder %s28, 0
      %p235 = por %p233, %p234
      %p236 = scmp.ne.s32.totalorder %s225, %s228
      %p237 = scmp.eq.s32.totalorder %s33, 7
      %p238 = por %p236, %p237
      %p239 = scmp.ne.s32.totalorder %s228, %s229
      %p240 = scmp.eq.s32.totalorder %s33, 0
      %p241 = por %p239, %p240
      %p242 = scmp.ne.s32.totalorder %s228, %s229
      %p243 = scmp.eq.s32.totalorder %s34, 7
      %p244 = por %p242, %p243
      %p246 = scmp.ne.s32.totalorder %s229, %s245
      %p247 = scmp.eq.s32.totalorder %s34, 0
      %p248 = por %p246, %p247
      %s249 = ssub.s32 %s36, %s50
      %s250 = ssub.s32 %s37, %s46
      %s251 = sor.u32 %s249, %s250
      %s252 = ssub.s32 %s35, %s54
      %s253 = sor.u32 %s251, %s252
      %p254 = scmp.eq.s32.totalorder %s253, 0
      %s256 = sadd.s32 %s255, 1
      %s257 = scalar_select %p254, %s255, %s256
      %p260 = pneg %p254
      %p261 = scmp.eq.s32.totalorder %s28, 7
      %p262 = por %p260, %p261
      %p263 = scmp.ne.s32.totalorder %s255, %s258
      %p264 = scmp.eq.s32.totalorder %s28, 0
      %p265 = por %p263, %p264
      %p266 = scmp.ne.s32.totalorder %s255, %s258
      %p267 = scmp.eq.s32.totalorder %s33, 7
      %p268 = por %p266, %p267
      %p269 = scmp.ne.s32.totalorder %s258, %s259
      %p270 = scmp.eq.s32.totalorder %s33, 0
      %p271 = por %p269, %p270
      %p272 = scmp.ne.s32.totalorder %s258, %s259
      %p273 = scmp.eq.s32.totalorder %s34, 7
      %p274 = por %p272, %p273
      %p276 = scmp.ne.s32.totalorder %s259, %s275
      %p277 = scmp.eq.s32.totalorder %s34, 0
      %p278 = por %p276, %p277
      %p279 = scmp.le.s32.totalorder 1, %s28
      %p280 = scmp.lt.s32.totalorder %s28, 9
      %p281 = pnand %p279, %p280
      %p282 = pneg %p281
      // Predicated region
      $region9: #{multi_head_attention.5} parent=5 // pred_check
        _
      $region10: #{multi_head_attention.5} parent=5 // pred_check_branch
        %284 = sbr.rel (%p281) target = $region12
      $region11: #{multi_head_attention.5} parent=5 // pred_region
        %s285 = ssub.s32 %s28, 1
        // Predicated region
        $region13: #{multi_head_attention.5} parent=11 // pred_check
          %p286 = pneg %p133
        $region14: #{multi_head_attention.5} parent=11 // pred_check_branch
          %288 = sbr.rel (%p286) target = $region16
        $region15: #{multi_head_attention.5} parent=11 // pred_region
          %s290 = ssub.s32 128, 128
          %291 = vsyncadd [#allocation6], %s290
          %s292 = smul.addr %s38, 128
          %s293 = scalar_lea.hbm %s2, %s292
          %s295 = sshll.u32 [#allocation7], 4
          %s296 = int_to_ptr.vmem [resolvable:$true] %s295
          %298 = dma.hbm_to_vmem [thread:$0]  %s293, 128, %s296, [#allocation6]
        $region16: #{multi_head_attention.5} parent=11 // pred_fallthru
          _
        // Predicated region
        $region17: #{multi_head_attention.5} parent=11 // pred_check
          %p299 = pneg %p159
        $region18: #{multi_head_attention.5} parent=11 // pred_check_branch
          %301 = sbr.rel (%p299) target = $region20
        $region19: #{multi_head_attention.5} parent=11 // pred_region
          %s303 = ssub.s32 128, 128
          %304 = vsyncadd [#allocation9], %s303
          %s305 = smul.addr %s38, 128
          %s306 = scalar_lea.hbm %s3, %s305
          %s308 = sshll.u32 [#allocation8], 4
          %s309 = int_to_ptr.vmem [resolvable:$true] %s308
          %311 = dma.hbm_to_vmem [thread:$0]  %s306, 128, %s309, [#allocation9]
        $region20: #{multi_head_attention.5} parent=11 // pred_fallthru
          _
        // Predicated region
        $region21: #{multi_head_attention.5} parent=11 // pred_check
          %p312 = pneg %p185
        $region22: #{multi_head_attention.5} parent=11 // pred_check_branch
          %314 = sbr.rel (%p312) target = $region24
        $region23: #{multi_head_attention.5} parent=11 // pred_region
          %s316 = ssub.s32 128, 128
          %317 = vsyncadd [#allocation9], %s316
          %s318 = smul.addr %s38, 128
          %s319 = scalar_lea.hbm %s4, %s318
          %s321 = sshll.u32 [#allocation10], 4
          %s322 = int_to_ptr.vmem [resolvable:$true] %s321
          %324 = dma.hbm_to_vmem [thread:$0]  %s319, 128, %s322, [#allocation9]
        $region24: #{multi_head_attention.5} parent=11 // pred_fallthru
          _
        // Predicated region
        $region25: #{multi_head_attention.5} parent=11 // pred_check
          %p325 = pneg %p211
        $region26: #{multi_head_attention.5} parent=11 // pred_check_branch
          %327 = sbr.rel (%p325) target = $region28
        $region27: #{multi_head_attention.5} parent=11 // pred_region
          %s329 = ssub.s32 128, 128
          %330 = vsyncadd [#allocation12], %s329
          %s331 = smul.addr %s38, 128
          %s332 = scalar_lea.hbm %s5, %s331
          %s334 = sshll.u32 [#allocation11], 4
          %s335 = int_to_ptr.vmem [resolvable:$true] %s334
          %337 = dma.hbm_to_vmem [thread:$0]  %s332, 128, %s335, [#allocation12]
        $region28: #{multi_head_attention.5} parent=11 // pred_fallthru
          _
      $region12: #{multi_head_attention.5} parent=5 // pred_fallthru
        _
      %p338 = scmp.lt.s32.totalorder %s28, 8
      // Predicated region
      $region29: #{multi_head_attention.5} parent=5 // pred_check
        %p339 = pneg %p338
      $region30: #{multi_head_attention.5} parent=5 // pred_check_branch
        %341 = sbr.rel (%p339) target = $region32
      $region31: #{multi_head_attention.5} parent=5 // pred_region
        // Predicated region
        $region33: #{multi_head_attention.5} parent=31 // pred_check
          %p342 = pneg %p71
        $region34: #{multi_head_attention.5} parent=31 // pred_check_branch
          %344 = sbr.rel (%p342) target = $region36
        $region35: #{multi_head_attention.5} parent=31 // pred_region
          %s345 = sand.u32 %s61, 1
          %s346 = scalar_lea.sflag [#allocation3], %s345
          %s347 = sand.u32 %s61, 1
          %s348 = smul.addr %s347, 4
          %s349 = scalar_lea.vmem [#allocation2], %s348
          %s351 = ssub.s32 64, 64
          %352 = vsyncadd %s346, %s351
          %s353 = sadd.s32 %s35, %s37
          %s354 = smul.addr %s36, 4
          %s355 = sadd.s32 %s353, %s354
          %s356 = smul.addr %s355, 64
          %s357 = scalar_lea.hbm %s0, %s356
          %s359 = sshll.u32 %s349, 4
          %s360 = int_to_ptr.vmem [resolvable:$true] %s359
          %362 = dma.hbm_to_vmem [thread:$0]  %s357, 64, %s360, %s346
        $region36: #{multi_head_attention.5} parent=31 // pred_fallthru
          _
        // Predicated region
        $region37: #{multi_head_attention.5} parent=31 // pred_check
          %p363 = pneg %p101
        $region38: #{multi_head_attention.5} parent=31 // pred_check_branch
          %365 = sbr.rel (%p363) target = $region40
        $region39: #{multi_head_attention.5} parent=31 // pred_region
          %s366 = sand.u32 %s28, 1
          %s367 = scalar_lea.sflag [#allocation6], %s366
          %s368 = sand.u32 %s91, 1
          %s369 = smul.addr %s368, 4
          %s370 = scalar_lea.vmem [#allocation5], %s369
          %s372 = ssub.s32 64, 64
          %373 = vsyncadd %s367, %s372
          %s374 = sadd.s32 %s35, %s37
          %s375 = smul.addr %s36, 4
          %s376 = sadd.s32 %s374, %s375
          %s377 = smul.addr %s376, 64
          %s378 = scalar_lea.hbm %s1, %s377
          %s380 = sshll.u32 %s370, 4
          %s381 = int_to_ptr.vmem [resolvable:$true] %s380
          %383 = dma.hbm_to_vmem [thread:$0]  %s378, 64, %s381, %s367
        $region40: #{multi_head_attention.5} parent=31 // pred_fallthru
          _
      $region32: #{multi_head_attention.5} parent=5 // pred_fallthru
        _
      %p384 = scmp.le.s32.totalorder 1, %s28
      %p385 = scmp.lt.s32.totalorder %s28, 9
      %p386 = pnand %p384, %p385
      %p387 = pneg %p386
      // Predicated region
      $region41: #{multi_head_attention.5} parent=5 // pred_check
        _
      $region42: #{multi_head_attention.5} parent=5 // pred_check_branch
        %389 = sbr.rel (%p386) target = $region44
      $region43: #{multi_head_attention.5} parent=5 // pred_region
        %s390 = ssub.s32 %s28, 1
        %s391 = sand.u32 %s64, 1
        %s392 = scalar_lea.sflag [#allocation3], %s391
        %s393 = sand.u32 %s64, 1
        %s394 = smul.addr %s393, 4
        %s395 = scalar_lea.vmem [#allocation2], %s394
        // Predicated region
        $region45: #{multi_head_attention.5} parent=43 // pred_check
          %p396 = pneg %p77
        $region46: #{multi_head_attention.5} parent=43 // pred_check_branch
          %398 = sbr.rel (%p396) target = $region48
        $region47: #{multi_head_attention.5} parent=43 // pred_region
          %399 = dma.done %s392, 64
        $region48: #{multi_head_attention.5} parent=43 // pred_fallthru
          _
        %s400 = sand.u32 %s33, 1
        %s401 = scalar_lea.sflag [#allocation6], %s400
        %s402 = sand.u32 %s94, 1
        %s403 = smul.addr %s402, 4
        %s404 = scalar_lea.vmem [#allocation5], %s403
        // Predicated region
        $region49: #{multi_head_attention.5} parent=43 // pred_check
          %p405 = pneg %p107
        $region50: #{multi_head_attention.5} parent=43 // pred_check_branch
          %407 = sbr.rel (%p405) target = $region52
        $region51: #{multi_head_attention.5} parent=43 // pred_region
          %408 = dma.done %s401, 64
        $region52: #{multi_head_attention.5} parent=43 // pred_fallthru
          _
        // Predicated region
        $region53: #{multi_head_attention.5} parent=43 // pred_check
          %p409 = pneg %p133
        $region54: #{multi_head_attention.5} parent=43 // pred_check_branch
          %411 = sbr.rel (%p409) target = $region56
        $region55: #{multi_head_attention.5} parent=43 // pred_region
          %412 = dma.done [#allocation6], 128
        $region56: #{multi_head_attention.5} parent=43 // pred_fallthru
          _
        // Predicated region
        $region57: #{multi_head_attention.5} parent=43 // pred_check
          %p413 = pneg %p159
        $region58: #{multi_head_attention.5} parent=43 // pred_check_branch
          %415 = sbr.rel (%p413) target = $region60
        $region59: #{multi_head_attention.5} parent=43 // pred_region
          %416 = dma.done [#allocation9], 128
        $region60: #{multi_head_attention.5} parent=43 // pred_fallthru
          _
        // Predicated region
        $region61: #{multi_head_attention.5} parent=43 // pred_check
          %p417 = pneg %p185
        $region62: #{multi_head_attention.5} parent=43 // pred_check_branch
          %419 = sbr.rel (%p417) target = $region64
        $region63: #{multi_head_attention.5} parent=43 // pred_region
          %420 = dma.done [#allocation9], 128
        $region64: #{multi_head_attention.5} parent=43 // pred_fallthru
          _
        // Predicated region
        $region65: #{multi_head_attention.5} parent=43 // pred_check
          %p421 = pneg %p211
        $region66: #{multi_head_attention.5} parent=43 // pred_check_branch
          %423 = sbr.rel (%p421) target = $region68
        $region67: #{multi_head_attention.5} parent=43 // pred_region
          %424 = dma.done [#allocation12], 128
        $region68: #{multi_head_attention.5} parent=43 // pred_fallthru
          _
        %s425 = sand.u32 %s64, 1
        %s426 = scalar_lea.sflag [#allocation3], %s425
        %s427 = sand.u32 %s64, 1
        %s428 = smul.addr %s427, 4
        %s429 = scalar_lea.vmem [#allocation2], %s428
        %p430 = pneg %p77
        %p431 = pneg %p74
        %s432 = sand.u32 %s33, 1
        %s433 = scalar_lea.sflag [#allocation6], %s432
        %s434 = sand.u32 %s94, 1
        %s435 = smul.addr %s434, 4
        %s436 = scalar_lea.vmem [#allocation5], %s435
        %p437 = pneg %p107
        %p438 = pneg %p104
        %p439 = pneg %p133
        %p440 = pneg %p130
        %p441 = pneg %p159
        %p442 = pneg %p156
        %p443 = pneg %p185
        %p444 = pneg %p182
        %p445 = pneg %p211
        %p446 = pneg %p208
        %p447 = pneg %p241
        %p448 = pneg %p238
        %s449 = sand.u32 %s228, 1
        %s450 = scalar_lea.sflag [#allocation4], %s449
        %s451 = sand.u32 %s228, 1
        %s452 = smul.addr %s451, 4
        %s453 = scalar_lea.vmem [#allocation13], %s452
        %p454 = pneg %p271
        %p455 = pneg %p268
        %s456 = sand.u32 %s258, 1
        %s457 = scalar_lea.sflag [#allocation15], %s456
        %s458 = sand.u32 %s258, 1
        %s459 = smul.addr %s458, 4
        %s460 = scalar_lea.vmem [#allocation14], %s459
        %v461 = vld [vmem:[%s395] sm:$0xf]
        %v462 = vunpack.c.l.bf16 %v461
        %v463 = vld [vmem:[%s404] sm:$0xf]
        %v464 = vunpack.c.l.bf16 %v463
        %v465 = vld [vmem:[#allocation7] sm:$0xff]
        %v466 = vmul.f32 %v462, %v465
        %468 = vrot.lane.b32.xlu0 %v462, 124
        %v469 = vpop.permute.xlu0 %468
        %471 = vrot.lane.b32.xlu0 %v462, 4
        %v472 = vpop.permute.xlu0 %471
        %vm474 = vcmask 31744
        %v475 = vsel %vm474, %v469, %v472
        %v476 = vld [vmem:[#allocation8] sm:$0xff]
        %v477 = vmul.f32 %v475, %v476
        %v478 = vadd.f32 %v466, %v477
        %v479 = vpack.c.bf16 %v478, %v478
        %vm480 = vcmask 60416
        %481 = vst.msk [vmem:[%s453] sm:$0xf] %vm480, %v479
        %v482 = vld [vmem:[#allocation10] sm:$0xff]
        %v483 = vmul.f32 %v464, %v482
        %485 = vrot.lane.b32.xlu0 %v464, 124
        %v486 = vpop.permute.xlu0 %485
        %488 = vrot.lane.b32.xlu0 %v464, 4
        %v489 = vpop.permute.xlu0 %488
        %v491 = vsel %vm474, %v486, %v489
        %v492 = vld [vmem:[#allocation11] sm:$0xff]
        %v493 = vmul.f32 %v491, %v492
        %v494 = vadd.f32 %v483, %v493
        %v495 = vpack.c.bf16 %v494, %v494
        %496 = vst.msk [vmem:[%s460] sm:$0xf] %vm480, %v495
        %s497 = sand.u32 %s228, 1
        %s498 = scalar_lea.sflag [#allocation4], %s497
        %s499 = sand.u32 %s228, 1
        %s500 = smul.addr %s499, 4
        %s501 = scalar_lea.vmem [#allocation13], %s500
        %s502 = sand.u32 %s258, 1
        %s503 = scalar_lea.sflag [#allocation15], %s502
        %s504 = sand.u32 %s258, 1
        %s505 = smul.addr %s504, 4
        %s506 = scalar_lea.vmem [#allocation14], %s505
        // Predicated region
        $region69: #{multi_head_attention.5} parent=43 // pred_check
          %p507 = pneg %p238
        $region70: #{multi_head_attention.5} parent=43 // pred_check_branch
          %509 = sbr.rel (%p507) target = $region72
        $region71: #{multi_head_attention.5} parent=43 // pred_region
          %s511 = ssub.s32 64, 64
          %512 = vsyncadd %s498, %s511
          %s513 = sadd.s32 %s38, %s40
          %s514 = smul.addr %s39, 4
          %s515 = sadd.s32 %s513, %s514
          %s516 = smul.addr %s515, 64
          %s517 = scalar_lea.hbm %s6, %s516
          %s519 = sshll.u32 %s501, 4
          %s520 = int_to_ptr.vmem [resolvable:$true] %s519
          %522 = dma.vmem_to_hbm [thread:$0]  %s520, 64, %s517, %s498
        $region72: #{multi_head_attention.5} parent=43 // pred_fallthru
          _
        // Predicated region
        $region73: #{multi_head_attention.5} parent=43 // pred_check
          %p523 = pneg %p268
        $region74: #{multi_head_attention.5} parent=43 // pred_check_branch
          %525 = sbr.rel (%p523) target = $region76
        $region75: #{multi_head_attention.5} parent=43 // pred_region
          %s527 = ssub.s32 64, 64
          %528 = vsyncadd %s503, %s527
          %s529 = sadd.s32 %s38, %s40
          %s530 = smul.addr %s39, 4
          %s531 = sadd.s32 %s529, %s530
          %s532 = smul.addr %s531, 64
          %s533 = scalar_lea.hbm %s7, %s532
          %s535 = sshll.u32 %s506, 4
          %s536 = int_to_ptr.vmem [resolvable:$true] %s535
          %538 = dma.vmem_to_hbm [thread:$0]  %s536, 64, %s533, %s503
        $region76: #{multi_head_attention.5} parent=43 // pred_fallthru
          _
      $region44: #{multi_head_attention.5} parent=5 // pred_fallthru
        _
      %p539 = scmp.le.s32.totalorder 2, %s28
      // Predicated region
      $region77: #{multi_head_attention.5} parent=5 // pred_check
        %p540 = pneg %p539
      $region78: #{multi_head_attention.5} parent=5 // pred_check_branch
        %542 = sbr.rel (%p540) target = $region80
      $region79: #{multi_head_attention.5} parent=5 // pred_region
        %s543 = ssub.s32 %s28, 2
        // Predicated region
        $region81: #{multi_head_attention.5} parent=79 // pred_check
          %p544 = pneg %p244
        $region82: #{multi_head_attention.5} parent=79 // pred_check_branch
          %546 = sbr.rel (%p544) target = $region84
        $region83: #{multi_head_attention.5} parent=79 // pred_region
          %s547 = sand.u32 %s229, 1
          %s548 = scalar_lea.sflag [#allocation4], %s547
          %s549 = sand.u32 %s229, 1
          %s550 = smul.addr %s549, 4
          %s551 = scalar_lea.vmem [#allocation13], %s550
          %552 = dma.done %s548, 64
        $region84: #{multi_head_attention.5} parent=79 // pred_fallthru
          _
        // Predicated region
        $region85: #{multi_head_attention.5} parent=79 // pred_check
          %p553 = pneg %p274
        $region86: #{multi_head_attention.5} parent=79 // pred_check_branch
          %555 = sbr.rel (%p553) target = $region88
        $region87: #{multi_head_attention.5} parent=79 // pred_region
          %s556 = sand.u32 %s259, 1
          %s557 = scalar_lea.sflag [#allocation15], %s556
          %s558 = sand.u32 %s259, 1
          %s559 = smul.addr %s558, 4
          %s560 = scalar_lea.vmem [#allocation14], %s559
          %561 = dma.done %s557, 64
        $region88: #{multi_head_attention.5} parent=79 // pred_fallthru
          _
      $region80: #{multi_head_attention.5} parent=5 // pred_fallthru
        _
    $region6: #{multi_head_attention.5} parent=1 // loop_footer
      %s32 = sadd.s32 1, %s28
    $region7: #{multi_head_attention.5} parent=1 // loop_footer_branch
      %27 = sbr.rel target = $region3
    $region8: #{multi_head_attention.5} parent=1 // loop_exit
      _
    %562 = vsyncpa [#allocation3], 1
    %s563 = scalar_lea.sflag [#allocation3], 1
    %564 = vsyncpa %s563, 1
    %565 = vsyncpa [#allocation6], 1
    %s566 = scalar_lea.sflag [#allocation6], 1
    %567 = vsyncpa %s566, 1
    %568 = vsyncpa [#allocation9], 1
    %569 = vsyncpa [#allocation12], 1
    %570 = vsyncpa [#allocation4], 1
    %s571 = scalar_lea.sflag [#allocation4], 1
    %572 = vsyncpa %s571, 1
    %573 = vsyncpa [#allocation15], 1
    %s574 = scalar_lea.sflag [#allocation15], 1
    %575 = vsyncpa %s574, 1

// kernel: multi_head_attention.6
$region0: #{multi_head_attention.6}
  #allocation0 [shape = 'u32[]', space=smem, size = 0x4, offset = 0x4, fixed_abs, tag = 'smem constant byte address 0x4 - core index']
  #allocation1 [shape = 'u32[144,128]{1,0:T(1,128)}', space=vmem, size = 0x12000, scoped, tag = 'internal scratch']
  #allocation2 [shape = 'f32[8,1]{1,0:T(8,128)}', space=vmem, size = 0x1000, scoped, tag = 'scratch operand']
  #allocation3 [shape = 'f32[8,1]{1,0:T(8,128)}', space=vmem, size = 0x1000, scoped, tag = 'scratch operand']
  #allocation4 [shape = 'f32[8,8]{1,0:T(8,128)}', space=vmem, size = 0x1000, scoped, tag = 'scratch operand']
  %s0 = inlined_call_operand.hbm [shape: bf16[2,4,8,8], index: 0, kind: input, shape index: {}]
  %s1 = inlined_call_operand.hbm [shape: bf16[2,4,8,8], index: 1, kind: input, shape index: {}]
  %s2 = inlined_call_operand.hbm [shape: bf16[2,4,8,8], index: 2, kind: input, shape index: {}]
  %s3 = inlined_call_operand.hbm [shape: bf16[2,4,8,8], index: 3, kind: output, shape index: {}]
  %s4 = sld [smem:[#allocation0]]
  $region65: #{multi_head_attention.6} parent=0
    _
  %s6 = ssub.s32 1, %s4
  %s7 = scalar_select 0, %s6, %s4
  $region1: #{multi_head_attention.6} parent=0
    #allocation5 [shape = 'u8[4096]{0}', space=vmem, size = 0x1000, scoped, tag = 'input window, operand 0']
    #allocation6 [shape = 's32[2]{0}', space=sflag, size = 0x8, scoped, tag = 'scoped memory for multi_head_attention.6']
    #allocation7 [shape = 's32[2]{0}', space=sflag, size = 0x8, scoped, tag = 'scoped memory for multi_head_attention.6']
    #allocation8 [shape = 'u8[4096]{0}', space=vmem, size = 0x1000, scoped, tag = 'input window, operand 1']
    #allocation9 [shape = 's32[2]{0}', space=sflag, size = 0x8, scoped, tag = 'scoped memory for multi_head_attention.6']
    #allocation10 [shape = 'u8[4096]{0}', space=vmem, size = 0x1000, scoped, tag = 'input window, operand 2']
    #allocation11 [shape = 'u8[4096]{0}', space=vmem, size = 0x1000, scoped, tag = 'output window, operand 0']
    %8 = vsyncpa [#allocation6], 0
    %s9 = scalar_lea.sflag [#allocation6], 1
    %10 = vsyncpa %s9, 0
    %11 = vsyncpa [#allocation9], 0
    %s12 = scalar_lea.sflag [#allocation9], 1
    %13 = vsyncpa %s12, 0
    %14 = vsyncpa [#allocation7], 0
    %s15 = scalar_lea.sflag [#allocation7], 1
    %16 = vsyncpa %s15, 0
    loop: start=0, step=1, limit=10
    $region2: #{multi_head_attention.6} parent=1 // loop_pre_header
      _
    $region3: #{multi_head_attention.6} parent=1 // loop_header
      %s18 = sphi 0, %s22
      %p19 = scmp.ge.s32.totalorder %s18, 10
      %s25 = sphi 0, %s51
      %s26 = sphi 0, %s47
      %s27 = sphi 0, %s43
      %s28 = sphi 0, %s39
      %s29 = sphi 0, %s25
      %s30 = sphi 0, %s26
      %s31 = sphi 0, %s27
      %s32 = sphi 0, %s28
      %s33 = sphi 0, %s29
      %s34 = sphi 0, %s30
      %s35 = sphi 0, %s31
      %s36 = sphi 0, %s32
      %s58 = sphi 0, %s60
      %s61 = sphi 0, %s58
      %s62 = sphi 0, %s61
      %s78 = sphi 0, %s62
      %s88 = sphi 0, %s90
      %s91 = sphi 0, %s88
      %s92 = sphi 0, %s91
      %s108 = sphi 0, %s92
      %s118 = sphi 0, %s120
      %s121 = sphi 0, %s118
      %s122 = sphi 0, %s121
      %s138 = sphi 0, %s122
      %s148 = sphi 0, %s150
      %s151 = sphi 0, %s148
      %s152 = sphi 0, %s151
      %s168 = sphi 0, %s152
    $region4: #{multi_head_attention.6} parent=1 // loop_header_branch
      %21 = sbr.rel (%p19) target = $region8
    $region5: #{multi_head_attention.6} parent=1 // loop_body
      %s23 = ssub.s32 %s18, 1
      %s24 = ssub.s32 %s18, 2
      %s37 = sadd.s32 1, %s28
      %p38 = scmp.ge.s32.totalorder %s37, 1
      %s39 = scalar_select %p38, 0, %s37
      %s40 = sadd.s32 1, %s27
      %s41 = scalar_select %p38, %s40, %s27
      %p42 = scmp.ge.s32.totalorder %s41, 1
      %s43 = scalar_select %p42, 0, %s41
      %s44 = sadd.s32 1, %s26
      %s45 = scalar_select %p42, %s44, %s26
      %p46 = scmp.ge.s32.totalorder %s45, 4
      %s47 = scalar_select %p46, 0, %s45
      %s48 = sadd.s32 1, %s25
      %s49 = scalar_select %p46, %s48, %s25
      %p50 = scmp.ge.s32.totalorder %s49, 2
      %s51 = scalar_select %p50, 0, %s49
      %s52 = ssub.s32 %s25, %s51
      %s53 = ssub.s32 %s26, %s47
      %s54 = sor.u32 %s52, %s53
      %s55 = ssub.s32 %s27, %s43
      %s56 = sor.u32 %s54, %s55
      %p57 = scmp.eq.s32.totalorder %s56, 0
      %s59 = sadd.s32 %s58, 1
      %s60 = scalar_select %p57, %s58, %s59
      %p63 = pneg %p57
      %p64 = scmp.eq.s32.totalorder %s18, 7
      %p65 = por %p63, %p64
      %p66 = scmp.ne.s32.totalorder %s58, %s61
      %p67 = scmp.eq.s32.totalorder %s18, 0
      %p68 = por %p66, %p67
      %p69 = scmp.ne.s32.totalorder %s58, %s61
      %p70 = scmp.eq.s32.totalorder %s23, 7
      %p71 = por %p69, %p70
      %p72 = scmp.ne.s32.totalorder %s61, %s62
      %p73 = scmp.eq.s32.totalorder %s23, 0
      %p74 = por %p72, %p73
      %p75 = scmp.ne.s32.totalorder %s61, %s62
      %p76 = scmp.eq.s32.totalorder %s24, 7
      %p77 = por %p75, %p76
      %p79 = scmp.ne.s32.totalorder %s62, %s78
      %p80 = scmp.eq.s32.totalorder %s24, 0
      %p81 = por %p79, %p80
      %s82 = ssub.s32 %s25, %s51
      %s83 = ssub.s32 %s26, %s47
      %s84 = sor.u32 %s82, %s83
      %s85 = ssub.s32 %s28, %s39
      %s86 = sor.u32 %s84, %s85
      %p87 = scmp.eq.s32.totalorder %s86, 0
      %s89 = sadd.s32 %s88, 1
      %s90 = scalar_select %p87, %s88, %s89
      %p93 = pneg %p87
      %p94 = scmp.eq.s32.totalorder %s18, 7
      %p95 = por %p93, %p94
      %p96 = scmp.ne.s32.totalorder %s88, %s91
      %p97 = scmp.eq.s32.totalorder %s18, 0
      %p98 = por %p96, %p97
      %p99 = scmp.ne.s32.totalorder %s88, %s91
      %p100 = scmp.eq.s32.totalorder %s23, 7
      %p101 = por %p99, %p100
      %p102 = scmp.ne.s32.totalorder %s91, %s92
      %p103 = scmp.eq.s32.totalorder %s23, 0
      %p104 = por %p102, %p103
      %p105 = scmp.ne.s32.totalorder %s91, %s92
      %p106 = scmp.eq.s32.totalorder %s24, 7
      %p107 = por %p105, %p106
      %p109 = scmp.ne.s32.totalorder %s92, %s108
      %p110 = scmp.eq.s32.totalorder %s24, 0
      %p111 = por %p109, %p110
      %s112 = ssub.s32 %s25, %s51
      %s113 = ssub.s32 %s26, %s47
      %s114 = sor.u32 %s112, %s113
      %s115 = ssub.s32 %s28, %s39
      %s116 = sor.u32 %s114, %s115
      %p117 = scmp.eq.s32.totalorder %s116, 0
      %s119 = sadd.s32 %s118, 1
      %s120 = scalar_select %p117, %s118, %s119
      %p123 = pneg %p117
      %p124 = scmp.eq.s32.totalorder %s18, 7
      %p125 = por %p123, %p124
      %p126 = scmp.ne.s32.totalorder %s118, %s121
      %p127 = scmp.eq.s32.totalorder %s18, 0
      %p128 = por %p126, %p127
      %p129 = scmp.ne.s32.totalorder %s118, %s121
      %p130 = scmp.eq.s32.totalorder %s23, 7
      %p131 = por %p129, %p130
      %p132 = scmp.ne.s32.totalorder %s121, %s122
      %p133 = scmp.eq.s32.totalorder %s23, 0
      %p134 = por %p132, %p133
      %p135 = scmp.ne.s32.totalorder %s121, %s122
      %p136 = scmp.eq.s32.totalorder %s24, 7
      %p137 = por %p135, %p136
      %p139 = scmp.ne.s32.totalorder %s122, %s138
      %p140 = scmp.eq.s32.totalorder %s24, 0
      %p141 = por %p139, %p140
      %s142 = ssub.s32 %s25, %s51
      %s143 = ssub.s32 %s26, %s47
      %s144 = sor.u32 %s142, %s143
      %s145 = ssub.s32 %s27, %s43
      %s146 = sor.u32 %s144, %s145
      %p147 = scmp.eq.s32.totalorder %s146, 0
      %s149 = sadd.s32 %s148, 1
      %s150 = scalar_select %p147, %s148, %s149
      %p153 = pneg %p147
      %p154 = scmp.eq.s32.totalorder %s18, 7
      %p155 = por %p153, %p154
      %p156 = scmp.ne.s32.totalorder %s148, %s151
      %p157 = scmp.eq.s32.totalorder %s18, 0
      %p158 = por %p156, %p157
      %p159 = scmp.ne.s32.totalorder %s148, %s151
      %p160 = scmp.eq.s32.totalorder %s23, 7
      %p161 = por %p159, %p160
      %p162 = scmp.ne.s32.totalorder %s151, %s152
      %p163 = scmp.eq.s32.totalorder %s23, 0
      %p164 = por %p162, %p163
      %p165 = scmp.ne.s32.totalorder %s151, %s152
      %p166 = scmp.eq.s32.totalorder %s24, 7
      %p167 = por %p165, %p166
      %p169 = scmp.ne.s32.totalorder %s152, %s168
      %p170 = scmp.eq.s32.totalorder %s24, 0
      %p171 = por %p169, %p170
      %p172 = scmp.le.s32.totalorder 1, %s18
      %p173 = scmp.lt.s32.totalorder %s18, 9
      %p174 = pnand %p172, %p173
      %p175 = pneg %p174
      // Predicated region
      $region9: #{multi_head_attention.6} parent=5 // pred_check
        _
      $region10: #{multi_head_attention.6} parent=5 // pred_check_branch
        %177 = sbr.rel (%p174) target = $region12
      $region11: #{multi_head_attention.6} parent=5 // pred_region
        %s178 = ssub.s32 %s18, 1
      $region12: #{multi_head_attention.6} parent=5 // pred_fallthru
        _
      %p179 = scmp.lt.s32.totalorder %s18, 8
      // Predicated region
      $region13: #{multi_head_attention.6} parent=5 // pred_check
        %p180 = pneg %p179
      $region14: #{multi_head_attention.6} parent=5 // pred_check_branch
        %182 = sbr.rel (%p180) target = $region16
      $region15: #{multi_head_attention.6} parent=5 // pred_region
        // Predicated region
        $region17: #{multi_head_attention.6} parent=15 // pred_check
          %p183 = pneg %p68
        $region18: #{multi_head_attention.6} parent=15 // pred_check_branch
          %185 = sbr.rel (%p183) target = $region20
        $region19: #{multi_head_attention.6} parent=15 // pred_region
          %s186 = sand.u32 %s58, 1
          %s187 = scalar_lea.sflag [#allocation6], %s186
          %s188 = sand.u32 %s58, 1
          %s189 = smul.addr %s188, 4
          %s190 = scalar_lea.vmem [#allocation5], %s189
          %s192 = ssub.s32 64, 64
          %193 = vsyncadd %s187, %s192
          %s194 = sadd.s32 %s27, %s26
          %s195 = smul.addr %s25, 4
          %s196 = sadd.s32 %s194, %s195
          %s197 = smul.addr %s196, 64
          %s198 = scalar_lea.hbm %s0, %s197
          %s200 = sshll.u32 %s190, 4
          %s201 = int_to_ptr.vmem [resolvable:$true] %s200
          %203 = dma.hbm_to_vmem [thread:$0]  %s198, 64, %s201, %s187
        $region20: #{multi_head_attention.6} parent=15 // pred_fallthru
          _
        // Predicated region
        $region21: #{multi_head_attention.6} parent=15 // pred_check
          %p204 = pneg %p98
        $region22: #{multi_head_attention.6} parent=15 // pred_check_branch
          %206 = sbr.rel (%p204) target = $region24
        $region23: #{multi_head_attention.6} parent=15 // pred_region
          %s207 = sand.u32 %s18, 1
          %s208 = scalar_lea.sflag [#allocation9], %s207
          %s209 = sand.u32 %s88, 1
          %s210 = smul.addr %s209, 4
          %s211 = scalar_lea.vmem [#allocation8], %s210
          %s213 = ssub.s32 64, 64
          %214 = vsyncadd %s208, %s213
          %s215 = sadd.s32 %s28, %s26
          %s216 = smul.addr %s25, 4
          %s217 = sadd.s32 %s215, %s216
          %s218 = smul.addr %s217, 64
          %s219 = scalar_lea.hbm %s1, %s218
          %s221 = sshll.u32 %s211, 4
          %s222 = int_to_ptr.vmem [resolvable:$true] %s221
          %224 = dma.hbm_to_vmem [thread:$0]  %s219, 64, %s222, %s208
        $region24: #{multi_head_attention.6} parent=15 // pred_fallthru
          _
        // Predicated region
        $region25: #{multi_head_attention.6} parent=15 // pred_check
          %p225 = pneg %p128
        $region26: #{multi_head_attention.6} parent=15 // pred_check_branch
          %227 = sbr.rel (%p225) target = $region28
        $region27: #{multi_head_attention.6} parent=15 // pred_region
          %s228 = sand.u32 %s18, 1
          %s229 = scalar_lea.sflag [#allocation9], %s228
          %s230 = sand.u32 %s118, 1
          %s231 = smul.addr %s230, 4
          %s232 = scalar_lea.vmem [#allocation10], %s231
          %s234 = ssub.s32 64, 64
          %235 = vsyncadd %s229, %s234
          %s236 = sadd.s32 %s28, %s26
          %s237 = smul.addr %s25, 4
          %s238 = sadd.s32 %s236, %s237
          %s239 = smul.addr %s238, 64
          %s240 = scalar_lea.hbm %s2, %s239
          %s242 = sshll.u32 %s232, 4
          %s243 = int_to_ptr.vmem [resolvable:$true] %s242
          %245 = dma.hbm_to_vmem [thread:$0]  %s240, 64, %s243, %s229
        $region28: #{multi_head_attention.6} parent=15 // pred_fallthru
          _
      $region16: #{multi_head_attention.6} parent=5 // pred_fallthru
        _
      %p246 = scmp.le.s32.totalorder 1, %s18
      %p247 = scmp.lt.s32.totalorder %s18, 9
      %p248 = pnand %p246, %p247
      %p249 = pneg %p248
      // Predicated region
      $region29: #{multi_head_attention.6} parent=5 // pred_check
        _
      $region30: #{multi_head_attention.6} parent=5 // pred_check_branch
        %251 = sbr.rel (%p248) target = $region32
      $region31: #{multi_head_attention.6} parent=5 // pred_region
        %s252 = ssub.s32 %s18, 1
        %s253 = sand.u32 %s61, 1
        %s254 = scalar_lea.sflag [#allocation6], %s253
        %s255 = sand.u32 %s61, 1
        %s256 = smul.addr %s255, 4
        %s257 = scalar_lea.vmem [#allocation5], %s256
        // Predicated region
        $region33: #{multi_head_attention.6} parent=31 // pred_check
          %p258 = pneg %p74
        $region34: #{multi_head_attention.6} parent=31 // pred_check_branch
          %260 = sbr.rel (%p258) target = $region36
        $region35: #{multi_head_attention.6} parent=31 // pred_region
          %261 = dma.done %s254, 64
        $region36: #{multi_head_attention.6} parent=31 // pred_fallthru
          _
        %s262 = sand.u32 %s23, 1
        %s263 = scalar_lea.sflag [#allocation9], %s262
        %s264 = sand.u32 %s91, 1
        %s265 = smul.addr %s264, 4
        %s266 = scalar_lea.vmem [#allocation8], %s265
        // Predicated region
        $region37: #{multi_head_attention.6} parent=31 // pred_check
          %p267 = pneg %p104
        $region38: #{multi_head_attention.6} parent=31 // pred_check_branch
          %269 = sbr.rel (%p267) target = $region40
        $region39: #{multi_head_attention.6} parent=31 // pred_region
          %270 = dma.done %s263, 64
        $region40: #{multi_head_attention.6} parent=31 // pred_fallthru
          _
        %s271 = sand.u32 %s23, 1
        %s272 = scalar_lea.sflag [#allocation9], %s271
        %s273 = sand.u32 %s121, 1
        %s274 = smul.addr %s273, 4
        %s275 = scalar_lea.vmem [#allocation10], %s274
        // Predicated region
        $region41: #{multi_head_attention.6} parent=31 // pred_check
          %p276 = pneg %p134
        $region42: #{multi_head_attention.6} parent=31 // pred_check_branch
          %278 = sbr.rel (%p276) target = $region44
        $region43: #{multi_head_attention.6} parent=31 // pred_region
          %279 = dma.done %s272, 64
        $region44: #{multi_head_attention.6} parent=31 // pred_fallthru
          _
        %s280 = sand.u32 %s61, 1
        %s281 = scalar_lea.sflag [#allocation6], %s280
        %s282 = sand.u32 %s61, 1
        %s283 = smul.addr %s282, 4
        %s284 = scalar_lea.vmem [#allocation5], %s283
        %p285 = pneg %p74
        %p286 = pneg %p71
        %s287 = sand.u32 %s23, 1
        %s288 = scalar_lea.sflag [#allocation9], %s287
        %s289 = sand.u32 %s91, 1
        %s290 = smul.addr %s289, 4
        %s291 = scalar_lea.vmem [#allocation8], %s290
        %p292 = pneg %p104
        %p293 = pneg %p101
        %s294 = sand.u32 %s23, 1
        %s295 = scalar_lea.sflag [#allocation9], %s294
        %s296 = sand.u32 %s121, 1
        %s297 = smul.addr %s296, 4
        %s298 = scalar_lea.vmem [#allocation10], %s297
        %p299 = pneg %p134
        %p300 = pneg %p131
        %p301 = pneg %p164
        %p302 = pneg %p161
        %s303 = sand.u32 %s151, 1
        %s304 = scalar_lea.sflag [#allocation7], %s303
        %s305 = sand.u32 %s151, 1
        %s306 = smul.addr %s305, 4
        %s307 = scalar_lea.vmem [#allocation11], %s306
        %p309 = scmp.eq.s32.totalorder %s32, 0
        // Predicated region
        $region45: #{multi_head_attention.6} parent=31 // pred_check
          %p310 = pneg %p309
        $region46: #{multi_head_attention.6} parent=31 // pred_check_branch
          %312 = sbr.rel (%p310) target = $region48
        $region47: #{multi_head_attention.6} parent=31 // pred_region
          %vm313 = vcmask 7168
          %314 = vst.msk [vmem:[#allocation2] sm:$0xff] %vm313, -inf
          %315 = vst.msk [vmem:[#allocation3] sm:$0xff] %vm313, 0.0
          %vm316 = vcmask 64512
          %317 = vst.msk [vmem:[#allocation4] sm:$0xff] %vm316, 0.0
        $region48: #{multi_head_attention.6} parent=31 // pred_fallthru
          _
        %v318 = vld [vmem:[%s257] sm:$0xf]
        %v319 = vld [vmem:[%s266] sm:$0xf]
        %vm320 = vcmask 64512
        %v322 = vsel %vm320, %v318, 0
        %v325 = vsel %vm320, %v319, 0
        %327 = vmatprep.subr.bf16.mxu0 0
        %328 = vmatpush1.bf16.xpose.msra.mxu0 %v325
        %329 = vmatprep.subr.bf16.mxu0 0
        %330 = vmatpush1.bf16.xpose.msra.mxu0 0
        %331 = vmatprep.subr.bf16.mxu0 0
        %332 = vmatpush1.bf16.xpose.msra.mxu0 0
        %333 = vmatprep.subr.bf16.mxu0 0
        %334 = vmatpush1.bf16.xpose.msra.mxu0 0
        %335 = vmatprep.subr.bf16.mxu0 0
        %336 = vmatpush1.bf16.xpose.msra.mxu0 0
        %337 = vmatprep.subr.bf16.mxu0 0
        %338 = vmatpush1.bf16.xpose.msra.mxu0 0
        %339 = vmatprep.subr.bf16.mxu0 0
        %340 = vmatpush1.bf16.xpose.msra.mxu0 0
        %341 = vmatprep.subr.bf16.mxu0 0
        %342 = vmatpush1.bf16.xpose.msra.mxu0 0
        %343 = vmatprep.subr.bf16.mxu0 0
        %344 = vmatpush1.bf16.xpose.msra.mxu0 0
        %345 = vmatprep.subr.bf16.mxu0 0
        %346 = vmatpush1.bf16.xpose.msra.mxu0 0
        %347 = vmatprep.subr.bf16.mxu0 0
        %348 = vmatpush1.bf16.xpose.msra.mxu0 0
        %349 = vmatprep.subr.bf16.mxu0 0
        %350 = vmatpush1.bf16.xpose.msra.mxu0 0
        %351 = vmatprep.subr.bf16.mxu0 0
        %352 = vmatpush1.bf16.xpose.msra.mxu0 0
        %353 = vmatprep.subr.bf16.mxu0 0
        %354 = vmatpush1.bf16.xpose.msra.mxu0 0
        %355 = vmatprep.subr.bf16.mxu0 0
        %356 = vmatpush1.bf16.xpose.msra.mxu0 0
        %357 = vmatprep.subr.bf16.mxu0 0
        %358 = vmatpush1.bf16.xpose.msra.mxu0 0
        %359 = vmatprep.mubr.bf16.mxu0 0
        %360 = vmatmul.mubr.bf16.gmra.mrb[0].mxu0 %v322
        %v361 = vpop.f32.mrb[0].mxu0
        %v362 = vadd.f32 0.0, %v361
        %v363 = vpop.f32.mrb[0].mxu0
        %v364 = vpop.f32.mrb[0].mxu0
        %v365 = vpop.f32.mrb[0].mxu0
        %366 = vdwg.mxu0
        %v367 = vld [vmem:[#allocation2] sm:$0xff]
        %v368 = vsel %vm320, %v362, -inf
        %369 = vmax.xlane.f32.xlu0 %v368
        %v370 = vpop.xlane.xlu0 %369
        %v371 = vmax.f32 %v367, %v370
        %v372 = vsub.f32 %v367, %v371
        %v373 = vmul.f32 %v372, 1.442695
        %v374 = vpow.pop %v373
        %376 = vset.pattern.permute.xlu0 0
        %377 = vperm.xlu0 %376, %v371
        %v378 = vpop.permute.xlu0 %377
        %v380 = vsub.f32 %v362, %v378
        %v381 = vmul.f32 %v380, 1.442695
        %v382 = vpow.pop %v381
        %v383 = vld [vmem:[#allocation3] sm:$0xff]
        %v384 = vmul.f32 %v374, %v383
        %v385 = vsel %vm320, %v382, 0.0
        %386 = vadd.xlane.f32.xlu0 %v385
        %v387 = vpop.xlane.xlu0 %386
        %v388 = vadd.f32 %v384, %v387
        %vm389 = vcmask 7168
        %390 = vst.msk [vmem:[#allocation3] sm:$0xff] %vm389, %v388
        %v391 = vld [vmem:[#allocation4] sm:$0xff]
        %393 = vset.pattern.permute.xlu0 0
        %394 = vperm.xlu0 %393, %v374
        %v395 = vpop.permute.xlu0 %394
        %v397 = vmul.f32 %v395, %v391
        %v398 = vpack.c.bf16 %v382, %v382
        %v399 = vld [vmem:[%s275] sm:$0xf]
        %v401 = vsel %vm320, %v398, 0
        %vm403 = vcmask 1043456
        %v405 = vsel %vm403, %v399, 0
        %407 = vmatprep.subr.bf16.mxu0 0
        %408 = vmatpush1.bf16.msra.mxu0 %v405
        %409 = vmatprep.subr.bf16.mxu0 0
        %410 = vmatpush1.bf16.msra.mxu0 0
        %411 = vmatprep.subr.bf16.mxu0 0
        %412 = vmatpush1.bf16.msra.mxu0 0
        %413 = vmatprep.subr.bf16.mxu0 0
        %414 = vmatpush1.bf16.msra.mxu0 0
        %415 = vmatprep.subr.bf16.mxu0 0
        %416 = vmatpush1.bf16.msra.mxu0 0
        %417 = vmatprep.subr.bf16.mxu0 0
        %418 = vmatpush1.bf16.msra.mxu0 0
        %419 = vmatprep.subr.bf16.mxu0 0
        %420 = vmatpush1.bf16.msra.mxu0 0
        %421 = vmatprep.subr.bf16.mxu0 0
        %422 = vmatpush1.bf16.msra.mxu0 0
        %423 = vmatprep.subr.bf16.mxu0 0
        %424 = vmatpush1.bf16.msra.mxu0 0
        %425 = vmatprep.subr.bf16.mxu0 0
        %426 = vmatpush1.bf16.msra.mxu0 0
        %427 = vmatprep.subr.bf16.mxu0 0
        %428 = vmatpush1.bf16.msra.mxu0 0
        %429 = vmatprep.subr.bf16.mxu0 0
        %430 = vmatpush1.bf16.msra.mxu0 0
        %431 = vmatprep.subr.bf16.mxu0 0
        %432 = vmatpush1.bf16.msra.mxu0 0
        %433 = vmatprep.subr.bf16.mxu0 0
        %434 = vmatpush1.bf16.msra.mxu0 0
        %435 = vmatprep.subr.bf16.mxu0 0
        %436 = vmatpush1.bf16.msra.mxu0 0
        %437 = vmatprep.subr.bf16.mxu0 0
        %438 = vmatpush1.bf16.msra.mxu0 0
        %439 = vmatprep.mubr.bf16.mxu0 0
        %440 = vmatmul.mubr.bf16.gmra.mrb[0].mxu0 %v401
        %v441 = vpop.f32.mrb[0].mxu0
        %v442 = vadd.f32 0.0, %v441
        %v443 = vpop.f32.mrb[0].mxu0
        %v444 = vpop.f32.mrb[0].mxu0
        %v445 = vpop.f32.mrb[0].mxu0
        %446 = vdwg.mxu0
        %v447 = vadd.f32 %v397, %v442
        %448 = vst.msk [vmem:[#allocation4] sm:$0xff] %vm320, %v447
        %449 = vst.msk [vmem:[#allocation2] sm:$0xff] %vm389, %v371
        // Predicated region
        $region49: #{multi_head_attention.6} parent=31 // pred_check
          %p450 = pneg %p309
        $region50: #{multi_head_attention.6} parent=31 // pred_check_branch
          %452 = sbr.rel (%p450) target = $region52
        $region51: #{multi_head_attention.6} parent=31 // pred_region
          %v453 = vld [vmem:[#allocation4] sm:$0xff]
          %v454 = vld [vmem:[#allocation3] sm:$0xff]
          %v455 = vrcp.pop %v454
          %457 = vset.pattern.permute.xlu0 0
          %458 = vperm.xlu0 %457, %v455
          %v459 = vpop.permute.xlu0 %458
          %v461 = vmul.f32 %v453, %v459
          %v462 = vpack.c.bf16 %v461, %v461
          %vm463 = vcmask 60416
          %464 = vst.msk [vmem:[%s307] sm:$0xf] %vm463, %v462
        $region52: #{multi_head_attention.6} parent=31 // pred_fallthru
          _
        %s465 = sand.u32 %s151, 1
        %s466 = scalar_lea.sflag [#allocation7], %s465
        %s467 = sand.u32 %s151, 1
        %s468 = smul.addr %s467, 4
        %s469 = scalar_lea.vmem [#allocation11], %s468
        // Predicated region
        $region53: #{multi_head_attention.6} parent=31 // pred_check
          %p470 = pneg %p161
        $region54: #{multi_head_attention.6} parent=31 // pred_check_branch
          %472 = sbr.rel (%p470) target = $region56
        $region55: #{multi_head_attention.6} parent=31 // pred_region
          %s474 = ssub.s32 64, 64
          %475 = vsyncadd %s466, %s474
          %s476 = sadd.s32 %s31, %s30
          %s477 = smul.addr %s29, 4
          %s478 = sadd.s32 %s476, %s477
          %s479 = smul.addr %s478, 64
          %s480 = scalar_lea.hbm %s3, %s479
          %s482 = sshll.u32 %s469, 4
          %s483 = int_to_ptr.vmem [resolvable:$true] %s482
          %485 = dma.vmem_to_hbm [thread:$0]  %s483, 64, %s480, %s466
        $region56: #{multi_head_attention.6} parent=31 // pred_fallthru
          _
      $region32: #{multi_head_attention.6} parent=5 // pred_fallthru
        _
      %p486 = scmp.le.s32.totalorder 2, %s18
      // Predicated region
      $region57: #{multi_head_attention.6} parent=5 // pred_check
        %p487 = pneg %p486
      $region58: #{multi_head_attention.6} parent=5 // pred_check_branch
        %489 = sbr.rel (%p487) target = $region60
      $region59: #{multi_head_attention.6} parent=5 // pred_region
        %s490 = ssub.s32 %s18, 2
        // Predicated region
        $region61: #{multi_head_attention.6} parent=59 // pred_check
          %p491 = pneg %p167
        $region62: #{multi_head_attention.6} parent=59 // pred_check_branch
          %493 = sbr.rel (%p491) target = $region64
        $region63: #{multi_head_attention.6} parent=59 // pred_region
          %s494 = sand.u32 %s152, 1
          %s495 = scalar_lea.sflag [#allocation7], %s494
          %s496 = sand.u32 %s152, 1
          %s497 = smul.addr %s496, 4
          %s498 = scalar_lea.vmem [#allocation11], %s497
          %499 = dma.done %s495, 64
        $region64: #{multi_head_attention.6} parent=59 // pred_fallthru
          _
      $region60: #{multi_head_attention.6} parent=5 // pred_fallthru
        _
    $region6: #{multi_head_attention.6} parent=1 // loop_footer
      %s22 = sadd.s32 1, %s18
    $region7: #{multi_head_attention.6} parent=1 // loop_footer_branch
      %17 = sbr.rel target = $region3
    $region8: #{multi_head_attention.6} parent=1 // loop_exit
      _
    %500 = vsyncpa [#allocation6], 1
    %s501 = scalar_lea.sflag [#allocation6], 1
    %502 = vsyncpa %s501, 1
    %503 = vsyncpa [#allocation9], 1
    %s504 = scalar_lea.sflag [#allocation9], 1
    %505 = vsyncpa %s504, 1
    %506 = vsyncpa [#allocation7], 1
    %s507 = scalar_lea.sflag [#allocation7], 1
    %508 = vsyncpa %s507, 1

// kernel: multi_head_attention.7
$region0: #{multi_head_attention.7}
  #allocation0 [shape = 'u32[]', space=smem, size = 0x4, offset = 0x4, fixed_abs, tag = 'smem constant byte address 0x4 - core index']
  #allocation1 [shape = 'u32[144,128]{1,0:T(1,128)}', space=vmem, size = 0x12000, scoped, tag = 'internal scratch']
  %s0 = inlined_call_operand.hbm [shape: bf16[2,8,32], index: 0, kind: input, shape index: {}]
  %s1 = inlined_call_operand.hbm [shape: bf16[32,32], index: 1, kind: input, shape index: {}]
  %s2 = inlined_call_operand.hbm [shape: f32[2,8,32], index: 2, kind: output, shape index: {}]
  %s3 = sld [smem:[#allocation0]]
  $region49: #{multi_head_attention.7} parent=0
    _
  %s5 = ssub.s32 1, %s3
  %s6 = scalar_select 0, %s5, %s3
  $region1: #{multi_head_attention.7} parent=0
    #allocation2 [shape = 'u8[4096]{0}', space=vmem, size = 0x1000, scoped, tag = 'input window, operand 0']
    #allocation3 [shape = 's32[2]{0}', space=sflag, size = 0x8, scoped, tag = 'scoped memory for multi_head_attention.7']
    #allocation4 [shape = 's32[2]{0}', space=sflag, size = 0x8, scoped, tag = 'scoped memory for multi_head_attention.7']
    #allocation5 [shape = 'u8[8192]{0}', space=vmem, size = 0x2000, scoped, tag = 'input window, operand 1, single buffered']
    #allocation6 [shape = 's32[1]{0}', space=sflag, size = 0x4, scoped, tag = 'scoped memory for multi_head_attention.7']
    #allocation7 [shape = 'u8[8192]{0}', space=vmem, size = 0x2000, scoped, tag = 'output window, operand 0']
    %7 = vsyncpa [#allocation3], 0
    %s8 = scalar_lea.sflag [#allocation3], 1
    %9 = vsyncpa %s8, 0
    %10 = vsyncpa [#allocation6], 0
    %11 = vsyncpa [#allocation4], 0
    %s12 = scalar_lea.sflag [#allocation4], 1
    %13 = vsyncpa %s12, 0
    loop: start=0, step=1, limit=4
    $region2: #{multi_head_attention.7} parent=1 // loop_pre_header
      _
    $region3: #{multi_head_attention.7} parent=1 // loop_header
      %s15 = sphi 0, %s19
      %p16 = scmp.ge.s32.totalorder %s15, 4
      %s22 = sphi 0, %s34
      %s23 = sphi 0, %s30
      %s24 = sphi 0, %s22
      %s25 = sphi 0, %s23
      %s26 = sphi 0, %s24
      %s27 = sphi 0, %s25
      %s39 = sphi 0, %s41
      %s42 = sphi 0, %s39
      %s43 = sphi 0, %s42
      %s59 = sphi 0, %s43
      %s63 = sphi 0, %s63
      %s65 = sphi 0, %s63
      %s66 = sphi 0, %s65
      %s80 = sphi 0, %s66
      %s88 = sphi 0, %s90
      %s91 = sphi 0, %s88
      %s92 = sphi 0, %s91
      %s108 = sphi 0, %s92
    $region4: #{multi_head_attention.7} parent=1 // loop_header_branch
      %18 = sbr.rel (%p16) target = $region8
    $region5: #{multi_head_attention.7} parent=1 // loop_body
      %s20 = ssub.s32 %s15, 1
      %s21 = ssub.s32 %s15, 2
      %s28 = sadd.s32 1, %s23
      %p29 = scmp.ge.s32.totalorder %s28, 1
      %s30 = scalar_select %p29, 0, %s28
      %s31 = sadd.s32 1, %s22
      %s32 = scalar_select %p29, %s31, %s22
      %p33 = scmp.ge.s32.totalorder %s32, 2
      %s34 = scalar_select %p33, 0, %s32
      %s35 = ssub.s32 %s22, %s34
      %s36 = ssub.s32 %s23, %s30
      %s37 = sor.u32 %s35, %s36
      %p38 = scmp.eq.s32.totalorder %s37, 0
      %s40 = sadd.s32 %s39, 1
      %s41 = scalar_select %p38, %s39, %s40
      %p44 = pneg %p38
      %p45 = scmp.eq.s32.totalorder %s15, 1
      %p46 = por %p44, %p45
      %p47 = scmp.ne.s32.totalorder %s39, %s42
      %p48 = scmp.eq.s32.totalorder %s15, 0
      %p49 = por %p47, %p48
      %p50 = scmp.ne.s32.totalorder %s39, %s42
      %p51 = scmp.eq.s32.totalorder %s20, 1
      %p52 = por %p50, %p51
      %p53 = scmp.ne.s32.totalorder %s42, %s43
      %p54 = scmp.eq.s32.totalorder %s20, 0
      %p55 = por %p53, %p54
      %p56 = scmp.ne.s32.totalorder %s42, %s43
      %p57 = scmp.eq.s32.totalorder %s21, 1
      %p58 = por %p56, %p57
      %p60 = scmp.ne.s32.totalorder %s43, %s59
      %p61 = scmp.eq.s32.totalorder %s21, 0
      %p62 = por %p60, %p61
      %s64 = sadd.s32 %s63, 1
      %p67 = scmp.eq.s32.totalorder %s15, 1
      %p68 = scmp.ne.s32.totalorder %s63, %s65
      %p69 = scmp.eq.s32.totalorder %s15, 0
      %p70 = por %p68, %p69
      %p71 = scmp.ne.s32.totalorder %s63, %s65
      %p72 = scmp.eq.s32.totalorder %s20, 1
      %p73 = por %p71, %p72
      %p74 = scmp.ne.s32.totalorder %s65, %s66
      %p75 = scmp.eq.s32.totalorder %s20, 0
      %p76 = por %p74, %p75
      %p77 = scmp.ne.s32.totalorder %s65, %s66
      %p78 = scmp.eq.s32.totalorder %s21, 1
      %p79 = por %p77, %p78
      %p81 = scmp.ne.s32.totalorder %s66, %s80
      %p82 = scmp.eq.s32.totalorder %s21, 0
      %p83 = por %p81, %p82
      %s84 = ssub.s32 %s22, %s34
      %s85 = ssub.s32 %s23, %s30
      %s86 = sor.u32 %s84, %s85
      %p87 = scmp.eq.s32.totalorder %s86, 0
      %s89 = sadd.s32 %s88, 1
      %s90 = scalar_select %p87, %s88, %s89
      %p93 = pneg %p87
      %p94 = scmp.eq.s32.totalorder %s15, 1
      %p95 = por %p93, %p94
      %p96 = scmp.ne.s32.totalorder %s88, %s91
      %p97 = scmp.eq.s32.totalorder %s15, 0
      %p98 = por %p96, %p97
      %p99 = scmp.ne.s32.totalorder %s88, %s91
      %p100 = scmp.eq.s32.totalorder %s20, 1
      %p101 = por %p99, %p100
      %p102 = scmp.ne.s32.totalorder %s91, %s92
      %p103 = scmp.eq.s32.totalorder %s20, 0
      %p104 = por %p102, %p103
      %p105 = scmp.ne.s32.totalorder %s91, %s92
      %p106 = scmp.eq.s32.totalorder %s21, 1
      %p107 = por %p105, %p106
      %p109 = scmp.ne.s32.totalorder %s92, %s108
      %p110 = scmp.eq.s32.totalorder %s21, 0
      %p111 = por %p109, %p110
      %p112 = scmp.le.s32.totalorder 1, %s15
      %p113 = scmp.lt.s32.totalorder %s15, 3
      %p114 = pnand %p112, %p113
      %p115 = pneg %p114
      // Predicated region
      $region9: #{multi_head_attention.7} parent=5 // pred_check
        _
      $region10: #{multi_head_attention.7} parent=5 // pred_check_branch
        %117 = sbr.rel (%p114) target = $region12
      $region11: #{multi_head_attention.7} parent=5 // pred_region
        %s118 = ssub.s32 %s15, 1
        // Predicated region
        $region13: #{multi_head_attention.7} parent=11 // pred_check
          %p119 = pneg %p76
        $region14: #{multi_head_attention.7} parent=11 // pred_check_branch
          %121 = sbr.rel (%p119) target = $region16
        $region15: #{multi_head_attention.7} parent=11 // pred_region
          %s123 = ssub.s32 256, 256
          %124 = vsyncadd [#allocation6], %s123
          %s125 = sshll.u32 [#allocation5], 4
          %s126 = int_to_ptr.vmem [resolvable:$true] %s125
          %131 = dma.hbm_to_vmem [thread:$0]  %s1, 256, %s126, [#allocation6], 64, 64, 4
        $region16: #{multi_head_attention.7} parent=11 // pred_fallthru
          _
      $region12: #{multi_head_attention.7} parent=5 // pred_fallthru
        _
      %p132 = scmp.lt.s32.totalorder %s15, 2
      // Predicated region
      $region17: #{multi_head_attention.7} parent=5 // pred_check
        %p133 = pneg %p132
      $region18: #{multi_head_attention.7} parent=5 // pred_check_branch
        %135 = sbr.rel (%p133) target = $region20
      $region19: #{multi_head_attention.7} parent=5 // pred_region
        // Predicated region
        $region21: #{multi_head_attention.7} parent=19 // pred_check
          %p136 = pneg %p49
        $region22: #{multi_head_attention.7} parent=19 // pred_check_branch
          %138 = sbr.rel (%p136) target = $region24
        $region23: #{multi_head_attention.7} parent=19 // pred_region
          %s139 = sand.u32 %s39, 1
          %s140 = scalar_lea.sflag [#allocation3], %s139
          %s141 = sand.u32 %s39, 1
          %s142 = smul.addr %s141, 4
          %s143 = scalar_lea.vmem [#allocation2], %s142
          %s145 = ssub.s32 64, 64
          %146 = vsyncadd %s140, %s145
          %s147 = sadd.s32 %s23, %s22
          %s148 = smul.addr %s147, 64
          %s149 = scalar_lea.hbm %s0, %s148
          %s151 = sshll.u32 %s143, 4
          %s152 = int_to_ptr.vmem [resolvable:$true] %s151
          %154 = dma.hbm_to_vmem [thread:$0]  %s149, 64, %s152, %s140
        $region24: #{multi_head_attention.7} parent=19 // pred_fallthru
          _
      $region20: #{multi_head_attention.7} parent=5 // pred_fallthru
        _
      %p155 = scmp.le.s32.totalorder 1, %s15
      %p156 = scmp.lt.s32.totalorder %s15, 3
      %p157 = pnand %p155, %p156
      %p158 = pneg %p157
      // Predicated region
      $region25: #{multi_head_attention.7} parent=5 // pred_check
        _
      $region26: #{multi_head_attention.7} parent=5 // pred_check_branch
        %160 = sbr.rel (%p157) target = $region28
      $region27: #{multi_head_attention.7} parent=5 // pred_region
        %s161 = ssub.s32 %s15, 1
        %s162 = sand.u32 %s42, 1
        %s163 = scalar_lea.sflag [#allocation3], %s162
        %s164 = sand.u32 %s42, 1
        %s165 = smul.addr %s164, 4
        %s166 = scalar_lea.vmem [#allocation2], %s165
        // Predicated region
        $region29: #{multi_head_attention.7} parent=27 // pred_check
          %p167 = pneg %p55
        $region30: #{multi_head_attention.7} parent=27 // pred_check_branch
          %169 = sbr.rel (%p167) target = $region32
        $region31: #{multi_head_attention.7} parent=27 // pred_region
          %170 = dma.done %s163, 64
        $region32: #{multi_head_attention.7} parent=27 // pred_fallthru
          _
        // Predicated region
        $region33: #{multi_head_attention.7} parent=27 // pred_check
          %p171 = pneg %p76
        $region34: #{multi_head_attention.7} parent=27 // pred_check_branch
          %173 = sbr.rel (%p171) target = $region36
        $region35: #{multi_head_attention.7} parent=27 // pred_region
          %174 = dma.done [#allocation6], 256
        $region36: #{multi_head_attention.7} parent=27 // pred_fallthru
          _
        %s175 = sand.u32 %s42, 1
        %s176 = scalar_lea.sflag [#allocation3], %s175
        %s177 = sand.u32 %s42, 1
        %s178 = smul.addr %s177, 4
        %s179 = scalar_lea.vmem [#allocation2], %s178
        %p180 = pneg %p55
        %p181 = pneg %p52
        %p182 = pneg %p76
        %p183 = pneg %p73
        %p184 = pneg %p104
        %p185 = pneg %p101
        %s186 = sand.u32 %s91, 1
        %s187 = scalar_lea.sflag [#allocation4], %s186
        %s188 = sand.u32 %s91, 1
        %s189 = smul.addr %s188, 8
        %s190 = scalar_lea.vmem [#allocation7], %s189
        %v192 = vld [vmem:[%s166] sm:$0xf]
        %v193 = vld [vmem:[#allocation5] sm:$0xf]
        %v194 = vld [vmem:[#allocation5 + $0x4] sm:$0xf]
        %v195 = vld [vmem:[#allocation5 + $0x8] sm:$0xf]
        %v196 = vld [vmem:[#allocation5 + $0xc] sm:$0xf]
        %v201 = vunpack.c.l.b16 %v193
        %v202 = vunpack.c.l.b16 %v194
        %v203 = vunpack.c.l.b16 %v195
        %v204 = vunpack.c.l.b16 %v196
        %v205 = vpack.c.b16 %v202, %v201
        %v206 = vpack.c.b16 %v204, %v203
        %vm209 = vcmask 261120
        %v211 = vsel %vm209, %v192, 0
        %213 = vmatprep.subr.bf16.mxu0 0
        %214 = vmatpush1.bf16.msra.mxu0 %v205
        %215 = vmatprep.subr.bf16.mxu0 0
        %216 = vmatpush1.bf16.msra.mxu0 %v206
        %217 = vmatprep.subr.bf16.mxu0 0
        %218 = vmatpush1.bf16.msra.mxu0 0
        %219 = vmatprep.subr.bf16.mxu0 0
        %220 = vmatpush1.bf16.msra.mxu0 0
        %221 = vmatprep.subr.bf16.mxu0 0
        %222 = vmatpush1.bf16.msra.mxu0 0
        %223 = vmatprep.subr.bf16.mxu0 0
        %224 = vmatpush1.bf16.msra.mxu0 0
        %225 = vmatprep.subr.bf16.mxu0 0
        %226 = vmatpush1.bf16.msra.mxu0 0
        %227 = vmatprep.subr.bf16.mxu0 0
        %228 = vmatpush1.bf16.msra.mxu0 0
        %229 = vmatprep.subr.bf16.mxu0 0
        %230 = vmatpush1.bf16.msra.mxu0 0
        %231 = vmatprep.subr.bf16.mxu0 0
        %232 = vmatpush1.bf16.msra.mxu0 0
        %233 = vmatprep.subr.bf16.mxu0 0
        %234 = vmatpush1.bf16.msra.mxu0 0
        %235 = vmatprep.subr.bf16.mxu0 0
        %236 = vmatpush1.bf16.msra.mxu0 0
        %237 = vmatprep.subr.bf16.mxu0 0
        %238 = vmatpush1.bf16.msra.mxu0 0
        %239 = vmatprep.subr.bf16.mxu0 0
        %240 = vmatpush1.bf16.msra.mxu0 0
        %241 = vmatprep.subr.bf16.mxu0 0
        %242 = vmatpush1.bf16.msra.mxu0 0
        %243 = vmatprep.subr.bf16.mxu0 0
        %244 = vmatpush1.bf16.msra.mxu0 0
        %245 = vmatprep.mubr.bf16.mxu0 0
        %246 = vmatmul.mubr.bf16.gmra.mrb[0].mxu0 %v211
        %v247 = vpop.f32.mrb[0].mxu0
        %v248 = vadd.f32 0.0, %v247
        %v249 = vpop.f32.mrb[0].mxu0
        %v250 = vpop.f32.mrb[0].mxu0
        %v251 = vpop.f32.mrb[0].mxu0
        %252 = vdwg.mxu0
        %253 = vst.msk [vmem:[%s190] sm:$0xff] %vm209, %v248
        %s254 = sand.u32 %s91, 1
        %s255 = scalar_lea.sflag [#allocation4], %s254
        %s256 = sand.u32 %s91, 1
        %s257 = smul.addr %s256, 8
        %s258 = scalar_lea.vmem [#allocation7], %s257
        // Predicated region
        $region37: #{multi_head_attention.7} parent=27 // pred_check
          %p259 = pneg %p101
        $region38: #{multi_head_attention.7} parent=27 // pred_check_branch
          %261 = sbr.rel (%p259) target = $region40
        $region39: #{multi_head_attention.7} parent=27 // pred_region
          %s263 = ssub.s32 128, 128
          %264 = vsyncadd %s255, %s263
          %s265 = sadd.s32 %s25, %s24
          %s266 = smul.addr %s265, 128
          %s267 = scalar_lea.hbm %s2, %s266
          %s269 = sshll.u32 %s258, 4
          %s270 = int_to_ptr.vmem [resolvable:$true] %s269
          %272 = dma.vmem_to_hbm [thread:$0]  %s270, 128, %s267, %s255
        $region40: #{multi_head_attention.7} parent=27 // pred_fallthru
          _
      $region28: #{multi_head_attention.7} parent=5 // pred_fallthru
        _
      %p273 = scmp.le.s32.totalorder 2, %s15
      // Predicated region
      $region41: #{multi_head_attention.7} parent=5 // pred_check
        %p274 = pneg %p273
      $region42: #{multi_head_attention.7} parent=5 // pred_check_branch
        %276 = sbr.rel (%p274) target = $region44
      $region43: #{multi_head_attention.7} parent=5 // pred_region
        %s277 = ssub.s32 %s15, 2
        // Predicated region
        $region45: #{multi_head_attention.7} parent=43 // pred_check
          %p278 = pneg %p107
        $region46: #{multi_head_attention.7} parent=43 // pred_check_branch
          %280 = sbr.rel (%p278) target = $region48
        $region47: #{multi_head_attention.7} parent=43 // pred_region
          %s281 = sand.u32 %s92, 1
          %s282 = scalar_lea.sflag [#allocation4], %s281
          %s283 = sand.u32 %s92, 1
          %s284 = smul.addr %s283, 8
          %s285 = scalar_lea.vmem [#allocation7], %s284
          %286 = dma.done %s282, 128
        $region48: #{multi_head_attention.7} parent=43 // pred_fallthru
          _
      $region44: #{multi_head_attention.7} parent=5 // pred_fallthru
        _
    $region6: #{multi_head_attention.7} parent=1 // loop_footer
      %s19 = sadd.s32 1, %s15
    $region7: #{multi_head_attention.7} parent=1 // loop_footer_branch
      %14 = sbr.rel target = $region3
    $region8: #{multi_head_attention.7} parent=1 // loop_exit
      _
    %287 = vsyncpa [#allocation3], 1
    %s288 = scalar_lea.sflag [#allocation3], 1
    %289 = vsyncpa %s288, 1
    %290 = vsyncpa [#allocation6], 1
    %291 = vsyncpa [#allocation4], 1
    %s292 = scalar_lea.sflag [#allocation4], 1
    %293 = vsyncpa %s292, 1

</llo_original>
